<compile_context>
chip_gen: v7x
topology: tpu7x:2x2x1
jax: 0.10.0
libtpu: 0.0.40
codegen_flags: <defaults>
</compile_context>

<pallas_src>
import functools

import jax
import jax.numpy as jnp
from jax.experimental import pallas as pl
from jax.experimental.pallas import tpu as pltpu


def _round_up(v, m):
    return ((v + m - 1) // m) * m


def net_kernel(x_ref, w_ref, b_ref, o_ref, *, num_layers, num_repeats, n_split):
    """One batch tile of the full forward pass (num_repeats x fc_block).

    x_ref : (TB, F)        activation tile (input dtype)
    w_ref : (L, F, F)      bf16 weights, pre-transposed -> y = x @ w[l]
    b_ref : (L, F)         f32 biases
    o_ref : (TB, F)        output tile
    """
    # Hoist parameter loads out of the 10x repeat loop: the same L weight
    # tiles / biases are reused num_repeats times; loading once lets the
    # compiler keep them operand/vreg-resident (JAX does not CSE these).
    w_vals = [w_ref[l] for l in range(num_layers)]                 # (F, F) bf16
    b_full = b_ref[...].astype(jnp.float32)                        # (L, F)
    b_vals = [b_full[l:l + 1, :] for l in range(num_layers)]       # (1, F) f32

    tb = x_ref.shape[0]
    rows = tb // n_split

    # Independent row sub-chains; interleaving their matmuls per layer keeps
    # the MXU push slots busy while the other chain drains / does bias+cast.
    xs = [x_ref[pl.ds(c * rows, rows), :].astype(jnp.bfloat16)
          for c in range(n_split)]

    for _ in range(num_repeats):                                   # fc_block x10
        for l in range(num_layers):                                # Linear layers
            xs = [
                (jnp.dot(xc, w_vals[l], preferred_element_type=jnp.float32)
                 + b_vals[l]).astype(jnp.bfloat16)                 # bf16 between layers
                for xc in xs
            ]
        xs = [jnp.maximum(xc, 0) for xc in xs]                     # ReLU per block

    o_ref[...] = jnp.concatenate(xs, axis=0).astype(o_ref.dtype)


def net_forward(x, weights, biases, *, num_repeats=10, block_b=256, n_split=2):
    """x: (B, F); weights: (L, F_out, F_in) PyTorch-style; biases: (L, F).

    n_split: independent row sub-chains interleaved inside the kernel
             (2 is a good default for v6e/v7x; use 4 on v5e).
    """
    B, F = x.shape
    L = weights.shape[0]

    # Pre-transpose once and cast to bf16 so the hot loop is a native-rate
    # bf16 MXU matmul with f32 accumulation.
    w_t = jnp.transpose(weights, (0, 2, 1)).astype(jnp.bfloat16)
    b_f32 = biases.astype(jnp.float32)

    # dtype-aware sublane minimum: 8 (f32) / 16 (bf16) / 32 (int8) rows.
    sub = 8 * max(1, 4 // x.dtype.itemsize)

    # Batch tile: up to block_b rows per grid step (amortizes MXU fill/drain
    # and the ~0.35us per-step overhead), but keep >= 2 grid steps whenever
    # possible so the "parallel" axis can shard across v7x's 2 TensorCores.
    if B >= 2 * block_b:
        tb = block_b
    else:
        half = _round_up(max((B + 1) // 2, sub), sub)
        tb = min(_round_up(block_b, sub), half)
    tb = max(tb, sub)

    b_pad = _round_up(B, tb)
    # Padded rows run through bias+ReLU and are sliced off at the end; no
    # in-kernel reduction over the batch axis ever touches them.
    x_in = x if b_pad == B else jnp.pad(x, ((0, b_pad - B), (0, 0)))
    grid = (b_pad // tb,)

    # Pick the largest feasible interleave factor <= n_split whose sub-chunk
    # rows stay a sublane multiple.
    ns = max(1, n_split)
    while ns > 1 and (tb % ns != 0 or (tb // ns) % sub != 0):
        ns -= 1

    kernel = functools.partial(
        net_kernel, num_layers=L, num_repeats=num_repeats, n_split=ns)

    # VMEM budget.  Weights have a constant index_map; once the block gets
    # large, double-buffering it is pure waste (and can blow v7x's 64 MiB),
    # so single-buffer it and size vmem_limit_bytes explicitly.
    w_bytes = L * F * F * 2
    b_bytes = L * F * 4
    act_bytes = tb * F * x.dtype.itemsize
    single_buffer_params = 2 * w_bytes > (8 << 20)
    w_buffers = 1 if single_buffer_params else 2

    if single_buffer_params:
        w_spec = pl.BlockSpec((L, F, F), lambda i: (0, 0, 0),
                              pipeline_mode=pl.Buffered(1))
        b_spec = pl.BlockSpec((L, F), lambda i: (0, 0),
                              pipeline_mode=pl.Buffered(1))
    else:
        # At small F (e.g. 128 -> 96 KiB bf16) default double-buffering is
        # harmless; keep the plain, well-trodden path.
        w_spec = pl.BlockSpec((L, F, F), lambda i: (0, 0, 0))
        b_spec = pl.BlockSpec((L, F), lambda i: (0, 0))

    vmem_needed = (w_buffers * w_bytes + 2 * b_bytes
                   + 2 * 2 * act_bytes          # double-buffered in + out tiles
                   + (8 << 20))                 # compiler scratch headroom
    vmem_limit = min(max(vmem_needed, 32 << 20), 64 << 20)  # v7x physical = 64 MiB

    cost = pl.CostEstimate(
        flops=2 * b_pad * F * F * L * num_repeats,
        transcendentals=0,
        bytes_accessed=(w_bytes + b_bytes + 2 * b_pad * F * x.dtype.itemsize),
    )

    out = pl.pallas_call(
        kernel,
        out_shape=jax.ShapeDtypeStruct((b_pad, F), x.dtype),
        grid=grid,
        in_specs=[
            # Activation tile walks the (parallel) batch-tile grid axis.
            pl.BlockSpec((tb, F), lambda i: (i, 0)),
            # Weights / biases pinned to block 0: VMEM-resident for all tiles.
            w_spec,
            b_spec,
        ],
        out_specs=pl.BlockSpec((tb, F), lambda i: (i, 0)),
        compiler_params=pltpu.CompilerParams(
            # Batch tiles are independent -> shardable across v7x's 2 TCs.
            dimension_semantics=("parallel",),
            vmem_limit_bytes=vmem_limit,
        ),
        cost_estimate=cost,
    )(x_in, w_t, b_f32)

    return out[:B]


def reference_forward(x, weights, biases, *, num_repeats=10):
    """Pure-JAX reference using the same bf16-operand / f32-accumulate recipe."""
    w_t = jnp.transpose(weights, (0, 2, 1)).astype(jnp.bfloat16)
    b = biases.astype(jnp.float32)
    out = x.astype(jnp.bfloat16)
    for _ in range(num_repeats):
        for l in range(weights.shape[0]):
            out = (jnp.dot(out, w_t[l], preferred_element_type=jnp.float32)
                   + b[l]).astype(jnp.bfloat16)
        out = jnp.maximum(out, 0)
    return out.astype(x.dtype)


if __name__ == "__main__":
    features = 128          # lane-dim multiple of 128
    num_layers = 3
    batch = 256             # -> 2 batch tiles: exercises grid + parallel axis

    key = jax.random.PRNGKey(0)
    kx, kw, kb = jax.random.split(key, 3)

    # Deterministic synthetic parameters (PyTorch-style fan_in scaling).
    bound = 1.0 / jnp.sqrt(jnp.float32(features))
    weights = jax.random.uniform(
        kw, (num_layers, features, features), jnp.float32, -bound, bound)
    biases = jax.random.uniform(
        kb, (num_layers, features), jnp.float32, -bound, bound)
    x = jax.random.normal(kx, (batch, features), jnp.float32)

    out = jax.block_until_ready(net_forward(x, weights, biases))
    ref = reference_forward(x, weights, biases)

    assert out.shape == (batch, features)
    assert jnp.allclose(out, ref, atol=1e-2, rtol=1e-2), "mismatch vs reference"

    print("KERNEL_OK")
</pallas_src>

<mosaic_0001>
module attributes {stable_mosaic.version = 11 : i64} {
  func.func @net_kernel(%arg0: i32, %arg1: memref<128x128xf32, #tpu.memory_space<vmem>>, %arg2: memref<3x128x128xbf16, #tpu.memory_space<vmem>>, %arg3: memref<3x128xf32, #tpu.memory_space<vmem>>, %arg4: memref<128x128xf32, #tpu.memory_space<vmem>>) attributes {dimension_semantics = [#tpu.dimension_semantics<parallel>], iteration_bounds = array<i64: 2>, scalar_prefetch = 0 : i64, scratch_operands = 0 : i64, tpu.core_type = #tpu.core_type<tc>, window_params = [{transform_indices = @transform_0, window_bounds = array<i64: 128, 128>}, {pipeline_mode = #tpu.pipeline_mode<synchronous>, transform_indices = @transform_1, window_bounds = array<i64: 3, 128, 128>}, {pipeline_mode = #tpu.pipeline_mode<synchronous>, transform_indices = @transform_2, window_bounds = array<i64: 3, 128>}, {transform_indices = @transform_3, window_bounds = array<i64: 128, 128>}]} {
    %c0 = arith.constant 0 : index
    %c0_0 = arith.constant 0 : index
    %c0_1 = arith.constant 0 : index
    %0 = vector.load %arg2[%c0, %c0_0, %c0_1] : memref<3x128x128xbf16, #tpu.memory_space<vmem>>, vector<1x128x128xbf16>
    %1 = vector.shape_cast %0 : vector<1x128x128xbf16> to vector<128x128xbf16>
    %c1 = arith.constant 1 : index
    %c0_2 = arith.constant 0 : index
    %c0_3 = arith.constant 0 : index
    %2 = vector.load %arg2[%c1, %c0_2, %c0_3] : memref<3x128x128xbf16, #tpu.memory_space<vmem>>, vector<1x128x128xbf16>
    %3 = vector.shape_cast %2 : vector<1x128x128xbf16> to vector<128x128xbf16>
    %c2 = arith.constant 2 : index
    %c0_4 = arith.constant 0 : index
    %c0_5 = arith.constant 0 : index
    %4 = vector.load %arg2[%c2, %c0_4, %c0_5] : memref<3x128x128xbf16, #tpu.memory_space<vmem>>, vector<1x128x128xbf16>
    %5 = vector.shape_cast %4 : vector<1x128x128xbf16> to vector<128x128xbf16>
    %c0_6 = arith.constant 0 : index
    %c0_7 = arith.constant 0 : index
    %6 = vector.load %arg3[%c0_6, %c0_7] : memref<3x128xf32, #tpu.memory_space<vmem>>, vector<3x128xf32>
    %7 = vector.extract_strided_slice %6 {offsets = [0, 0], sizes = [1, 128], strides = [1, 1]} : vector<3x128xf32> to vector<1x128xf32>
    %8 = vector.extract_strided_slice %6 {offsets = [1, 0], sizes = [1, 128], strides = [1, 1]} : vector<3x128xf32> to vector<1x128xf32>
    %9 = vector.extract_strided_slice %6 {offsets = [2, 0], sizes = [1, 128], strides = [1, 1]} : vector<3x128xf32> to vector<1x128xf32>
    %c0_8 = arith.constant 0 : index
    %c0_9 = arith.constant 0 : index
    %10 = vector.load %arg1[%c0_8, %c0_9] : memref<128x128xf32, #tpu.memory_space<vmem>>, vector<64x128xf32>
    %11 = arith.truncf %10 : vector<64x128xf32> to vector<64x128xbf16>
    %c64 = arith.constant 64 : index
    %c0_10 = arith.constant 0 : index
    %12 = vector.load %arg1[%c64, %c0_10] : memref<128x128xf32, #tpu.memory_space<vmem>>, vector<64x128xf32>
    %13 = arith.truncf %12 : vector<64x128xf32> to vector<64x128xbf16>
    %cst = arith.constant dense<0.000000e+00> : vector<64x128xf32>
    %14 = tpu.matmul %11, %1, %cst {dimension_numbers = #tpu.dot_dimension_numbers<[1], [0], [0], [1], [0, 0, 1, 1], [], []>} : vector<64x128xbf16>, vector<128x128xbf16>, vector<64x128xf32> -> vector<64x128xf32>
    %15 = vector.broadcast %7 : vector<1x128xf32> to vector<64x128xf32>
    %16 = arith.addf %14, %15 : vector<64x128xf32>
    %17 = arith.truncf %16 : vector<64x128xf32> to vector<64x128xbf16>
    %cst_11 = arith.constant dense<0.000000e+00> : vector<64x128xf32>
    %18 = tpu.matmul %13, %1, %cst_11 {dimension_numbers = #tpu.dot_dimension_numbers<[1], [0], [0], [1], [0, 0, 1, 1], [], []>} : vector<64x128xbf16>, vector<128x128xbf16>, vector<64x128xf32> -> vector<64x128xf32>
    %19 = vector.broadcast %7 : vector<1x128xf32> to vector<64x128xf32>
    %20 = arith.addf %18, %19 : vector<64x128xf32>
    %21 = arith.truncf %20 : vector<64x128xf32> to vector<64x128xbf16>
    %cst_12 = arith.constant dense<0.000000e+00> : vector<64x128xf32>
    %22 = tpu.matmul %17, %3, %cst_12 {dimension_numbers = #tpu.dot_dimension_numbers<[1], [0], [0], [1], [0, 0, 1, 1], [], []>} : vector<64x128xbf16>, vector<128x128xbf16>, vector<64x128xf32> -> vector<64x128xf32>
    %23 = vector.broadcast %8 : vector<1x128xf32> to vector<64x128xf32>
    %24 = arith.addf %22, %23 : vector<64x128xf32>
    %25 = arith.truncf %24 : vector<64x128xf32> to vector<64x128xbf16>
    %cst_13 = arith.constant dense<0.000000e+00> : vector<64x128xf32>
    %26 = tpu.matmul %21, %3, %cst_13 {dimension_numbers = #tpu.dot_dimension_numbers<[1], [0], [0], [1], [0, 0, 1, 1], [], []>} : vector<64x128xbf16>, vector<128x128xbf16>, vector<64x128xf32> -> vector<64x128xf32>
    %27 = vector.broadcast %8 : vector<1x128xf32> to vector<64x128xf32>
    %28 = arith.addf %26, %27 : vector<64x128xf32>
    %29 = arith.truncf %28 : vector<64x128xf32> to vector<64x128xbf16>
    %cst_14 = arith.constant dense<0.000000e+00> : vector<64x128xf32>
    %30 = tpu.matmul %25, %5, %cst_14 {dimension_numbers = #tpu.dot_dimension_numbers<[1], [0], [0], [1], [0, 0, 1, 1], [], []>} : vector<64x128xbf16>, vector<128x128xbf16>, vector<64x128xf32> -> vector<64x128xf32>
    %31 = vector.broadcast %9 : vector<1x128xf32> to vector<64x128xf32>
    %32 = arith.addf %30, %31 : vector<64x128xf32>
    %33 = arith.truncf %32 : vector<64x128xf32> to vector<64x128xbf16>
    %cst_15 = arith.constant dense<0.000000e+00> : vector<64x128xf32>
    %34 = tpu.matmul %29, %5, %cst_15 {dimension_numbers = #tpu.dot_dimension_numbers<[1], [0], [0], [1], [0, 0, 1, 1], [], []>} : vector<64x128xbf16>, vector<128x128xbf16>, vector<64x128xf32> -> vector<64x128xf32>
    %35 = vector.broadcast %9 : vector<1x128xf32> to vector<64x128xf32>
    %36 = arith.addf %34, %35 : vector<64x128xf32>
    %37 = arith.truncf %36 : vector<64x128xf32> to vector<64x128xbf16>
    %cst_16 = arith.constant 0.000000e+00 : bf16
    %38 = vector.broadcast %cst_16 : bf16 to vector<64x128xbf16>
    %39 = arith.maximumf %33, %38 : vector<64x128xbf16>
    %cst_17 = arith.constant 0.000000e+00 : bf16
    %40 = vector.broadcast %cst_17 : bf16 to vector<64x128xbf16>
    %41 = arith.maximumf %37, %40 : vector<64x128xbf16>
    %cst_18 = arith.constant dense<0.000000e+00> : vector<64x128xf32>
    %42 = tpu.matmul %39, %1, %cst_18 {dimension_numbers = #tpu.dot_dimension_numbers<[1], [0], [0], [1], [0, 0, 1, 1], [], []>} : vector<64x128xbf16>, vector<128x128xbf16>, vector<64x128xf32> -> vector<64x128xf32>
    %43 = vector.broadcast %7 : vector<1x128xf32> to vector<64x128xf32>
    %44 = arith.addf %42, %43 : vector<64x128xf32>
    %45 = arith.truncf %44 : vector<64x128xf32> to vector<64x128xbf16>
    %cst_19 = arith.constant dense<0.000000e+00> : vector<64x128xf32>
    %46 = tpu.matmul %41, %1, %cst_19 {dimension_numbers = #tpu.dot_dimension_numbers<[1], [0], [0], [1], [0, 0, 1, 1], [], []>} : vector<64x128xbf16>, vector<128x128xbf16>, vector<64x128xf32> -> vector<64x128xf32>
    %47 = vector.broadcast %7 : vector<1x128xf32> to vector<64x128xf32>
    %48 = arith.addf %46, %47 : vector<64x128xf32>
    %49 = arith.truncf %48 : vector<64x128xf32> to vector<64x128xbf16>
    %cst_20 = arith.constant dense<0.000000e+00> : vector<64x128xf32>
    %50 = tpu.matmul %45, %3, %cst_20 {dimension_numbers = #tpu.dot_dimension_numbers<[1], [0], [0], [1], [0, 0, 1, 1], [], []>} : vector<64x128xbf16>, vector<128x128xbf16>, vector<64x128xf32> -> vector<64x128xf32>
    %51 = vector.broadcast %8 : vector<1x128xf32> to vector<64x128xf32>
    %52 = arith.addf %50, %51 : vector<64x128xf32>
    %53 = arith.truncf %52 : vector<64x128xf32> to vector<64x128xbf16>
    %cst_21 = arith.constant dense<0.000000e+00> : vector<64x128xf32>
    %54 = tpu.matmul %49, %3, %cst_21 {dimension_numbers = #tpu.dot_dimension_numbers<[1], [0], [0], [1], [0, 0, 1, 1], [], []>} : vector<64x128xbf16>, vector<128x128xbf16>, vector<64x128xf32> -> vector<64x128xf32>
    %55 = vector.broadcast %8 : vector<1x128xf32> to vector<64x128xf32>
    %56 = arith.addf %54, %55 : vector<64x128xf32>
    %57 = arith.truncf %56 : vector<64x128xf32> to vector<64x128xbf16>
    %cst_22 = arith.constant dense<0.000000e+00> : vector<64x128xf32>
    %58 = tpu.matmul %53, %5, %cst_22 {dimension_numbers = #tpu.dot_dimension_numbers<[1], [0], [0], [1], [0, 0, 1, 1], [], []>} : vector<64x128xbf16>, vector<128x128xbf16>, vector<64x128xf32> -> vector<64x128xf32>
    %59 = vector.broadcast %9 : vector<1x128xf32> to vector<64x128xf32>
    %60 = arith.addf %58, %59 : vector<64x128xf32>
    %61 = arith.truncf %60 : vector<64x128xf32> to vector<64x128xbf16>
    %cst_23 = arith.constant dense<0.000000e+00> : vector<64x128xf32>
    %62 = tpu.matmul %57, %5, %cst_23 {dimension_numbers = #tpu.dot_dimension_numbers<[1], [0], [0], [1], [0, 0, 1, 1], [], []>} : vector<64x128xbf16>, vector<128x128xbf16>, vector<64x128xf32> -> vector<64x128xf32>
    %63 = vector.broadcast %9 : vector<1x128xf32> to vector<64x128xf32>
    %64 = arith.addf %62, %63 : vector<64x128xf32>
    %65 = arith.truncf %64 : vector<64x128xf32> to vector<64x128xbf16>
    %cst_24 = arith.constant 0.000000e+00 : bf16
    %66 = vector.broadcast %cst_24 : bf16 to vector<64x128xbf16>
    %67 = arith.maximumf %61, %66 : vector<64x128xbf16>
    %cst_25 = arith.constant 0.000000e+00 : bf16
    %68 = vector.broadcast %cst_25 : bf16 to vector<64x128xbf16>
    %69 = arith.maximumf %65, %68 : vector<64x128xbf16>
    %cst_26 = arith.constant dense<0.000000e+00> : vector<64x128xf32>
    %70 = tpu.matmul %67, %1, %cst_26 {dimension_numbers = #tpu.dot_dimension_numbers<[1], [0], [0], [1], [0, 0, 1, 1], [], []>} : vector<64x128xbf16>, vector<128x128xbf16>, vector<64x128xf32> -> vector<64x128xf32>
    %71 = vector.broadcast %7 : vector<1x128xf32> to vector<64x128xf32>
    %72 = arith.addf %70, %71 : vector<64x128xf32>
    %73 = arith.truncf %72 : vector<64x128xf32> to vector<64x128xbf16>
    %cst_27 = arith.constant dense<0.000000e+00> : vector<64x128xf32>
    %74 = tpu.matmul %69, %1, %cst_27 {dimension_numbers = #tpu.dot_dimension_numbers<[1], [0], [0], [1], [0, 0, 1, 1], [], []>} : vector<64x128xbf16>, vector<128x128xbf16>, vector<64x128xf32> -> vector<64x128xf32>
    %75 = vector.broadcast %7 : vector<1x128xf32> to vector<64x128xf32>
    %76 = arith.addf %74, %75 : vector<64x128xf32>
    %77 = arith.truncf %76 : vector<64x128xf32> to vector<64x128xbf16>
    %cst_28 = arith.constant dense<0.000000e+00> : vector<64x128xf32>
    %78 = tpu.matmul %73, %3, %cst_28 {dimension_numbers = #tpu.dot_dimension_numbers<[1], [0], [0], [1], [0, 0, 1, 1], [], []>} : vector<64x128xbf16>, vector<128x128xbf16>, vector<64x128xf32> -> vector<64x128xf32>
    %79 = vector.broadcast %8 : vector<1x128xf32> to vector<64x128xf32>
    %80 = arith.addf %78, %79 : vector<64x128xf32>
    %81 = arith.truncf %80 : vector<64x128xf32> to vector<64x128xbf16>
    %cst_29 = arith.constant dense<0.000000e+00> : vector<64x128xf32>
    %82 = tpu.matmul %77, %3, %cst_29 {dimension_numbers = #tpu.dot_dimension_numbers<[1], [0], [0], [1], [0, 0, 1, 1], [], []>} : vector<64x128xbf16>, vector<128x128xbf16>, vector<64x128xf32> -> vector<64x128xf32>
    %83 = vector.broadcast %8 : vector<1x128xf32> to vector<64x128xf32>
    %84 = arith.addf %82, %83 : vector<64x128xf32>
    %85 = arith.truncf %84 : vector<64x128xf32> to vector<64x128xbf16>
    %cst_30 = arith.constant dense<0.000000e+00> : vector<64x128xf32>
    %86 = tpu.matmul %81, %5, %cst_30 {dimension_numbers = #tpu.dot_dimension_numbers<[1], [0], [0], [1], [0, 0, 1, 1], [], []>} : vector<64x128xbf16>, vector<128x128xbf16>, vector<64x128xf32> -> vector<64x128xf32>
    %87 = vector.broadcast %9 : vector<1x128xf32> to vector<64x128xf32>
    %88 = arith.addf %86, %87 : vector<64x128xf32>
    %89 = arith.truncf %88 : vector<64x128xf32> to vector<64x128xbf16>
    %cst_31 = arith.constant dense<0.000000e+00> : vector<64x128xf32>
    %90 = tpu.matmul %85, %5, %cst_31 {dimension_numbers = #tpu.dot_dimension_numbers<[1], [0], [0], [1], [0, 0, 1, 1], [], []>} : vector<64x128xbf16>, vector<128x128xbf16>, vector<64x128xf32> -> vector<64x128xf32>
    %91 = vector.broadcast %9 : vector<1x128xf32> to vector<64x128xf32>
    %92 = arith.addf %90, %91 : vector<64x128xf32>
    %93 = arith.truncf %92 : vector<64x128xf32> to vector<64x128xbf16>
    %cst_32 = arith.constant 0.000000e+00 : bf16
    %94 = vector.broadcast %cst_32 : bf16 to vector<64x128xbf16>
    %95 = arith.maximumf %89, %94 : vector<64x128xbf16>
    %cst_33 = arith.constant 0.000000e+00 : bf16
    %96 = vector.broadcast %cst_33 : bf16 to vector<64x128xbf16>
    %97 = arith.maximumf %93, %96 : vector<64x128xbf16>
    %cst_34 = arith.constant dense<0.000000e+00> : vector<64x128xf32>
    %98 = tpu.matmul %95, %1, %cst_34 {dimension_numbers = #tpu.dot_dimension_numbers<[1], [0], [0], [1], [0, 0, 1, 1], [], []>} : vector<64x128xbf16>, vector<128x128xbf16>, vector<64x128xf32> -> vector<64x128xf32>
    %99 = vector.broadcast %7 : vector<1x128xf32> to vector<64x128xf32>
    %100 = arith.addf %98, %99 : vector<64x128xf32>
    %101 = arith.truncf %100 : vector<64x128xf32> to vector<64x128xbf16>
    %cst_35 = arith.constant dense<0.000000e+00> : vector<64x128xf32>
    %102 = tpu.matmul %97, %1, %cst_35 {dimension_numbers = #tpu.dot_dimension_numbers<[1], [0], [0], [1], [0, 0, 1, 1], [], []>} : vector<64x128xbf16>, vector<128x128xbf16>, vector<64x128xf32> -> vector<64x128xf32>
    %103 = vector.broadcast %7 : vector<1x128xf32> to vector<64x128xf32>
    %104 = arith.addf %102, %103 : vector<64x128xf32>
    %105 = arith.truncf %104 : vector<64x128xf32> to vector<64x128xbf16>
    %cst_36 = arith.constant dense<0.000000e+00> : vector<64x128xf32>
    %106 = tpu.matmul %101, %3, %cst_36 {dimension_numbers = #tpu.dot_dimension_numbers<[1], [0], [0], [1], [0, 0, 1, 1], [], []>} : vector<64x128xbf16>, vector<128x128xbf16>, vector<64x128xf32> -> vector<64x128xf32>
    %107 = vector.broadcast %8 : vector<1x128xf32> to vector<64x128xf32>
    %108 = arith.addf %106, %107 : vector<64x128xf32>
    %109 = arith.truncf %108 : vector<64x128xf32> to vector<64x128xbf16>
    %cst_37 = arith.constant dense<0.000000e+00> : vector<64x128xf32>
    %110 = tpu.matmul %105, %3, %cst_37 {dimension_numbers = #tpu.dot_dimension_numbers<[1], [0], [0], [1], [0, 0, 1, 1], [], []>} : vector<64x128xbf16>, vector<128x128xbf16>, vector<64x128xf32> -> vector<64x128xf32>
    %111 = vector.broadcast %8 : vector<1x128xf32> to vector<64x128xf32>
    %112 = arith.addf %110, %111 : vector<64x128xf32>
    %113 = arith.truncf %112 : vector<64x128xf32> to vector<64x128xbf16>
    %cst_38 = arith.constant dense<0.000000e+00> : vector<64x128xf32>
    %114 = tpu.matmul %109, %5, %cst_38 {dimension_numbers = #tpu.dot_dimension_numbers<[1], [0], [0], [1], [0, 0, 1, 1], [], []>} : vector<64x128xbf16>, vector<128x128xbf16>, vector<64x128xf32> -> vector<64x128xf32>
    %115 = vector.broadcast %9 : vector<1x128xf32> to vector<64x128xf32>
    %116 = arith.addf %114, %115 : vector<64x128xf32>
    %117 = arith.truncf %116 : vector<64x128xf32> to vector<64x128xbf16>
    %cst_39 = arith.constant dense<0.000000e+00> : vector<64x128xf32>
    %118 = tpu.matmul %113, %5, %cst_39 {dimension_numbers = #tpu.dot_dimension_numbers<[1], [0], [0], [1], [0, 0, 1, 1], [], []>} : vector<64x128xbf16>, vector<128x128xbf16>, vector<64x128xf32> -> vector<64x128xf32>
    %119 = vector.broadcast %9 : vector<1x128xf32> to vector<64x128xf32>
    %120 = arith.addf %118, %119 : vector<64x128xf32>
    %121 = arith.truncf %120 : vector<64x128xf32> to vector<64x128xbf16>
    %cst_40 = arith.constant 0.000000e+00 : bf16
    %122 = vector.broadcast %cst_40 : bf16 to vector<64x128xbf16>
    %123 = arith.maximumf %117, %122 : vector<64x128xbf16>
    %cst_41 = arith.constant 0.000000e+00 : bf16
    %124 = vector.broadcast %cst_41 : bf16 to vector<64x128xbf16>
    %125 = arith.maximumf %121, %124 : vector<64x128xbf16>
    %cst_42 = arith.constant dense<0.000000e+00> : vector<64x128xf32>
    %126 = tpu.matmul %123, %1, %cst_42 {dimension_numbers = #tpu.dot_dimension_numbers<[1], [0], [0], [1], [0, 0, 1, 1], [], []>} : vector<64x128xbf16>, vector<128x128xbf16>, vector<64x128xf32> -> vector<64x128xf32>
    %127 = vector.broadcast %7 : vector<1x128xf32> to vector<64x128xf32>
    %128 = arith.addf %126, %127 : vector<64x128xf32>
    %129 = arith.truncf %128 : vector<64x128xf32> to vector<64x128xbf16>
    %cst_43 = arith.constant dense<0.000000e+00> : vector<64x128xf32>
    %130 = tpu.matmul %125, %1, %cst_43 {dimension_numbers = #tpu.dot_dimension_numbers<[1], [0], [0], [1], [0, 0, 1, 1], [], []>} : vector<64x128xbf16>, vector<128x128xbf16>, vector<64x128xf32> -> vector<64x128xf32>
    %131 = vector.broadcast %7 : vector<1x128xf32> to vector<64x128xf32>
    %132 = arith.addf %130, %131 : vector<64x128xf32>
    %133 = arith.truncf %132 : vector<64x128xf32> to vector<64x128xbf16>
    %cst_44 = arith.constant dense<0.000000e+00> : vector<64x128xf32>
    %134 = tpu.matmul %129, %3, %cst_44 {dimension_numbers = #tpu.dot_dimension_numbers<[1], [0], [0], [1], [0, 0, 1, 1], [], []>} : vector<64x128xbf16>, vector<128x128xbf16>, vector<64x128xf32> -> vector<64x128xf32>
    %135 = vector.broadcast %8 : vector<1x128xf32> to vector<64x128xf32>
    %136 = arith.addf %134, %135 : vector<64x128xf32>
    %137 = arith.truncf %136 : vector<64x128xf32> to vector<64x128xbf16>
    %cst_45 = arith.constant dense<0.000000e+00> : vector<64x128xf32>
    %138 = tpu.matmul %133, %3, %cst_45 {dimension_numbers = #tpu.dot_dimension_numbers<[1], [0], [0], [1], [0, 0, 1, 1], [], []>} : vector<64x128xbf16>, vector<128x128xbf16>, vector<64x128xf32> -> vector<64x128xf32>
    %139 = vector.broadcast %8 : vector<1x128xf32> to vector<64x128xf32>
    %140 = arith.addf %138, %139 : vector<64x128xf32>
    %141 = arith.truncf %140 : vector<64x128xf32> to vector<64x128xbf16>
    %cst_46 = arith.constant dense<0.000000e+00> : vector<64x128xf32>
    %142 = tpu.matmul %137, %5, %cst_46 {dimension_numbers = #tpu.dot_dimension_numbers<[1], [0], [0], [1], [0, 0, 1, 1], [], []>} : vector<64x128xbf16>, vector<128x128xbf16>, vector<64x128xf32> -> vector<64x128xf32>
    %143 = vector.broadcast %9 : vector<1x128xf32> to vector<64x128xf32>
    %144 = arith.addf %142, %143 : vector<64x128xf32>
    %145 = arith.truncf %144 : vector<64x128xf32> to vector<64x128xbf16>
    %cst_47 = arith.constant dense<0.000000e+00> : vector<64x128xf32>
    %146 = tpu.matmul %141, %5, %cst_47 {dimension_numbers = #tpu.dot_dimension_numbers<[1], [0], [0], [1], [0, 0, 1, 1], [], []>} : vector<64x128xbf16>, vector<128x128xbf16>, vector<64x128xf32> -> vector<64x128xf32>
    %147 = vector.broadcast %9 : vector<1x128xf32> to vector<64x128xf32>
    %148 = arith.addf %146, %147 : vector<64x128xf32>
    %149 = arith.truncf %148 : vector<64x128xf32> to vector<64x128xbf16>
    %cst_48 = arith.constant 0.000000e+00 : bf16
    %150 = vector.broadcast %cst_48 : bf16 to vector<64x128xbf16>
    %151 = arith.maximumf %145, %150 : vector<64x128xbf16>
    %cst_49 = arith.constant 0.000000e+00 : bf16
    %152 = vector.broadcast %cst_49 : bf16 to vector<64x128xbf16>
    %153 = arith.maximumf %149, %152 : vector<64x128xbf16>
    %cst_50 = arith.constant dense<0.000000e+00> : vector<64x128xf32>
    %154 = tpu.matmul %151, %1, %cst_50 {dimension_numbers = #tpu.dot_dimension_numbers<[1], [0], [0], [1], [0, 0, 1, 1], [], []>} : vector<64x128xbf16>, vector<128x128xbf16>, vector<64x128xf32> -> vector<64x128xf32>
    %155 = vector.broadcast %7 : vector<1x128xf32> to vector<64x128xf32>
    %156 = arith.addf %154, %155 : vector<64x128xf32>
    %157 = arith.truncf %156 : vector<64x128xf32> to vector<64x128xbf16>
    %cst_51 = arith.constant dense<0.000000e+00> : vector<64x128xf32>
    %158 = tpu.matmul %153, %1, %cst_51 {dimension_numbers = #tpu.dot_dimension_numbers<[1], [0], [0], [1], [0, 0, 1, 1], [], []>} : vector<64x128xbf16>, vector<128x128xbf16>, vector<64x128xf32> -> vector<64x128xf32>
    %159 = vector.broadcast %7 : vector<1x128xf32> to vector<64x128xf32>
    %160 = arith.addf %158, %159 : vector<64x128xf32>
    %161 = arith.truncf %160 : vector<64x128xf32> to vector<64x128xbf16>
    %cst_52 = arith.constant dense<0.000000e+00> : vector<64x128xf32>
    %162 = tpu.matmul %157, %3, %cst_52 {dimension_numbers = #tpu.dot_dimension_numbers<[1], [0], [0], [1], [0, 0, 1, 1], [], []>} : vector<64x128xbf16>, vector<128x128xbf16>, vector<64x128xf32> -> vector<64x128xf32>
    %163 = vector.broadcast %8 : vector<1x128xf32> to vector<64x128xf32>
    %164 = arith.addf %162, %163 : vector<64x128xf32>
    %165 = arith.truncf %164 : vector<64x128xf32> to vector<64x128xbf16>
    %cst_53 = arith.constant dense<0.000000e+00> : vector<64x128xf32>
    %166 = tpu.matmul %161, %3, %cst_53 {dimension_numbers = #tpu.dot_dimension_numbers<[1], [0], [0], [1], [0, 0, 1, 1], [], []>} : vector<64x128xbf16>, vector<128x128xbf16>, vector<64x128xf32> -> vector<64x128xf32>
    %167 = vector.broadcast %8 : vector<1x128xf32> to vector<64x128xf32>
    %168 = arith.addf %166, %167 : vector<64x128xf32>
    %169 = arith.truncf %168 : vector<64x128xf32> to vector<64x128xbf16>
    %cst_54 = arith.constant dense<0.000000e+00> : vector<64x128xf32>
    %170 = tpu.matmul %165, %5, %cst_54 {dimension_numbers = #tpu.dot_dimension_numbers<[1], [0], [0], [1], [0, 0, 1, 1], [], []>} : vector<64x128xbf16>, vector<128x128xbf16>, vector<64x128xf32> -> vector<64x128xf32>
    %171 = vector.broadcast %9 : vector<1x128xf32> to vector<64x128xf32>
    %172 = arith.addf %170, %171 : vector<64x128xf32>
    %173 = arith.truncf %172 : vector<64x128xf32> to vector<64x128xbf16>
    %cst_55 = arith.constant dense<0.000000e+00> : vector<64x128xf32>
    %174 = tpu.matmul %169, %5, %cst_55 {dimension_numbers = #tpu.dot_dimension_numbers<[1], [0], [0], [1], [0, 0, 1, 1], [], []>} : vector<64x128xbf16>, vector<128x128xbf16>, vector<64x128xf32> -> vector<64x128xf32>
    %175 = vector.broadcast %9 : vector<1x128xf32> to vector<64x128xf32>
    %176 = arith.addf %174, %175 : vector<64x128xf32>
    %177 = arith.truncf %176 : vector<64x128xf32> to vector<64x128xbf16>
    %cst_56 = arith.constant 0.000000e+00 : bf16
    %178 = vector.broadcast %cst_56 : bf16 to vector<64x128xbf16>
    %179 = arith.maximumf %173, %178 : vector<64x128xbf16>
    %cst_57 = arith.constant 0.000000e+00 : bf16
    %180 = vector.broadcast %cst_57 : bf16 to vector<64x128xbf16>
    %181 = arith.maximumf %177, %180 : vector<64x128xbf16>
    %cst_58 = arith.constant dense<0.000000e+00> : vector<64x128xf32>
    %182 = tpu.matmul %179, %1, %cst_58 {dimension_numbers = #tpu.dot_dimension_numbers<[1], [0], [0], [1], [0, 0, 1, 1], [], []>} : vector<64x128xbf16>, vector<128x128xbf16>, vector<64x128xf32> -> vector<64x128xf32>
    %183 = vector.broadcast %7 : vector<1x128xf32> to vector<64x128xf32>
    %184 = arith.addf %182, %183 : vector<64x128xf32>
    %185 = arith.truncf %184 : vector<64x128xf32> to vector<64x128xbf16>
    %cst_59 = arith.constant dense<0.000000e+00> : vector<64x128xf32>
    %186 = tpu.matmul %181, %1, %cst_59 {dimension_numbers = #tpu.dot_dimension_numbers<[1], [0], [0], [1], [0, 0, 1, 1], [], []>} : vector<64x128xbf16>, vector<128x128xbf16>, vector<64x128xf32> -> vector<64x128xf32>
    %187 = vector.broadcast %7 : vector<1x128xf32> to vector<64x128xf32>
    %188 = arith.addf %186, %187 : vector<64x128xf32>
    %189 = arith.truncf %188 : vector<64x128xf32> to vector<64x128xbf16>
    %cst_60 = arith.constant dense<0.000000e+00> : vector<64x128xf32>
    %190 = tpu.matmul %185, %3, %cst_60 {dimension_numbers = #tpu.dot_dimension_numbers<[1], [0], [0], [1], [0, 0, 1, 1], [], []>} : vector<64x128xbf16>, vector<128x128xbf16>, vector<64x128xf32> -> vector<64x128xf32>
    %191 = vector.broadcast %8 : vector<1x128xf32> to vector<64x128xf32>
    %192 = arith.addf %190, %191 : vector<64x128xf32>
    %193 = arith.truncf %192 : vector<64x128xf32> to vector<64x128xbf16>
    %cst_61 = arith.constant dense<0.000000e+00> : vector<64x128xf32>
    %194 = tpu.matmul %189, %3, %cst_61 {dimension_numbers = #tpu.dot_dimension_numbers<[1], [0], [0], [1], [0, 0, 1, 1], [], []>} : vector<64x128xbf16>, vector<128x128xbf16>, vector<64x128xf32> -> vector<64x128xf32>
    %195 = vector.broadcast %8 : vector<1x128xf32> to vector<64x128xf32>
    %196 = arith.addf %194, %195 : vector<64x128xf32>
    %197 = arith.truncf %196 : vector<64x128xf32> to vector<64x128xbf16>
    %cst_62 = arith.constant dense<0.000000e+00> : vector<64x128xf32>
    %198 = tpu.matmul %193, %5, %cst_62 {dimension_numbers = #tpu.dot_dimension_numbers<[1], [0], [0], [1], [0, 0, 1, 1], [], []>} : vector<64x128xbf16>, vector<128x128xbf16>, vector<64x128xf32> -> vector<64x128xf32>
    %199 = vector.broadcast %9 : vector<1x128xf32> to vector<64x128xf32>
    %200 = arith.addf %198, %199 : vector<64x128xf32>
    %201 = arith.truncf %200 : vector<64x128xf32> to vector<64x128xbf16>
    %cst_63 = arith.constant dense<0.000000e+00> : vector<64x128xf32>
    %202 = tpu.matmul %197, %5, %cst_63 {dimension_numbers = #tpu.dot_dimension_numbers<[1], [0], [0], [1], [0, 0, 1, 1], [], []>} : vector<64x128xbf16>, vector<128x128xbf16>, vector<64x128xf32> -> vector<64x128xf32>
    %203 = vector.broadcast %9 : vector<1x128xf32> to vector<64x128xf32>
    %204 = arith.addf %202, %203 : vector<64x128xf32>
    %205 = arith.truncf %204 : vector<64x128xf32> to vector<64x128xbf16>
    %cst_64 = arith.constant 0.000000e+00 : bf16
    %206 = vector.broadcast %cst_64 : bf16 to vector<64x128xbf16>
    %207 = arith.maximumf %201, %206 : vector<64x128xbf16>
    %cst_65 = arith.constant 0.000000e+00 : bf16
    %208 = vector.broadcast %cst_65 : bf16 to vector<64x128xbf16>
    %209 = arith.maximumf %205, %208 : vector<64x128xbf16>
    %cst_66 = arith.constant dense<0.000000e+00> : vector<64x128xf32>
    %210 = tpu.matmul %207, %1, %cst_66 {dimension_numbers = #tpu.dot_dimension_numbers<[1], [0], [0], [1], [0, 0, 1, 1], [], []>} : vector<64x128xbf16>, vector<128x128xbf16>, vector<64x128xf32> -> vector<64x128xf32>
    %211 = vector.broadcast %7 : vector<1x128xf32> to vector<64x128xf32>
    %212 = arith.addf %210, %211 : vector<64x128xf32>
    %213 = arith.truncf %212 : vector<64x128xf32> to vector<64x128xbf16>
    %cst_67 = arith.constant dense<0.000000e+00> : vector<64x128xf32>
    %214 = tpu.matmul %209, %1, %cst_67 {dimension_numbers = #tpu.dot_dimension_numbers<[1], [0], [0], [1], [0, 0, 1, 1], [], []>} : vector<64x128xbf16>, vector<128x128xbf16>, vector<64x128xf32> -> vector<64x128xf32>
    %215 = vector.broadcast %7 : vector<1x128xf32> to vector<64x128xf32>
    %216 = arith.addf %214, %215 : vector<64x128xf32>
    %217 = arith.truncf %216 : vector<64x128xf32> to vector<64x128xbf16>
    %cst_68 = arith.constant dense<0.000000e+00> : vector<64x128xf32>
    %218 = tpu.matmul %213, %3, %cst_68 {dimension_numbers = #tpu.dot_dimension_numbers<[1], [0], [0], [1], [0, 0, 1, 1], [], []>} : vector<64x128xbf16>, vector<128x128xbf16>, vector<64x128xf32> -> vector<64x128xf32>
    %219 = vector.broadcast %8 : vector<1x128xf32> to vector<64x128xf32>
    %220 = arith.addf %218, %219 : vector<64x128xf32>
    %221 = arith.truncf %220 : vector<64x128xf32> to vector<64x128xbf16>
    %cst_69 = arith.constant dense<0.000000e+00> : vector<64x128xf32>
    %222 = tpu.matmul %217, %3, %cst_69 {dimension_numbers = #tpu.dot_dimension_numbers<[1], [0], [0], [1], [0, 0, 1, 1], [], []>} : vector<64x128xbf16>, vector<128x128xbf16>, vector<64x128xf32> -> vector<64x128xf32>
    %223 = vector.broadcast %8 : vector<1x128xf32> to vector<64x128xf32>
    %224 = arith.addf %222, %223 : vector<64x128xf32>
    %225 = arith.truncf %224 : vector<64x128xf32> to vector<64x128xbf16>
    %cst_70 = arith.constant dense<0.000000e+00> : vector<64x128xf32>
    %226 = tpu.matmul %221, %5, %cst_70 {dimension_numbers = #tpu.dot_dimension_numbers<[1], [0], [0], [1], [0, 0, 1, 1], [], []>} : vector<64x128xbf16>, vector<128x128xbf16>, vector<64x128xf32> -> vector<64x128xf32>
    %227 = vector.broadcast %9 : vector<1x128xf32> to vector<64x128xf32>
    %228 = arith.addf %226, %227 : vector<64x128xf32>
    %229 = arith.truncf %228 : vector<64x128xf32> to vector<64x128xbf16>
    %cst_71 = arith.constant dense<0.000000e+00> : vector<64x128xf32>
    %230 = tpu.matmul %225, %5, %cst_71 {dimension_numbers = #tpu.dot_dimension_numbers<[1], [0], [0], [1], [0, 0, 1, 1], [], []>} : vector<64x128xbf16>, vector<128x128xbf16>, vector<64x128xf32> -> vector<64x128xf32>
    %231 = vector.broadcast %9 : vector<1x128xf32> to vector<64x128xf32>
    %232 = arith.addf %230, %231 : vector<64x128xf32>
    %233 = arith.truncf %232 : vector<64x128xf32> to vector<64x128xbf16>
    %cst_72 = arith.constant 0.000000e+00 : bf16
    %234 = vector.broadcast %cst_72 : bf16 to vector<64x128xbf16>
    %235 = arith.maximumf %229, %234 : vector<64x128xbf16>
    %cst_73 = arith.constant 0.000000e+00 : bf16
    %236 = vector.broadcast %cst_73 : bf16 to vector<64x128xbf16>
    %237 = arith.maximumf %233, %236 : vector<64x128xbf16>
    %cst_74 = arith.constant dense<0.000000e+00> : vector<64x128xf32>
    %238 = tpu.matmul %235, %1, %cst_74 {dimension_numbers = #tpu.dot_dimension_numbers<[1], [0], [0], [1], [0, 0, 1, 1], [], []>} : vector<64x128xbf16>, vector<128x128xbf16>, vector<64x128xf32> -> vector<64x128xf32>
    %239 = vector.broadcast %7 : vector<1x128xf32> to vector<64x128xf32>
    %240 = arith.addf %238, %239 : vector<64x128xf32>
    %241 = arith.truncf %240 : vector<64x128xf32> to vector<64x128xbf16>
    %cst_75 = arith.constant dense<0.000000e+00> : vector<64x128xf32>
    %242 = tpu.matmul %237, %1, %cst_75 {dimension_numbers = #tpu.dot_dimension_numbers<[1], [0], [0], [1], [0, 0, 1, 1], [], []>} : vector<64x128xbf16>, vector<128x128xbf16>, vector<64x128xf32> -> vector<64x128xf32>
    %243 = vector.broadcast %7 : vector<1x128xf32> to vector<64x128xf32>
    %244 = arith.addf %242, %243 : vector<64x128xf32>
    %245 = arith.truncf %244 : vector<64x128xf32> to vector<64x128xbf16>
    %cst_76 = arith.constant dense<0.000000e+00> : vector<64x128xf32>
    %246 = tpu.matmul %241, %3, %cst_76 {dimension_numbers = #tpu.dot_dimension_numbers<[1], [0], [0], [1], [0, 0, 1, 1], [], []>} : vector<64x128xbf16>, vector<128x128xbf16>, vector<64x128xf32> -> vector<64x128xf32>
    %247 = vector.broadcast %8 : vector<1x128xf32> to vector<64x128xf32>
    %248 = arith.addf %246, %247 : vector<64x128xf32>
    %249 = arith.truncf %248 : vector<64x128xf32> to vector<64x128xbf16>
    %cst_77 = arith.constant dense<0.000000e+00> : vector<64x128xf32>
    %250 = tpu.matmul %245, %3, %cst_77 {dimension_numbers = #tpu.dot_dimension_numbers<[1], [0], [0], [1], [0, 0, 1, 1], [], []>} : vector<64x128xbf16>, vector<128x128xbf16>, vector<64x128xf32> -> vector<64x128xf32>
    %251 = vector.broadcast %8 : vector<1x128xf32> to vector<64x128xf32>
    %252 = arith.addf %250, %251 : vector<64x128xf32>
    %253 = arith.truncf %252 : vector<64x128xf32> to vector<64x128xbf16>
    %cst_78 = arith.constant dense<0.000000e+00> : vector<64x128xf32>
    %254 = tpu.matmul %249, %5, %cst_78 {dimension_numbers = #tpu.dot_dimension_numbers<[1], [0], [0], [1], [0, 0, 1, 1], [], []>} : vector<64x128xbf16>, vector<128x128xbf16>, vector<64x128xf32> -> vector<64x128xf32>
    %255 = vector.broadcast %9 : vector<1x128xf32> to vector<64x128xf32>
    %256 = arith.addf %254, %255 : vector<64x128xf32>
    %257 = arith.truncf %256 : vector<64x128xf32> to vector<64x128xbf16>
    %cst_79 = arith.constant dense<0.000000e+00> : vector<64x128xf32>
    %258 = tpu.matmul %253, %5, %cst_79 {dimension_numbers = #tpu.dot_dimension_numbers<[1], [0], [0], [1], [0, 0, 1, 1], [], []>} : vector<64x128xbf16>, vector<128x128xbf16>, vector<64x128xf32> -> vector<64x128xf32>
    %259 = vector.broadcast %9 : vector<1x128xf32> to vector<64x128xf32>
    %260 = arith.addf %258, %259 : vector<64x128xf32>
    %261 = arith.truncf %260 : vector<64x128xf32> to vector<64x128xbf16>
    %cst_80 = arith.constant 0.000000e+00 : bf16
    %262 = vector.broadcast %cst_80 : bf16 to vector<64x128xbf16>
    %263 = arith.maximumf %257, %262 : vector<64x128xbf16>
    %cst_81 = arith.constant 0.000000e+00 : bf16
    %264 = vector.broadcast %cst_81 : bf16 to vector<64x128xbf16>
    %265 = arith.maximumf %261, %264 : vector<64x128xbf16>
    %cst_82 = arith.constant dense<0.000000e+00> : vector<64x128xf32>
    %266 = tpu.matmul %263, %1, %cst_82 {dimension_numbers = #tpu.dot_dimension_numbers<[1], [0], [0], [1], [0, 0, 1, 1], [], []>} : vector<64x128xbf16>, vector<128x128xbf16>, vector<64x128xf32> -> vector<64x128xf32>
    %267 = vector.broadcast %7 : vector<1x128xf32> to vector<64x128xf32>
    %268 = arith.addf %266, %267 : vector<64x128xf32>
    %269 = arith.truncf %268 : vector<64x128xf32> to vector<64x128xbf16>
    %cst_83 = arith.constant dense<0.000000e+00> : vector<64x128xf32>
    %270 = tpu.matmul %265, %1, %cst_83 {dimension_numbers = #tpu.dot_dimension_numbers<[1], [0], [0], [1], [0, 0, 1, 1], [], []>} : vector<64x128xbf16>, vector<128x128xbf16>, vector<64x128xf32> -> vector<64x128xf32>
    %271 = vector.broadcast %7 : vector<1x128xf32> to vector<64x128xf32>
    %272 = arith.addf %270, %271 : vector<64x128xf32>
    %273 = arith.truncf %272 : vector<64x128xf32> to vector<64x128xbf16>
    %cst_84 = arith.constant dense<0.000000e+00> : vector<64x128xf32>
    %274 = tpu.matmul %269, %3, %cst_84 {dimension_numbers = #tpu.dot_dimension_numbers<[1], [0], [0], [1], [0, 0, 1, 1], [], []>} : vector<64x128xbf16>, vector<128x128xbf16>, vector<64x128xf32> -> vector<64x128xf32>
    %275 = vector.broadcast %8 : vector<1x128xf32> to vector<64x128xf32>
    %276 = arith.addf %274, %275 : vector<64x128xf32>
    %277 = arith.truncf %276 : vector<64x128xf32> to vector<64x128xbf16>
    %cst_85 = arith.constant dense<0.000000e+00> : vector<64x128xf32>
    %278 = tpu.matmul %273, %3, %cst_85 {dimension_numbers = #tpu.dot_dimension_numbers<[1], [0], [0], [1], [0, 0, 1, 1], [], []>} : vector<64x128xbf16>, vector<128x128xbf16>, vector<64x128xf32> -> vector<64x128xf32>
    %279 = vector.broadcast %8 : vector<1x128xf32> to vector<64x128xf32>
    %280 = arith.addf %278, %279 : vector<64x128xf32>
    %281 = arith.truncf %280 : vector<64x128xf32> to vector<64x128xbf16>
    %cst_86 = arith.constant dense<0.000000e+00> : vector<64x128xf32>
    %282 = tpu.matmul %277, %5, %cst_86 {dimension_numbers = #tpu.dot_dimension_numbers<[1], [0], [0], [1], [0, 0, 1, 1], [], []>} : vector<64x128xbf16>, vector<128x128xbf16>, vector<64x128xf32> -> vector<64x128xf32>
    %283 = vector.broadcast %9 : vector<1x128xf32> to vector<64x128xf32>
    %284 = arith.addf %282, %283 : vector<64x128xf32>
    %285 = arith.truncf %284 : vector<64x128xf32> to vector<64x128xbf16>
    %cst_87 = arith.constant dense<0.000000e+00> : vector<64x128xf32>
    %286 = tpu.matmul %281, %5, %cst_87 {dimension_numbers = #tpu.dot_dimension_numbers<[1], [0], [0], [1], [0, 0, 1, 1], [], []>} : vector<64x128xbf16>, vector<128x128xbf16>, vector<64x128xf32> -> vector<64x128xf32>
    %287 = vector.broadcast %9 : vector<1x128xf32> to vector<64x128xf32>
    %288 = arith.addf %286, %287 : vector<64x128xf32>
    %289 = arith.truncf %288 : vector<64x128xf32> to vector<64x128xbf16>
    %cst_88 = arith.constant 0.000000e+00 : bf16
    %290 = vector.broadcast %cst_88 : bf16 to vector<64x128xbf16>
    %291 = arith.maximumf %285, %290 : vector<64x128xbf16>
    %cst_89 = arith.constant 0.000000e+00 : bf16
    %292 = vector.broadcast %cst_89 : bf16 to vector<64x128xbf16>
    %293 = arith.maximumf %289, %292 : vector<64x128xbf16>
    %294 = tpu.concatenate %291, %293 in 0 : vector<64x128xbf16>, vector<64x128xbf16> -> vector<128x128xbf16>
    %295 = arith.extf %294 : vector<128x128xbf16> to vector<128x128xf32>
    %c0_90 = arith.constant 0 : index
    %c0_91 = arith.constant 0 : index
    %296 = vector.load %arg4[%c0_90, %c0_91] : memref<128x128xf32, #tpu.memory_space<vmem>>, vector<128x128xf32>
    tpu.vector_store %arg4[%c0_90, %c0_91], %295 {strides = array<i32>} : memref<128x128xf32, #tpu.memory_space<vmem>>, vector<128x128xf32>,
    return
  }
  func.func @transform_0(%arg0: i32) -> (i32, i32) {
    %c0_i32 = arith.constant 0 : i32
    %c0_i32_0 = arith.constant 0 : i32
    return %arg0, %c0_i32 : i32, i32
  }
  func.func @transform_1(%arg0: i32) -> (i32, i32, i32) {
    %c0_i32 = arith.constant 0 : i32
    %c0_i32_0 = arith.constant 0 : i32
    %c0_i32_1 = arith.constant 0 : i32
    %c0_i32_2 = arith.constant 0 : i32
    return %c0_i32, %c0_i32_0, %c0_i32_1 : i32, i32, i32
  }
  func.func @transform_2(%arg0: i32) -> (i32, i32) {
    %c0_i32 = arith.constant 0 : i32
    %c0_i32_0 = arith.constant 0 : i32
    %c0_i32_1 = arith.constant 0 : i32
    return %c0_i32, %c0_i32_0 : i32, i32
  }
  func.func @transform_3(%arg0: i32) -> (i32, i32) {
    %c0_i32 = arith.constant 0 : i32
    %c0_i32_0 = arith.constant 0 : i32
    return %arg0, %c0_i32 : i32, i32
  }
}

</mosaic_0001>

<llo_original>
// kernel: tpu_custom_call.1
$region0: #{tpu_custom_call.1}
  #allocation0 [shape = 'u32[]', space=smem, size = 0x4, offset = 0x4, fixed_abs, tag = 'smem constant byte address 0x4 - core index']
  #allocation1 [shape = 'u32[144,128]{1,0:T(1,128)}', space=vmem, size = 0x12000, scoped, tag = 'internal scratch']
  %s0 = inlined_call_operand.hbm [shape: f32[256,128], index: 0, kind: input, shape index: {}]
  %s1 = inlined_call_operand.hbm [shape: bf16[3,128,128], index: 1, kind: input, shape index: {}]
  %s2 = inlined_call_operand.vmem [shape: f32[3,128], index: 2, kind: input, shape index: {}]
  %s3 = inlined_call_operand.hbm [shape: f32[256,128], index: 3, kind: output, shape index: {}]
  %s4 = sld [smem:[#allocation0]]
  $region53: #{tpu_custom_call.1} parent=0
    _
  %s6 = ssub.s32 1, %s4
  %s7 = scalar_select 0, %s6, %s4
  $region1: #{tpu_custom_call.1} parent=0
    #allocation2 [shape = 'u8[131072]{0}', space=vmem, size = 0x20000, scoped, tag = 'input window, operand 0']
    #allocation3 [shape = 's32[2]{0}', space=sflag, size = 0x8, scoped, tag = 'scoped memory for tpu_custom_call.1']
    #allocation4 [shape = 's32[2]{0}', space=sflag, size = 0x8, scoped, tag = 'scoped memory for tpu_custom_call.1']
    #allocation5 [shape = 'u8[98304]{0}', space=vmem, size = 0x18000, scoped, tag = 'input window, operand 1, single buffered']
    #allocation6 [shape = 's32[1]{0}', space=sflag, size = 0x4, scoped, tag = 'scoped memory for tpu_custom_call.1']
    #allocation7 [shape = 'u8[131072]{0}', space=vmem, size = 0x20000, scoped, tag = 'output window, operand 0']
    %8 = vsyncpa [#allocation3], 0
    %s9 = scalar_lea.sflag [#allocation3], 1
    %10 = vsyncpa %s9, 0
    %11 = vsyncpa [#allocation6], 0
    %12 = vsyncpa [#allocation4], 0
    %s13 = scalar_lea.sflag [#allocation4], 1
    %14 = vsyncpa %s13, 0
    loop: start=0, step=1, limit=4
    $region2: #{tpu_custom_call.1} parent=1 // loop_pre_header
      _
    $region3: #{tpu_custom_call.1} parent=1 // loop_header
      %s16 = sphi 0, %s20
      %p17 = scmp.ge.s32.totalorder %s16, 4
      %s26 = sphi 0, %s28
      %s29 = sphi 0, %s26
      %s30 = sphi 0, %s29
      %s46 = sphi 0, %s30
      %s50 = sphi 0, %s50
      %s52 = sphi 0, %s50
      %s53 = sphi 0, %s52
      %s67 = sphi 0, %s53
      %s71 = sphi 0, %s71
      %s73 = sphi 0, %s71
      %s74 = sphi 0, %s73
      %s88 = sphi 0, %s74
      %s94 = sphi 0, %s96
      %s97 = sphi 0, %s94
      %s98 = sphi 0, %s97
      %s114 = sphi 0, %s98
    $region4: #{tpu_custom_call.1} parent=1 // loop_header_branch
      %19 = sbr.rel (%p17) target = $region8
    $region5: #{tpu_custom_call.1} parent=1 // loop_body
      %s21 = ssub.s32 %s16, 1
      %s22 = ssub.s32 %s16, 2
      %s23 = sadd.s32 %s16, 1
      %s24 = ssub.s32 %s16, %s23
      %p25 = scmp.eq.s32.totalorder %s24, 0
      %s27 = sadd.s32 %s26, 1
      %s28 = scalar_select %p25, %s26, %s27
      %p31 = pneg %p25
      %p32 = scmp.eq.s32.totalorder %s16, 1
      %p33 = por %p31, %p32
      %p34 = scmp.ne.s32.totalorder %s26, %s29
      %p35 = scmp.eq.s32.totalorder %s16, 0
      %p36 = por %p34, %p35
      %p37 = scmp.ne.s32.totalorder %s26, %s29
      %p38 = scmp.eq.s32.totalorder %s21, 1
      %p39 = por %p37, %p38
      %p40 = scmp.ne.s32.totalorder %s29, %s30
      %p41 = scmp.eq.s32.totalorder %s21, 0
      %p42 = por %p40, %p41
      %p43 = scmp.ne.s32.totalorder %s29, %s30
      %p44 = scmp.eq.s32.totalorder %s22, 1
      %p45 = por %p43, %p44
      %p47 = scmp.ne.s32.totalorder %s30, %s46
      %p48 = scmp.eq.s32.totalorder %s22, 0
      %p49 = por %p47, %p48
      %s51 = sadd.s32 %s50, 1
      %p54 = scmp.eq.s32.totalorder %s16, 1
      %p55 = scmp.ne.s32.totalorder %s50, %s52
      %p56 = scmp.eq.s32.totalorder %s16, 0
      %p57 = por %p55, %p56
      %p58 = scmp.ne.s32.totalorder %s50, %s52
      %p59 = scmp.eq.s32.totalorder %s21, 1
      %p60 = por %p58, %p59
      %p61 = scmp.ne.s32.totalorder %s52, %s53
      %p62 = scmp.eq.s32.totalorder %s21, 0
      %p63 = por %p61, %p62
      %p64 = scmp.ne.s32.totalorder %s52, %s53
      %p65 = scmp.eq.s32.totalorder %s22, 1
      %p66 = por %p64, %p65
      %p68 = scmp.ne.s32.totalorder %s53, %s67
      %p69 = scmp.eq.s32.totalorder %s22, 0
      %p70 = por %p68, %p69
      %s72 = sadd.s32 %s71, 1
      %p75 = scmp.eq.s32.totalorder %s16, 1
      %p76 = scmp.ne.s32.totalorder %s71, %s73
      %p77 = scmp.eq.s32.totalorder %s16, 0
      %p78 = por %p76, %p77
      %p79 = scmp.ne.s32.totalorder %s71, %s73
      %p80 = scmp.eq.s32.totalorder %s21, 1
      %p81 = por %p79, %p80
      %p82 = scmp.ne.s32.totalorder %s73, %s74
      %p83 = scmp.eq.s32.totalorder %s21, 0
      %p84 = por %p82, %p83
      %p85 = scmp.ne.s32.totalorder %s73, %s74
      %p86 = scmp.eq.s32.totalorder %s22, 1
      %p87 = por %p85, %p86
      %p89 = scmp.ne.s32.totalorder %s74, %s88
      %p90 = scmp.eq.s32.totalorder %s22, 0
      %p91 = por %p89, %p90
      %s92 = ssub.s32 %s16, %s23
      %p93 = scmp.eq.s32.totalorder %s92, 0
      %s95 = sadd.s32 %s94, 1
      %s96 = scalar_select %p93, %s94, %s95
      %p99 = pneg %p93
      %p100 = scmp.eq.s32.totalorder %s16, 1
      %p101 = por %p99, %p100
      %p102 = scmp.ne.s32.totalorder %s94, %s97
      %p103 = scmp.eq.s32.totalorder %s16, 0
      %p104 = por %p102, %p103
      %p105 = scmp.ne.s32.totalorder %s94, %s97
      %p106 = scmp.eq.s32.totalorder %s21, 1
      %p107 = por %p105, %p106
      %p108 = scmp.ne.s32.totalorder %s97, %s98
      %p109 = scmp.eq.s32.totalorder %s21, 0
      %p110 = por %p108, %p109
      %p111 = scmp.ne.s32.totalorder %s97, %s98
      %p112 = scmp.eq.s32.totalorder %s22, 1
      %p113 = por %p111, %p112
      %p115 = scmp.ne.s32.totalorder %s98, %s114
      %p116 = scmp.eq.s32.totalorder %s22, 0
      %p117 = por %p115, %p116
      %p118 = scmp.le.s32.totalorder 1, %s16
      %p119 = scmp.lt.s32.totalorder %s16, 3
      %p120 = pnand %p118, %p119
      %p121 = pneg %p120
      // Predicated region
      $region9: #{tpu_custom_call.1} parent=5 // pred_check
        _
      $region10: #{tpu_custom_call.1} parent=5 // pred_check_branch
        %123 = sbr.rel (%p120) target = $region12
      $region11: #{tpu_custom_call.1} parent=5 // pred_region
        %s124 = ssub.s32 %s16, 1
        // Predicated region
        $region13: #{tpu_custom_call.1} parent=11 // pred_check
          %p125 = pneg %p63
        $region14: #{tpu_custom_call.1} parent=11 // pred_check_branch
          %127 = sbr.rel (%p125) target = $region16
        $region15: #{tpu_custom_call.1} parent=11 // pred_region
          %s129 = ssub.s32 3072, 3072
          %130 = vsyncadd [#allocation6], %s129
          %s131 = sshll.u32 [#allocation5], 4
          %s132 = int_to_ptr.vmem [resolvable:$true] %s131
          %137 = dma.hbm_to_vmem [thread:$0]  %s1, 3072, %s132, [#allocation6], 64, 64, 4
        $region16: #{tpu_custom_call.1} parent=11 // pred_fallthru
          _
        // Predicated region
        $region17: #{tpu_custom_call.1} parent=11 // pred_check
          %p138 = pneg %p84
        $region18: #{tpu_custom_call.1} parent=11 // pred_check_branch
          %140 = sbr.rel (%p138) target = $region20
        $region19: #{tpu_custom_call.1} parent=11 // pred_region
          _
        $region20: #{tpu_custom_call.1} parent=11 // pred_fallthru
          _
      $region12: #{tpu_custom_call.1} parent=5 // pred_fallthru
        _
      %p141 = scmp.lt.s32.totalorder %s16, 2
      // Predicated region
      $region21: #{tpu_custom_call.1} parent=5 // pred_check
        %p142 = pneg %p141
      $region22: #{tpu_custom_call.1} parent=5 // pred_check_branch
        %144 = sbr.rel (%p142) target = $region24
      $region23: #{tpu_custom_call.1} parent=5 // pred_region
        // Predicated region
        $region25: #{tpu_custom_call.1} parent=23 // pred_check
          %p145 = pneg %p36
        $region26: #{tpu_custom_call.1} parent=23 // pred_check_branch
          %147 = sbr.rel (%p145) target = $region28
        $region27: #{tpu_custom_call.1} parent=23 // pred_region
          %s148 = sand.u32 %s26, 1
          %s149 = scalar_lea.sflag [#allocation3], %s148
          %s150 = sand.u32 %s26, 1
          %s151 = smul.addr %s150, 128
          %s152 = scalar_lea.vmem [#allocation2], %s151
          %s153 = smul.u32 16, %s16
          %s155 = ssub.s32 2048, 2048
          %156 = vsyncadd %s149, %s155
          %s157 = smul.addr %s153, 128
          %s158 = scalar_lea.hbm %s0, %s157
          %s159 = sshll.u32 %s152, 4
          %s160 = int_to_ptr.vmem [resolvable:$true] %s159
          %165 = dma.hbm_to_vmem [thread:$0]  %s158, 2048, %s160, %s149, 128, 128, 8
        $region28: #{tpu_custom_call.1} parent=23 // pred_fallthru
          _
      $region24: #{tpu_custom_call.1} parent=5 // pred_fallthru
        _
      %p166 = scmp.le.s32.totalorder 1, %s16
      %p167 = scmp.lt.s32.totalorder %s16, 3
      %p168 = pnand %p166, %p167
      %p169 = pneg %p168
      // Predicated region
      $region29: #{tpu_custom_call.1} parent=5 // pred_check
        _
      $region30: #{tpu_custom_call.1} parent=5 // pred_check_branch
        %171 = sbr.rel (%p168) target = $region32
      $region31: #{tpu_custom_call.1} parent=5 // pred_region
        %s172 = ssub.s32 %s16, 1
        %s173 = sand.u32 %s29, 1
        %s174 = scalar_lea.sflag [#allocation3], %s173
        %s175 = sand.u32 %s29, 1
        %s176 = smul.addr %s175, 128
        %s177 = scalar_lea.vmem [#allocation2], %s176
        // Predicated region
        $region33: #{tpu_custom_call.1} parent=31 // pred_check
          %p178 = pneg %p42
        $region34: #{tpu_custom_call.1} parent=31 // pred_check_branch
          %180 = sbr.rel (%p178) target = $region36
        $region35: #{tpu_custom_call.1} parent=31 // pred_region
          %181 = dma.done %s174, 2048
        $region36: #{tpu_custom_call.1} parent=31 // pred_fallthru
          _
        // Predicated region
        $region37: #{tpu_custom_call.1} parent=31 // pred_check
          %p182 = pneg %p63
        $region38: #{tpu_custom_call.1} parent=31 // pred_check_branch
          %184 = sbr.rel (%p182) target = $region40
        $region39: #{tpu_custom_call.1} parent=31 // pred_region
          %185 = dma.done [#allocation6], 3072
        $region40: #{tpu_custom_call.1} parent=31 // pred_fallthru
          _
        %s186 = sand.u32 %s29, 1
        %s187 = scalar_lea.sflag [#allocation3], %s186
        %s188 = sand.u32 %s29, 1
        %s189 = smul.addr %s188, 128
        %s190 = scalar_lea.vmem [#allocation2], %s189
        %p191 = pneg %p42
        %p192 = pneg %p39
        %p193 = pneg %p63
        %p194 = pneg %p60
        %p195 = pneg %p84
        %p196 = pneg %p81
        %p197 = pneg %p110
        %p198 = pneg %p107
        %s199 = sand.u32 %s97, 1
        %s200 = scalar_lea.sflag [#allocation4], %s199
        %s201 = sand.u32 %s97, 1
        %s202 = smul.addr %s201, 128
        %s203 = scalar_lea.vmem [#allocation7], %s202
        %s204 = smul.u32 16, %s21
        %s205 = smul.u32 16, %s21
        %v207 = vld [vmem:[#allocation5] sm:$0xf]
        %v208 = vld [vmem:[#allocation5 + $0x4] sm:$0xf]
        %v209 = vld [vmem:[#allocation5 + $0x8] sm:$0xf]
        %v210 = vld [vmem:[#allocation5 + $0xc] sm:$0xf]
        %v211 = vld [vmem:[#allocation5 + $0x10] sm:$0xf]
        %v212 = vld [vmem:[#allocation5 + $0x14] sm:$0xf]
        %v213 = vld [vmem:[#allocation5 + $0x18] sm:$0xf]
        %v214 = vld [vmem:[#allocation5 + $0x1c] sm:$0xf]
        %v215 = vld [vmem:[#allocation5 + $0x20] sm:$0xf]
        %v216 = vld [vmem:[#allocation5 + $0x24] sm:$0xf]
        %v217 = vld [vmem:[#allocation5 + $0x28] sm:$0xf]
        %v218 = vld [vmem:[#allocation5 + $0x2c] sm:$0xf]
        %v219 = vld [vmem:[#allocation5 + $0x30] sm:$0xf]
        %v220 = vld [vmem:[#allocation5 + $0x34] sm:$0xf]
        %v221 = vld [vmem:[#allocation5 + $0x38] sm:$0xf]
        %v222 = vld [vmem:[#allocation5 + $0x3c] sm:$0xf]
        %s223 = scalar_lea.vmem [#allocation5], 64
        %v224 = vld [vmem:[%s223] sm:$0xf]
        %v225 = vld [vmem:[%s223 + $0x4] sm:$0xf]
        %v226 = vld [vmem:[%s223 + $0x8] sm:$0xf]
        %v227 = vld [vmem:[%s223 + $0xc] sm:$0xf]
        %v228 = vld [vmem:[%s223 + $0x10] sm:$0xf]
        %v229 = vld [vmem:[%s223 + $0x14] sm:$0xf]
        %v230 = vld [vmem:[%s223 + $0x18] sm:$0xf]
        %v231 = vld [vmem:[%s223 + $0x1c] sm:$0xf]
        %v232 = vld [vmem:[%s223 + $0x20] sm:$0xf]
        %v233 = vld [vmem:[%s223 + $0x24] sm:$0xf]
        %v234 = vld [vmem:[%s223 + $0x28] sm:$0xf]
        %v235 = vld [vmem:[%s223 + $0x2c] sm:$0xf]
        %v236 = vld [vmem:[%s223 + $0x30] sm:$0xf]
        %v237 = vld [vmem:[%s223 + $0x34] sm:$0xf]
        %v238 = vld [vmem:[%s223 + $0x38] sm:$0xf]
        %v239 = vld [vmem:[%s223 + $0x3c] sm:$0xf]
        %s240 = scalar_lea.vmem [#allocation5], 128
        %v241 = vld [vmem:[%s240] sm:$0xf]
        %v242 = vld [vmem:[%s240 + $0x4] sm:$0xf]
        %v243 = vld [vmem:[%s240 + $0x8] sm:$0xf]
        %v244 = vld [vmem:[%s240 + $0xc] sm:$0xf]
        %v245 = vld [vmem:[%s240 + $0x10] sm:$0xf]
        %v246 = vld [vmem:[%s240 + $0x14] sm:$0xf]
        %v247 = vld [vmem:[%s240 + $0x18] sm:$0xf]
        %v248 = vld [vmem:[%s240 + $0x1c] sm:$0xf]
        %v249 = vld [vmem:[%s240 + $0x20] sm:$0xf]
        %v250 = vld [vmem:[%s240 + $0x24] sm:$0xf]
        %v251 = vld [vmem:[%s240 + $0x28] sm:$0xf]
        %v252 = vld [vmem:[%s240 + $0x2c] sm:$0xf]
        %v253 = vld [vmem:[%s240 + $0x30] sm:$0xf]
        %v254 = vld [vmem:[%s240 + $0x34] sm:$0xf]
        %v255 = vld [vmem:[%s240 + $0x38] sm:$0xf]
        %v256 = vld [vmem:[%s240 + $0x3c] sm:$0xf]
        %v257 = vld [vmem:[%s2] sm:$0x7]
        %v258 = vld [vmem:[%s177] sm:$0xff]
        %v259 = vld [vmem:[%s177 + $0x8] sm:$0xff]
        %v260 = vld [vmem:[%s177 + $0x10] sm:$0xff]
        %v261 = vld [vmem:[%s177 + $0x18] sm:$0xff]
        %v262 = vld [vmem:[%s177 + $0x20] sm:$0xff]
        %v263 = vld [vmem:[%s177 + $0x28] sm:$0xff]
        %v264 = vld [vmem:[%s177 + $0x30] sm:$0xff]
        %v265 = vld [vmem:[%s177 + $0x38] sm:$0xff]
        %v266 = vpack.c.bf16 %v259, %v258
        %v267 = vpack.c.bf16 %v261, %v260
        %v268 = vpack.c.bf16 %v263, %v262
        %v269 = vpack.c.bf16 %v265, %v264
        %v270 = vld [vmem:[%s177 + $0x40] sm:$0xff]
        %v271 = vld [vmem:[%s177 + $0x48] sm:$0xff]
        %v272 = vld [vmem:[%s177 + $0x50] sm:$0xff]
        %v273 = vld [vmem:[%s177 + $0x58] sm:$0xff]
        %v274 = vld [vmem:[%s177 + $0x60] sm:$0xff]
        %v275 = vld [vmem:[%s177 + $0x68] sm:$0xff]
        %v276 = vld [vmem:[%s177 + $0x70] sm:$0xff]
        %v277 = vld [vmem:[%s177 + $0x78] sm:$0xff]
        %v278 = vpack.c.bf16 %v271, %v270
        %v279 = vpack.c.bf16 %v273, %v272
        %v280 = vpack.c.bf16 %v275, %v274
        %v281 = vpack.c.bf16 %v277, %v276
        %v282 = vlaneseq
        %v283 = vshrl.u32 %v282, 7
        %v284 = vsub.s32 0, %v283
        %v285 = vrot.slane %v257, %v284
        %v302 = vunpack.c.l.b16 %v207
        %v303 = vunpack.c.l.b16 %v208
        %v304 = vunpack.c.l.b16 %v209
        %v305 = vunpack.c.l.b16 %v210
        %v306 = vunpack.c.l.b16 %v211
        %v307 = vunpack.c.l.b16 %v212
        %v308 = vunpack.c.l.b16 %v213
        %v309 = vunpack.c.l.b16 %v214
        %v310 = vunpack.c.l.b16 %v215
        %v311 = vunpack.c.l.b16 %v216
        %v312 = vunpack.c.l.b16 %v217
        %v313 = vunpack.c.l.b16 %v218
        %v314 = vunpack.c.l.b16 %v219
        %v315 = vunpack.c.l.b16 %v220
        %v316 = vunpack.c.l.b16 %v221
        %v317 = vunpack.c.l.b16 %v222
        %v318 = vpack.c.b16 %v303, %v302
        %v319 = vpack.c.b16 %v305, %v304
        %v320 = vpack.c.b16 %v307, %v306
        %v321 = vpack.c.b16 %v309, %v308
        %v322 = vpack.c.b16 %v311, %v310
        %v323 = vpack.c.b16 %v313, %v312
        %v324 = vpack.c.b16 %v315, %v314
        %v325 = vpack.c.b16 %v317, %v316
        %334 = vmatprep.subr.bf16.mxu0 0
        %335 = vmatpush1.bf16.msra.mxu0 %v318
        %336 = vmatprep.subr.bf16.mxu0 0
        %337 = vmatpush1.bf16.msra.mxu0 %v319
        %338 = vmatprep.subr.bf16.mxu0 0
        %339 = vmatpush1.bf16.msra.mxu0 %v320
        %340 = vmatprep.subr.bf16.mxu0 0
        %341 = vmatpush1.bf16.msra.mxu0 %v321
        %342 = vmatprep.subr.bf16.mxu0 0
        %343 = vmatpush1.bf16.msra.mxu0 %v322
        %344 = vmatprep.subr.bf16.mxu0 0
        %345 = vmatpush1.bf16.msra.mxu0 %v323
        %346 = vmatprep.subr.bf16.mxu0 0
        %347 = vmatpush1.bf16.msra.mxu0 %v324
        %348 = vmatprep.subr.bf16.mxu0 0
        %349 = vmatpush1.bf16.msra.mxu0 %v325
        %350 = vmatprep.subr.bf16.mxu0 0
        %351 = vmatpush1.bf16.msra.mxu0 0
        %352 = vmatprep.subr.bf16.mxu0 0
        %353 = vmatpush1.bf16.msra.mxu0 0
        %354 = vmatprep.subr.bf16.mxu0 0
        %355 = vmatpush1.bf16.msra.mxu0 0
        %356 = vmatprep.subr.bf16.mxu0 0
        %357 = vmatpush1.bf16.msra.mxu0 0
        %358 = vmatprep.subr.bf16.mxu0 0
        %359 = vmatpush1.bf16.msra.mxu0 0
        %360 = vmatprep.subr.bf16.mxu0 0
        %361 = vmatpush1.bf16.msra.mxu0 0
        %362 = vmatprep.subr.bf16.mxu0 0
        %363 = vmatpush1.bf16.msra.mxu0 0
        %364 = vmatprep.subr.bf16.mxu0 0
        %365 = vmatpush1.bf16.msra.mxu0 0
        %366 = vmatprep.mubr.bf16.mxu0 0
        %367 = vmatmul.mubr.bf16.gmra.mrb[0].mxu0 %v266
        %v368 = vpop.f32.mrb[0].mxu0
        %v369 = vadd.f32 %v285, %v368
        %v370 = vpop.f32.mrb[0].mxu0
        %v371 = vpop.f32.mrb[0].mxu0
        %v372 = vadd.f32 %v285, %v371
        %v373 = vpop.f32.mrb[0].mxu0
        %374 = vmatprep.mubr.bf16.mxu0 0
        %375 = vmatmul.mubr.bf16.gmra.mrb[0].mxu0 %v267
        %v376 = vpop.f32.mrb[0].mxu0
        %v377 = vadd.f32 %v285, %v376
        %v378 = vpop.f32.mrb[0].mxu0
        %v379 = vpop.f32.mrb[0].mxu0
        %v380 = vadd.f32 %v285, %v379
        %v381 = vpop.f32.mrb[0].mxu0
        %382 = vmatprep.mubr.bf16.mxu0 0
        %383 = vmatmul.mubr.bf16.gmra.mrb[0].mxu0 %v268
        %v384 = vpop.f32.mrb[0].mxu0
        %v385 = vadd.f32 %v285, %v384
        %v386 = vpop.f32.mrb[0].mxu0
        %v387 = vpop.f32.mrb[0].mxu0
        %v388 = vadd.f32 %v285, %v387
        %v389 = vpop.f32.mrb[0].mxu0
        %390 = vmatprep.mubr.bf16.mxu0 0
        %391 = vmatmul.mubr.bf16.gmra.mrb[0].mxu0 %v269
        %v392 = vpop.f32.mrb[0].mxu0
        %v393 = vadd.f32 %v285, %v392
        %v394 = vpop.f32.mrb[0].mxu0
        %v395 = vpop.f32.mrb[0].mxu0
        %v396 = vadd.f32 %v285, %v395
        %v397 = vpop.f32.mrb[0].mxu0
        %398 = vdwg.mxu0
        %v399 = vpack.c.bf16 %v372, %v369
        %v400 = vpack.c.bf16 %v380, %v377
        %v401 = vpack.c.bf16 %v388, %v385
        %v402 = vpack.c.bf16 %v396, %v393
        %403 = vmatprep.subr.bf16.mxu0 0
        %404 = vmatpush1.bf16.msra.mxu0 %v318
        %405 = vmatprep.subr.bf16.mxu0 0
        %406 = vmatpush1.bf16.msra.mxu0 %v319
        %407 = vmatprep.subr.bf16.mxu0 0
        %408 = vmatpush1.bf16.msra.mxu0 %v320
        %409 = vmatprep.subr.bf16.mxu0 0
        %410 = vmatpush1.bf16.msra.mxu0 %v321
        %411 = vmatprep.subr.bf16.mxu0 0
        %412 = vmatpush1.bf16.msra.mxu0 %v322
        %413 = vmatprep.subr.bf16.mxu0 0
        %414 = vmatpush1.bf16.msra.mxu0 %v323
        %415 = vmatprep.subr.bf16.mxu0 0
        %416 = vmatpush1.bf16.msra.mxu0 %v324
        %417 = vmatprep.subr.bf16.mxu0 0
        %418 = vmatpush1.bf16.msra.mxu0 %v325
        %419 = vmatprep.subr.bf16.mxu0 0
        %420 = vmatpush1.bf16.msra.mxu0 0
        %421 = vmatprep.subr.bf16.mxu0 0
        %422 = vmatpush1.bf16.msra.mxu0 0
        %423 = vmatprep.subr.bf16.mxu0 0
        %424 = vmatpush1.bf16.msra.mxu0 0
        %425 = vmatprep.subr.bf16.mxu0 0
        %426 = vmatpush1.bf16.msra.mxu0 0
        %427 = vmatprep.subr.bf16.mxu0 0
        %428 = vmatpush1.bf16.msra.mxu0 0
        %429 = vmatprep.subr.bf16.mxu0 0
        %430 = vmatpush1.bf16.msra.mxu0 0
        %431 = vmatprep.subr.bf16.mxu0 0
        %432 = vmatpush1.bf16.msra.mxu0 0
        %433 = vmatprep.subr.bf16.mxu0 0
        %434 = vmatpush1.bf16.msra.mxu0 0
        %435 = vmatprep.mubr.bf16.mxu0 0
        %436 = vmatmul.mubr.bf16.gmra.mrb[0].mxu0 %v278
        %v437 = vpop.f32.mrb[0].mxu0
        %v438 = vadd.f32 %v285, %v437
        %v439 = vpop.f32.mrb[0].mxu0
        %v440 = vpop.f32.mrb[0].mxu0
        %v441 = vadd.f32 %v285, %v440
        %v442 = vpop.f32.mrb[0].mxu0
        %443 = vmatprep.mubr.bf16.mxu0 0
        %444 = vmatmul.mubr.bf16.gmra.mrb[0].mxu0 %v279
        %v445 = vpop.f32.mrb[0].mxu0
        %v446 = vadd.f32 %v285, %v445
        %v447 = vpop.f32.mrb[0].mxu0
        %v448 = vpop.f32.mrb[0].mxu0
        %v449 = vadd.f32 %v285, %v448
        %v450 = vpop.f32.mrb[0].mxu0
        %451 = vmatprep.mubr.bf16.mxu0 0
        %452 = vmatmul.mubr.bf16.gmra.mrb[0].mxu0 %v280
        %v453 = vpop.f32.mrb[0].mxu0
        %v454 = vadd.f32 %v285, %v453
        %v455 = vpop.f32.mrb[0].mxu0
        %v456 = vpop.f32.mrb[0].mxu0
        %v457 = vadd.f32 %v285, %v456
        %v458 = vpop.f32.mrb[0].mxu0
        %459 = vmatprep.mubr.bf16.mxu0 0
        %460 = vmatmul.mubr.bf16.gmra.mrb[0].mxu0 %v281
        %v461 = vpop.f32.mrb[0].mxu0
        %v462 = vadd.f32 %v285, %v461
        %v463 = vpop.f32.mrb[0].mxu0
        %v464 = vpop.f32.mrb[0].mxu0
        %v465 = vadd.f32 %v285, %v464
        %v466 = vpop.f32.mrb[0].mxu0
        %467 = vdwg.mxu0
        %v468 = vpack.c.bf16 %v441, %v438
        %v469 = vpack.c.bf16 %v449, %v446
        %v470 = vpack.c.bf16 %v457, %v454
        %v471 = vpack.c.bf16 %v465, %v462
        %v472 = vlaneseq
        %v473 = vshrl.u32 %v472, 7
        %v474 = vsub.s32 1, %v473
        %v475 = vrot.slane %v257, %v474
        %v492 = vunpack.c.l.b16 %v224
        %v493 = vunpack.c.l.b16 %v225
        %v494 = vunpack.c.l.b16 %v226
        %v495 = vunpack.c.l.b16 %v227
        %v496 = vunpack.c.l.b16 %v228
        %v497 = vunpack.c.l.b16 %v229
        %v498 = vunpack.c.l.b16 %v230
        %v499 = vunpack.c.l.b16 %v231
        %v500 = vunpack.c.l.b16 %v232
        %v501 = vunpack.c.l.b16 %v233
        %v502 = vunpack.c.l.b16 %v234
        %v503 = vunpack.c.l.b16 %v235
        %v504 = vunpack.c.l.b16 %v236
        %v505 = vunpack.c.l.b16 %v237
        %v506 = vunpack.c.l.b16 %v238
        %v507 = vunpack.c.l.b16 %v239
        %v508 = vpack.c.b16 %v493, %v492
        %v509 = vpack.c.b16 %v495, %v494
        %v510 = vpack.c.b16 %v497, %v496
        %v511 = vpack.c.b16 %v499, %v498
        %v512 = vpack.c.b16 %v501, %v500
        %v513 = vpack.c.b16 %v503, %v502
        %v514 = vpack.c.b16 %v505, %v504
        %v515 = vpack.c.b16 %v507, %v506
        %524 = vmatprep.subr.bf16.mxu0 0
        %525 = vmatpush1.bf16.msra.mxu0 %v508
        %526 = vmatprep.subr.bf16.mxu0 0
        %527 = vmatpush1.bf16.msra.mxu0 %v509
        %528 = vmatprep.subr.bf16.mxu0 0
        %529 = vmatpush1.bf16.msra.mxu0 %v510
        %530 = vmatprep.subr.bf16.mxu0 0
        %531 = vmatpush1.bf16.msra.mxu0 %v511
        %532 = vmatprep.subr.bf16.mxu0 0
        %533 = vmatpush1.bf16.msra.mxu0 %v512
        %534 = vmatprep.subr.bf16.mxu0 0
        %535 = vmatpush1.bf16.msra.mxu0 %v513
        %536 = vmatprep.subr.bf16.mxu0 0
        %537 = vmatpush1.bf16.msra.mxu0 %v514
        %538 = vmatprep.subr.bf16.mxu0 0
        %539 = vmatpush1.bf16.msra.mxu0 %v515
        %540 = vmatprep.subr.bf16.mxu0 0
        %541 = vmatpush1.bf16.msra.mxu0 0
        %542 = vmatprep.subr.bf16.mxu0 0
        %543 = vmatpush1.bf16.msra.mxu0 0
        %544 = vmatprep.subr.bf16.mxu0 0
        %545 = vmatpush1.bf16.msra.mxu0 0
        %546 = vmatprep.subr.bf16.mxu0 0
        %547 = vmatpush1.bf16.msra.mxu0 0
        %548 = vmatprep.subr.bf16.mxu0 0
        %549 = vmatpush1.bf16.msra.mxu0 0
        %550 = vmatprep.subr.bf16.mxu0 0
        %551 = vmatpush1.bf16.msra.mxu0 0
        %552 = vmatprep.subr.bf16.mxu0 0
        %553 = vmatpush1.bf16.msra.mxu0 0
        %554 = vmatprep.subr.bf16.mxu0 0
        %555 = vmatpush1.bf16.msra.mxu0 0
        %556 = vmatprep.mubr.bf16.mxu0 0
        %557 = vmatmul.mubr.bf16.gmra.mrb[0].mxu0 %v399
        %v558 = vpop.f32.mrb[0].mxu0
        %v559 = vadd.f32 %v475, %v558
        %v560 = vpop.f32.mrb[0].mxu0
        %v561 = vpop.f32.mrb[0].mxu0
        %v562 = vadd.f32 %v475, %v561
        %v563 = vpop.f32.mrb[0].mxu0
        %564 = vmatprep.mubr.bf16.mxu0 0
        %565 = vmatmul.mubr.bf16.gmra.mrb[0].mxu0 %v400
        %v566 = vpop.f32.mrb[0].mxu0
        %v567 = vadd.f32 %v475, %v566
        %v568 = vpop.f32.mrb[0].mxu0
        %v569 = vpop.f32.mrb[0].mxu0
        %v570 = vadd.f32 %v475, %v569
        %v571 = vpop.f32.mrb[0].mxu0
        %572 = vmatprep.mubr.bf16.mxu0 0
        %573 = vmatmul.mubr.bf16.gmra.mrb[0].mxu0 %v401
        %v574 = vpop.f32.mrb[0].mxu0
        %v575 = vadd.f32 %v475, %v574
        %v576 = vpop.f32.mrb[0].mxu0
        %v577 = vpop.f32.mrb[0].mxu0
        %v578 = vadd.f32 %v475, %v577
        %v579 = vpop.f32.mrb[0].mxu0
        %580 = vmatprep.mubr.bf16.mxu0 0
        %581 = vmatmul.mubr.bf16.gmra.mrb[0].mxu0 %v402
        %v582 = vpop.f32.mrb[0].mxu0
        %v583 = vadd.f32 %v475, %v582
        %v584 = vpop.f32.mrb[0].mxu0
        %v585 = vpop.f32.mrb[0].mxu0
        %v586 = vadd.f32 %v475, %v585
        %v587 = vpop.f32.mrb[0].mxu0
        %588 = vdwg.mxu0
        %v589 = vpack.c.bf16 %v562, %v559
        %v590 = vpack.c.bf16 %v570, %v567
        %v591 = vpack.c.bf16 %v578, %v575
        %v592 = vpack.c.bf16 %v586, %v583
        %593 = vmatprep.subr.bf16.mxu0 0
        %594 = vmatpush1.bf16.msra.mxu0 %v508
        %595 = vmatprep.subr.bf16.mxu0 0
        %596 = vmatpush1.bf16.msra.mxu0 %v509
        %597 = vmatprep.subr.bf16.mxu0 0
        %598 = vmatpush1.bf16.msra.mxu0 %v510
        %599 = vmatprep.subr.bf16.mxu0 0
        %600 = vmatpush1.bf16.msra.mxu0 %v511
        %601 = vmatprep.subr.bf16.mxu0 0
        %602 = vmatpush1.bf16.msra.mxu0 %v512
        %603 = vmatprep.subr.bf16.mxu0 0
        %604 = vmatpush1.bf16.msra.mxu0 %v513
        %605 = vmatprep.subr.bf16.mxu0 0
        %606 = vmatpush1.bf16.msra.mxu0 %v514
        %607 = vmatprep.subr.bf16.mxu0 0
        %608 = vmatpush1.bf16.msra.mxu0 %v515
        %609 = vmatprep.subr.bf16.mxu0 0
        %610 = vmatpush1.bf16.msra.mxu0 0
        %611 = vmatprep.subr.bf16.mxu0 0
        %612 = vmatpush1.bf16.msra.mxu0 0
        %613 = vmatprep.subr.bf16.mxu0 0
        %614 = vmatpush1.bf16.msra.mxu0 0
        %615 = vmatprep.subr.bf16.mxu0 0
        %616 = vmatpush1.bf16.msra.mxu0 0
        %617 = vmatprep.subr.bf16.mxu0 0
        %618 = vmatpush1.bf16.msra.mxu0 0
        %619 = vmatprep.subr.bf16.mxu0 0
        %620 = vmatpush1.bf16.msra.mxu0 0
        %621 = vmatprep.subr.bf16.mxu0 0
        %622 = vmatpush1.bf16.msra.mxu0 0
        %623 = vmatprep.subr.bf16.mxu0 0
        %624 = vmatpush1.bf16.msra.mxu0 0
        %625 = vmatprep.mubr.bf16.mxu0 0
        %626 = vmatmul.mubr.bf16.gmra.mrb[0].mxu0 %v468
        %v627 = vpop.f32.mrb[0].mxu0
        %v628 = vadd.f32 %v475, %v627
        %v629 = vpop.f32.mrb[0].mxu0
        %v630 = vpop.f32.mrb[0].mxu0
        %v631 = vadd.f32 %v475, %v630
        %v632 = vpop.f32.mrb[0].mxu0
        %633 = vmatprep.mubr.bf16.mxu0 0
        %634 = vmatmul.mubr.bf16.gmra.mrb[0].mxu0 %v469
        %v635 = vpop.f32.mrb[0].mxu0
        %v636 = vadd.f32 %v475, %v635
        %v637 = vpop.f32.mrb[0].mxu0
        %v638 = vpop.f32.mrb[0].mxu0
        %v639 = vadd.f32 %v475, %v638
        %v640 = vpop.f32.mrb[0].mxu0
        %641 = vmatprep.mubr.bf16.mxu0 0
        %642 = vmatmul.mubr.bf16.gmra.mrb[0].mxu0 %v470
        %v643 = vpop.f32.mrb[0].mxu0
        %v644 = vadd.f32 %v475, %v643
        %v645 = vpop.f32.mrb[0].mxu0
        %v646 = vpop.f32.mrb[0].mxu0
        %v647 = vadd.f32 %v475, %v646
        %v648 = vpop.f32.mrb[0].mxu0
        %649 = vmatprep.mubr.bf16.mxu0 0
        %650 = vmatmul.mubr.bf16.gmra.mrb[0].mxu0 %v471
        %v651 = vpop.f32.mrb[0].mxu0
        %v652 = vadd.f32 %v475, %v651
        %v653 = vpop.f32.mrb[0].mxu0
        %v654 = vpop.f32.mrb[0].mxu0
        %v655 = vadd.f32 %v475, %v654
        %v656 = vpop.f32.mrb[0].mxu0
        %657 = vdwg.mxu0
        %v658 = vpack.c.bf16 %v631, %v628
        %v659 = vpack.c.bf16 %v639, %v636
        %v660 = vpack.c.bf16 %v647, %v644
        %v661 = vpack.c.bf16 %v655, %v652
        %v662 = vlaneseq
        %v663 = vshrl.u32 %v662, 7
        %v664 = vsub.s32 2, %v663
        %v665 = vrot.slane %v257, %v664
        %v682 = vunpack.c.l.b16 %v241
        %v683 = vunpack.c.l.b16 %v242
        %v684 = vunpack.c.l.b16 %v243
        %v685 = vunpack.c.l.b16 %v244
        %v686 = vunpack.c.l.b16 %v245
        %v687 = vunpack.c.l.b16 %v246
        %v688 = vunpack.c.l.b16 %v247
        %v689 = vunpack.c.l.b16 %v248
        %v690 = vunpack.c.l.b16 %v249
        %v691 = vunpack.c.l.b16 %v250
        %v692 = vunpack.c.l.b16 %v251
        %v693 = vunpack.c.l.b16 %v252
        %v694 = vunpack.c.l.b16 %v253
        %v695 = vunpack.c.l.b16 %v254
        %v696 = vunpack.c.l.b16 %v255
        %v697 = vunpack.c.l.b16 %v256
        %v698 = vpack.c.b16 %v683, %v682
        %v699 = vpack.c.b16 %v685, %v684
        %v700 = vpack.c.b16 %v687, %v686
        %v701 = vpack.c.b16 %v689, %v688
        %v702 = vpack.c.b16 %v691, %v690
        %v703 = vpack.c.b16 %v693, %v692
        %v704 = vpack.c.b16 %v695, %v694
        %v705 = vpack.c.b16 %v697, %v696
        %714 = vmatprep.subr.bf16.mxu0 0
        %715 = vmatpush1.bf16.msra.mxu0 %v698
        %716 = vmatprep.subr.bf16.mxu0 0
        %717 = vmatpush1.bf16.msra.mxu0 %v699
        %718 = vmatprep.subr.bf16.mxu0 0
        %719 = vmatpush1.bf16.msra.mxu0 %v700
        %720 = vmatprep.subr.bf16.mxu0 0
        %721 = vmatpush1.bf16.msra.mxu0 %v701
        %722 = vmatprep.subr.bf16.mxu0 0
        %723 = vmatpush1.bf16.msra.mxu0 %v702
        %724 = vmatprep.subr.bf16.mxu0 0
        %725 = vmatpush1.bf16.msra.mxu0 %v703
        %726 = vmatprep.subr.bf16.mxu0 0
        %727 = vmatpush1.bf16.msra.mxu0 %v704
        %728 = vmatprep.subr.bf16.mxu0 0
        %729 = vmatpush1.bf16.msra.mxu0 %v705
        %730 = vmatprep.subr.bf16.mxu0 0
        %731 = vmatpush1.bf16.msra.mxu0 0
        %732 = vmatprep.subr.bf16.mxu0 0
        %733 = vmatpush1.bf16.msra.mxu0 0
        %734 = vmatprep.subr.bf16.mxu0 0
        %735 = vmatpush1.bf16.msra.mxu0 0
        %736 = vmatprep.subr.bf16.mxu0 0
        %737 = vmatpush1.bf16.msra.mxu0 0
        %738 = vmatprep.subr.bf16.mxu0 0
        %739 = vmatpush1.bf16.msra.mxu0 0
        %740 = vmatprep.subr.bf16.mxu0 0
        %741 = vmatpush1.bf16.msra.mxu0 0
        %742 = vmatprep.subr.bf16.mxu0 0
        %743 = vmatpush1.bf16.msra.mxu0 0
        %744 = vmatprep.subr.bf16.mxu0 0
        %745 = vmatpush1.bf16.msra.mxu0 0
        %746 = vmatprep.mubr.bf16.mxu0 0
        %747 = vmatmul.mubr.bf16.gmra.mrb[0].mxu0 %v589
        %v748 = vpop.f32.mrb[0].mxu0
        %v749 = vadd.f32 %v665, %v748
        %v750 = vpop.f32.mrb[0].mxu0
        %v751 = vpop.f32.mrb[0].mxu0
        %v752 = vadd.f32 %v665, %v751
        %v753 = vpop.f32.mrb[0].mxu0
        %754 = vmatprep.mubr.bf16.mxu0 0
        %755 = vmatmul.mubr.bf16.gmra.mrb[0].mxu0 %v590
        %v756 = vpop.f32.mrb[0].mxu0
        %v757 = vadd.f32 %v665, %v756
        %v758 = vpop.f32.mrb[0].mxu0
        %v759 = vpop.f32.mrb[0].mxu0
        %v760 = vadd.f32 %v665, %v759
        %v761 = vpop.f32.mrb[0].mxu0
        %762 = vmatprep.mubr.bf16.mxu0 0
        %763 = vmatmul.mubr.bf16.gmra.mrb[0].mxu0 %v591
        %v764 = vpop.f32.mrb[0].mxu0
        %v765 = vadd.f32 %v665, %v764
        %v766 = vpop.f32.mrb[0].mxu0
        %v767 = vpop.f32.mrb[0].mxu0
        %v768 = vadd.f32 %v665, %v767
        %v769 = vpop.f32.mrb[0].mxu0
        %770 = vmatprep.mubr.bf16.mxu0 0
        %771 = vmatmul.mubr.bf16.gmra.mrb[0].mxu0 %v592
        %v772 = vpop.f32.mrb[0].mxu0
        %v773 = vadd.f32 %v665, %v772
        %v774 = vpop.f32.mrb[0].mxu0
        %v775 = vpop.f32.mrb[0].mxu0
        %v776 = vadd.f32 %v665, %v775
        %v777 = vpop.f32.mrb[0].mxu0
        %778 = vdwg.mxu0
        %v779 = vpack.c.bf16 %v752, %v749
        %v780 = vpack.c.bf16 %v760, %v757
        %v781 = vpack.c.bf16 %v768, %v765
        %v782 = vpack.c.bf16 %v776, %v773
        %783 = vmatprep.subr.bf16.mxu0 0
        %784 = vmatpush1.bf16.msra.mxu0 %v698
        %785 = vmatprep.subr.bf16.mxu0 0
        %786 = vmatpush1.bf16.msra.mxu0 %v699
        %787 = vmatprep.subr.bf16.mxu0 0
        %788 = vmatpush1.bf16.msra.mxu0 %v700
        %789 = vmatprep.subr.bf16.mxu0 0
        %790 = vmatpush1.bf16.msra.mxu0 %v701
        %791 = vmatprep.subr.bf16.mxu0 0
        %792 = vmatpush1.bf16.msra.mxu0 %v702
        %793 = vmatprep.subr.bf16.mxu0 0
        %794 = vmatpush1.bf16.msra.mxu0 %v703
        %795 = vmatprep.subr.bf16.mxu0 0
        %796 = vmatpush1.bf16.msra.mxu0 %v704
        %797 = vmatprep.subr.bf16.mxu0 0
        %798 = vmatpush1.bf16.msra.mxu0 %v705
        %799 = vmatprep.subr.bf16.mxu0 0
        %800 = vmatpush1.bf16.msra.mxu0 0
        %801 = vmatprep.subr.bf16.mxu0 0
        %802 = vmatpush1.bf16.msra.mxu0 0
        %803 = vmatprep.subr.bf16.mxu0 0
        %804 = vmatpush1.bf16.msra.mxu0 0
        %805 = vmatprep.subr.bf16.mxu0 0
        %806 = vmatpush1.bf16.msra.mxu0 0
        %807 = vmatprep.subr.bf16.mxu0 0
        %808 = vmatpush1.bf16.msra.mxu0 0
        %809 = vmatprep.subr.bf16.mxu0 0
        %810 = vmatpush1.bf16.msra.mxu0 0
        %811 = vmatprep.subr.bf16.mxu0 0
        %812 = vmatpush1.bf16.msra.mxu0 0
        %813 = vmatprep.subr.bf16.mxu0 0
        %814 = vmatpush1.bf16.msra.mxu0 0
        %815 = vmatprep.mubr.bf16.mxu0 0
        %816 = vmatmul.mubr.bf16.gmra.mrb[0].mxu0 %v658
        %v817 = vpop.f32.mrb[0].mxu0
        %v818 = vadd.f32 %v665, %v817
        %v819 = vpop.f32.mrb[0].mxu0
        %v820 = vpop.f32.mrb[0].mxu0
        %v821 = vadd.f32 %v665, %v820
        %v822 = vpop.f32.mrb[0].mxu0
        %823 = vmatprep.mubr.bf16.mxu0 0
        %824 = vmatmul.mubr.bf16.gmra.mrb[0].mxu0 %v659
        %v825 = vpop.f32.mrb[0].mxu0
        %v826 = vadd.f32 %v665, %v825
        %v827 = vpop.f32.mrb[0].mxu0
        %v828 = vpop.f32.mrb[0].mxu0
        %v829 = vadd.f32 %v665, %v828
        %v830 = vpop.f32.mrb[0].mxu0
        %831 = vmatprep.mubr.bf16.mxu0 0
        %832 = vmatmul.mubr.bf16.gmra.mrb[0].mxu0 %v660
        %v833 = vpop.f32.mrb[0].mxu0
        %v834 = vadd.f32 %v665, %v833
        %v835 = vpop.f32.mrb[0].mxu0
        %v836 = vpop.f32.mrb[0].mxu0
        %v837 = vadd.f32 %v665, %v836
        %v838 = vpop.f32.mrb[0].mxu0
        %839 = vmatprep.mubr.bf16.mxu0 0
        %840 = vmatmul.mubr.bf16.gmra.mrb[0].mxu0 %v661
        %v841 = vpop.f32.mrb[0].mxu0
        %v842 = vadd.f32 %v665, %v841
        %v843 = vpop.f32.mrb[0].mxu0
        %v844 = vpop.f32.mrb[0].mxu0
        %v845 = vadd.f32 %v665, %v844
        %v846 = vpop.f32.mrb[0].mxu0
        %847 = vdwg.mxu0
        %v848 = vpack.c.bf16 %v821, %v818
        %v849 = vpack.c.bf16 %v829, %v826
        %v850 = vpack.c.bf16 %v837, %v834
        %v851 = vpack.c.bf16 %v845, %v842
        %v852 = vmax.bf16 %v779, 0
        %v853 = vmax.bf16 %v780, 0
        %v854 = vmax.bf16 %v781, 0
        %v855 = vmax.bf16 %v782, 0
        %v856 = vmax.bf16 %v848, 0
        %v857 = vmax.bf16 %v849, 0
        %v858 = vmax.bf16 %v850, 0
        %v859 = vmax.bf16 %v851, 0
        %860 = vmatprep.subr.bf16.mxu0 0
        %861 = vmatpush1.bf16.msra.mxu0 %v318
        %862 = vmatprep.subr.bf16.mxu0 0
        %863 = vmatpush1.bf16.msra.mxu0 %v319
        %864 = vmatprep.subr.bf16.mxu0 0
        %865 = vmatpush1.bf16.msra.mxu0 %v320
        %866 = vmatprep.subr.bf16.mxu0 0
        %867 = vmatpush1.bf16.msra.mxu0 %v321
        %868 = vmatprep.subr.bf16.mxu0 0
        %869 = vmatpush1.bf16.msra.mxu0 %v322
        %870 = vmatprep.subr.bf16.mxu0 0
        %871 = vmatpush1.bf16.msra.mxu0 %v323
        %872 = vmatprep.subr.bf16.mxu0 0
        %873 = vmatpush1.bf16.msra.mxu0 %v324
        %874 = vmatprep.subr.bf16.mxu0 0
        %875 = vmatpush1.bf16.msra.mxu0 %v325
        %876 = vmatprep.subr.bf16.mxu0 0
        %877 = vmatpush1.bf16.msra.mxu0 0
        %878 = vmatprep.subr.bf16.mxu0 0
        %879 = vmatpush1.bf16.msra.mxu0 0
        %880 = vmatprep.subr.bf16.mxu0 0
        %881 = vmatpush1.bf16.msra.mxu0 0
        %882 = vmatprep.subr.bf16.mxu0 0
        %883 = vmatpush1.bf16.msra.mxu0 0
        %884 = vmatprep.subr.bf16.mxu0 0
        %885 = vmatpush1.bf16.msra.mxu0 0
        %886 = vmatprep.subr.bf16.mxu0 0
        %887 = vmatpush1.bf16.msra.mxu0 0
        %888 = vmatprep.subr.bf16.mxu0 0
        %889 = vmatpush1.bf16.msra.mxu0 0
        %890 = vmatprep.subr.bf16.mxu0 0
        %891 = vmatpush1.bf16.msra.mxu0 0
        %892 = vmatprep.mubr.bf16.mxu0 0
        %893 = vmatmul.mubr.bf16.gmra.mrb[0].mxu0 %v852
        %v894 = vpop.f32.mrb[0].mxu0
        %v895 = vadd.f32 %v285, %v894
        %v896 = vpop.f32.mrb[0].mxu0
        %v897 = vpop.f32.mrb[0].mxu0
        %v898 = vadd.f32 %v285, %v897
        %v899 = vpop.f32.mrb[0].mxu0
        %900 = vmatprep.mubr.bf16.mxu0 0
        %901 = vmatmul.mubr.bf16.gmra.mrb[0].mxu0 %v853
        %v902 = vpop.f32.mrb[0].mxu0
        %v903 = vadd.f32 %v285, %v902
        %v904 = vpop.f32.mrb[0].mxu0
        %v905 = vpop.f32.mrb[0].mxu0
        %v906 = vadd.f32 %v285, %v905
        %v907 = vpop.f32.mrb[0].mxu0
        %908 = vmatprep.mubr.bf16.mxu0 0
        %909 = vmatmul.mubr.bf16.gmra.mrb[0].mxu0 %v854
        %v910 = vpop.f32.mrb[0].mxu0
        %v911 = vadd.f32 %v285, %v910
        %v912 = vpop.f32.mrb[0].mxu0
        %v913 = vpop.f32.mrb[0].mxu0
        %v914 = vadd.f32 %v285, %v913
        %v915 = vpop.f32.mrb[0].mxu0
        %916 = vmatprep.mubr.bf16.mxu0 0
        %917 = vmatmul.mubr.bf16.gmra.mrb[0].mxu0 %v855
        %v918 = vpop.f32.mrb[0].mxu0
        %v919 = vadd.f32 %v285, %v918
        %v920 = vpop.f32.mrb[0].mxu0
        %v921 = vpop.f32.mrb[0].mxu0
        %v922 = vadd.f32 %v285, %v921
        %v923 = vpop.f32.mrb[0].mxu0
        %924 = vdwg.mxu0
        %v925 = vpack.c.bf16 %v898, %v895
        %v926 = vpack.c.bf16 %v906, %v903
        %v927 = vpack.c.bf16 %v914, %v911
        %v928 = vpack.c.bf16 %v922, %v919
        %929 = vmatprep.subr.bf16.mxu0 0
        %930 = vmatpush1.bf16.msra.mxu0 %v318
        %931 = vmatprep.subr.bf16.mxu0 0
        %932 = vmatpush1.bf16.msra.mxu0 %v319
        %933 = vmatprep.subr.bf16.mxu0 0
        %934 = vmatpush1.bf16.msra.mxu0 %v320
        %935 = vmatprep.subr.bf16.mxu0 0
        %936 = vmatpush1.bf16.msra.mxu0 %v321
        %937 = vmatprep.subr.bf16.mxu0 0
        %938 = vmatpush1.bf16.msra.mxu0 %v322
        %939 = vmatprep.subr.bf16.mxu0 0
        %940 = vmatpush1.bf16.msra.mxu0 %v323
        %941 = vmatprep.subr.bf16.mxu0 0
        %942 = vmatpush1.bf16.msra.mxu0 %v324
        %943 = vmatprep.subr.bf16.mxu0 0
        %944 = vmatpush1.bf16.msra.mxu0 %v325
        %945 = vmatprep.subr.bf16.mxu0 0
        %946 = vmatpush1.bf16.msra.mxu0 0
        %947 = vmatprep.subr.bf16.mxu0 0
        %948 = vmatpush1.bf16.msra.mxu0 0
        %949 = vmatprep.subr.bf16.mxu0 0
        %950 = vmatpush1.bf16.msra.mxu0 0
        %951 = vmatprep.subr.bf16.mxu0 0
        %952 = vmatpush1.bf16.msra.mxu0 0
        %953 = vmatprep.subr.bf16.mxu0 0
        %954 = vmatpush1.bf16.msra.mxu0 0
        %955 = vmatprep.subr.bf16.mxu0 0
        %956 = vmatpush1.bf16.msra.mxu0 0
        %957 = vmatprep.subr.bf16.mxu0 0
        %958 = vmatpush1.bf16.msra.mxu0 0
        %959 = vmatprep.subr.bf16.mxu0 0
        %960 = vmatpush1.bf16.msra.mxu0 0
        %961 = vmatprep.mubr.bf16.mxu0 0
        %962 = vmatmul.mubr.bf16.gmra.mrb[0].mxu0 %v856
        %v963 = vpop.f32.mrb[0].mxu0
        %v964 = vadd.f32 %v285, %v963
        %v965 = vpop.f32.mrb[0].mxu0
        %v966 = vpop.f32.mrb[0].mxu0
        %v967 = vadd.f32 %v285, %v966
        %v968 = vpop.f32.mrb[0].mxu0
        %969 = vmatprep.mubr.bf16.mxu0 0
        %970 = vmatmul.mubr.bf16.gmra.mrb[0].mxu0 %v857
        %v971 = vpop.f32.mrb[0].mxu0
        %v972 = vadd.f32 %v285, %v971
        %v973 = vpop.f32.mrb[0].mxu0
        %v974 = vpop.f32.mrb[0].mxu0
        %v975 = vadd.f32 %v285, %v974
        %v976 = vpop.f32.mrb[0].mxu0
        %977 = vmatprep.mubr.bf16.mxu0 0
        %978 = vmatmul.mubr.bf16.gmra.mrb[0].mxu0 %v858
        %v979 = vpop.f32.mrb[0].mxu0
        %v980 = vadd.f32 %v285, %v979
        %v981 = vpop.f32.mrb[0].mxu0
        %v982 = vpop.f32.mrb[0].mxu0
        %v983 = vadd.f32 %v285, %v982
        %v984 = vpop.f32.mrb[0].mxu0
        %985 = vmatprep.mubr.bf16.mxu0 0
        %986 = vmatmul.mubr.bf16.gmra.mrb[0].mxu0 %v859
        %v987 = vpop.f32.mrb[0].mxu0
        %v988 = vadd.f32 %v285, %v987
        %v989 = vpop.f32.mrb[0].mxu0
        %v990 = vpop.f32.mrb[0].mxu0
        %v991 = vadd.f32 %v285, %v990
        %v992 = vpop.f32.mrb[0].mxu0
        %993 = vdwg.mxu0
        %v994 = vpack.c.bf16 %v967, %v964
        %v995 = vpack.c.bf16 %v975, %v972
        %v996 = vpack.c.bf16 %v983, %v980
        %v997 = vpack.c.bf16 %v991, %v988
        %998 = vmatprep.subr.bf16.mxu0 0
        %999 = vmatpush1.bf16.msra.mxu0 %v508
        %1000 = vmatprep.subr.bf16.mxu0 0
        %1001 = vmatpush1.bf16.msra.mxu0 %v509
        %1002 = vmatprep.subr.bf16.mxu0 0
        %1003 = vmatpush1.bf16.msra.mxu0 %v510
        %1004 = vmatprep.subr.bf16.mxu0 0
        %1005 = vmatpush1.bf16.msra.mxu0 %v511
        %1006 = vmatprep.subr.bf16.mxu0 0
        %1007 = vmatpush1.bf16.msra.mxu0 %v512
        %1008 = vmatprep.subr.bf16.mxu0 0
        %1009 = vmatpush1.bf16.msra.mxu0 %v513
        %1010 = vmatprep.subr.bf16.mxu0 0
        %1011 = vmatpush1.bf16.msra.mxu0 %v514
        %1012 = vmatprep.subr.bf16.mxu0 0
        %1013 = vmatpush1.bf16.msra.mxu0 %v515
        %1014 = vmatprep.subr.bf16.mxu0 0
        %1015 = vmatpush1.bf16.msra.mxu0 0
        %1016 = vmatprep.subr.bf16.mxu0 0
        %1017 = vmatpush1.bf16.msra.mxu0 0
        %1018 = vmatprep.subr.bf16.mxu0 0
        %1019 = vmatpush1.bf16.msra.mxu0 0
        %1020 = vmatprep.subr.bf16.mxu0 0
        %1021 = vmatpush1.bf16.msra.mxu0 0
        %1022 = vmatprep.subr.bf16.mxu0 0
        %1023 = vmatpush1.bf16.msra.mxu0 0
        %1024 = vmatprep.subr.bf16.mxu0 0
        %1025 = vmatpush1.bf16.msra.mxu0 0
        %1026 = vmatprep.subr.bf16.mxu0 0
        %1027 = vmatpush1.bf16.msra.mxu0 0
        %1028 = vmatprep.subr.bf16.mxu0 0
        %1029 = vmatpush1.bf16.msra.mxu0 0
        %1030 = vmatprep.mubr.bf16.mxu0 0
        %1031 = vmatmul.mubr.bf16.gmra.mrb[0].mxu0 %v925
        %v1032 = vpop.f32.mrb[0].mxu0
        %v1033 = vadd.f32 %v475, %v1032
        %v1034 = vpop.f32.mrb[0].mxu0
        %v1035 = vpop.f32.mrb[0].mxu0
        %v1036 = vadd.f32 %v475, %v1035
        %v1037 = vpop.f32.mrb[0].mxu0
        %1038 = vmatprep.mubr.bf16.mxu0 0
        %1039 = vmatmul.mubr.bf16.gmra.mrb[0].mxu0 %v926
        %v1040 = vpop.f32.mrb[0].mxu0
        %v1041 = vadd.f32 %v475, %v1040
        %v1042 = vpop.f32.mrb[0].mxu0
        %v1043 = vpop.f32.mrb[0].mxu0
        %v1044 = vadd.f32 %v475, %v1043
        %v1045 = vpop.f32.mrb[0].mxu0
        %1046 = vmatprep.mubr.bf16.mxu0 0
        %1047 = vmatmul.mubr.bf16.gmra.mrb[0].mxu0 %v927
        %v1048 = vpop.f32.mrb[0].mxu0
        %v1049 = vadd.f32 %v475, %v1048
        %v1050 = vpop.f32.mrb[0].mxu0
        %v1051 = vpop.f32.mrb[0].mxu0
        %v1052 = vadd.f32 %v475, %v1051
        %v1053 = vpop.f32.mrb[0].mxu0
        %1054 = vmatprep.mubr.bf16.mxu0 0
        %1055 = vmatmul.mubr.bf16.gmra.mrb[0].mxu0 %v928
        %v1056 = vpop.f32.mrb[0].mxu0
        %v1057 = vadd.f32 %v475, %v1056
        %v1058 = vpop.f32.mrb[0].mxu0
        %v1059 = vpop.f32.mrb[0].mxu0
        %v1060 = vadd.f32 %v475, %v1059
        %v1061 = vpop.f32.mrb[0].mxu0
        %1062 = vdwg.mxu0
        %v1063 = vpack.c.bf16 %v1036, %v1033
        %v1064 = vpack.c.bf16 %v1044, %v1041
        %v1065 = vpack.c.bf16 %v1052, %v1049
        %v1066 = vpack.c.bf16 %v1060, %v1057
        %1067 = vmatprep.subr.bf16.mxu0 0
        %1068 = vmatpush1.bf16.msra.mxu0 %v508
        %1069 = vmatprep.subr.bf16.mxu0 0
        %1070 = vmatpush1.bf16.msra.mxu0 %v509
        %1071 = vmatprep.subr.bf16.mxu0 0
        %1072 = vmatpush1.bf16.msra.mxu0 %v510
        %1073 = vmatprep.subr.bf16.mxu0 0
        %1074 = vmatpush1.bf16.msra.mxu0 %v511
        %1075 = vmatprep.subr.bf16.mxu0 0
        %1076 = vmatpush1.bf16.msra.mxu0 %v512
        %1077 = vmatprep.subr.bf16.mxu0 0
        %1078 = vmatpush1.bf16.msra.mxu0 %v513
        %1079 = vmatprep.subr.bf16.mxu0 0
        %1080 = vmatpush1.bf16.msra.mxu0 %v514
        %1081 = vmatprep.subr.bf16.mxu0 0
        %1082 = vmatpush1.bf16.msra.mxu0 %v515
        %1083 = vmatprep.subr.bf16.mxu0 0
        %1084 = vmatpush1.bf16.msra.mxu0 0
        %1085 = vmatprep.subr.bf16.mxu0 0
        %1086 = vmatpush1.bf16.msra.mxu0 0
        %1087 = vmatprep.subr.bf16.mxu0 0
        %1088 = vmatpush1.bf16.msra.mxu0 0
        %1089 = vmatprep.subr.bf16.mxu0 0
        %1090 = vmatpush1.bf16.msra.mxu0 0
        %1091 = vmatprep.subr.bf16.mxu0 0
        %1092 = vmatpush1.bf16.msra.mxu0 0
        %1093 = vmatprep.subr.bf16.mxu0 0
        %1094 = vmatpush1.bf16.msra.mxu0 0
        %1095 = vmatprep.subr.bf16.mxu0 0
        %1096 = vmatpush1.bf16.msra.mxu0 0
        %1097 = vmatprep.subr.bf16.mxu0 0
        %1098 = vmatpush1.bf16.msra.mxu0 0
        %1099 = vmatprep.mubr.bf16.mxu0 0
        %1100 = vmatmul.mubr.bf16.gmra.mrb[0].mxu0 %v994
        %v1101 = vpop.f32.mrb[0].mxu0
        %v1102 = vadd.f32 %v475, %v1101
        %v1103 = vpop.f32.mrb[0].mxu0
        %v1104 = vpop.f32.mrb[0].mxu0
        %v1105 = vadd.f32 %v475, %v1104
        %v1106 = vpop.f32.mrb[0].mxu0
        %1107 = vmatprep.mubr.bf16.mxu0 0
        %1108 = vmatmul.mubr.bf16.gmra.mrb[0].mxu0 %v995
        %v1109 = vpop.f32.mrb[0].mxu0
        %v1110 = vadd.f32 %v475, %v1109
        %v1111 = vpop.f32.mrb[0].mxu0
        %v1112 = vpop.f32.mrb[0].mxu0
        %v1113 = vadd.f32 %v475, %v1112
        %v1114 = vpop.f32.mrb[0].mxu0
        %1115 = vmatprep.mubr.bf16.mxu0 0
        %1116 = vmatmul.mubr.bf16.gmra.mrb[0].mxu0 %v996
        %v1117 = vpop.f32.mrb[0].mxu0
        %v1118 = vadd.f32 %v475, %v1117
        %v1119 = vpop.f32.mrb[0].mxu0
        %v1120 = vpop.f32.mrb[0].mxu0
        %v1121 = vadd.f32 %v475, %v1120
        %v1122 = vpop.f32.mrb[0].mxu0
        %1123 = vmatprep.mubr.bf16.mxu0 0
        %1124 = vmatmul.mubr.bf16.gmra.mrb[0].mxu0 %v997
        %v1125 = vpop.f32.mrb[0].mxu0
        %v1126 = vadd.f32 %v475, %v1125
        %v1127 = vpop.f32.mrb[0].mxu0
        %v1128 = vpop.f32.mrb[0].mxu0
        %v1129 = vadd.f32 %v475, %v1128
        %v1130 = vpop.f32.mrb[0].mxu0
        %1131 = vdwg.mxu0
        %v1132 = vpack.c.bf16 %v1105, %v1102
        %v1133 = vpack.c.bf16 %v1113, %v1110
        %v1134 = vpack.c.bf16 %v1121, %v1118
        %v1135 = vpack.c.bf16 %v1129, %v1126
        %1136 = vmatprep.subr.bf16.mxu0 0
        %1137 = vmatpush1.bf16.msra.mxu0 %v698
        %1138 = vmatprep.subr.bf16.mxu0 0
        %1139 = vmatpush1.bf16.msra.mxu0 %v699
        %1140 = vmatprep.subr.bf16.mxu0 0
        %1141 = vmatpush1.bf16.msra.mxu0 %v700
        %1142 = vmatprep.subr.bf16.mxu0 0
        %1143 = vmatpush1.bf16.msra.mxu0 %v701
        %1144 = vmatprep.subr.bf16.mxu0 0
        %1145 = vmatpush1.bf16.msra.mxu0 %v702
        %1146 = vmatprep.subr.bf16.mxu0 0
        %1147 = vmatpush1.bf16.msra.mxu0 %v703
        %1148 = vmatprep.subr.bf16.mxu0 0
        %1149 = vmatpush1.bf16.msra.mxu0 %v704
        %1150 = vmatprep.subr.bf16.mxu0 0
        %1151 = vmatpush1.bf16.msra.mxu0 %v705
        %1152 = vmatprep.subr.bf16.mxu0 0
        %1153 = vmatpush1.bf16.msra.mxu0 0
        %1154 = vmatprep.subr.bf16.mxu0 0
        %1155 = vmatpush1.bf16.msra.mxu0 0
        %1156 = vmatprep.subr.bf16.mxu0 0
        %1157 = vmatpush1.bf16.msra.mxu0 0
        %1158 = vmatprep.subr.bf16.mxu0 0
        %1159 = vmatpush1.bf16.msra.mxu0 0
        %1160 = vmatprep.subr.bf16.mxu0 0
        %1161 = vmatpush1.bf16.msra.mxu0 0
        %1162 = vmatprep.subr.bf16.mxu0 0
        %1163 = vmatpush1.bf16.msra.mxu0 0
        %1164 = vmatprep.subr.bf16.mxu0 0
        %1165 = vmatpush1.bf16.msra.mxu0 0
        %1166 = vmatprep.subr.bf16.mxu0 0
        %1167 = vmatpush1.bf16.msra.mxu0 0
        %1168 = vmatprep.mubr.bf16.mxu0 0
        %1169 = vmatmul.mubr.bf16.gmra.mrb[0].mxu0 %v1063
        %v1170 = vpop.f32.mrb[0].mxu0
        %v1171 = vadd.f32 %v665, %v1170
        %v1172 = vpop.f32.mrb[0].mxu0
        %v1173 = vpop.f32.mrb[0].mxu0
        %v1174 = vadd.f32 %v665, %v1173
        %v1175 = vpop.f32.mrb[0].mxu0
        %1176 = vmatprep.mubr.bf16.mxu0 0
        %1177 = vmatmul.mubr.bf16.gmra.mrb[0].mxu0 %v1064
        %v1178 = vpop.f32.mrb[0].mxu0
        %v1179 = vadd.f32 %v665, %v1178
        %v1180 = vpop.f32.mrb[0].mxu0
        %v1181 = vpop.f32.mrb[0].mxu0
        %v1182 = vadd.f32 %v665, %v1181
        %v1183 = vpop.f32.mrb[0].mxu0
        %1184 = vmatprep.mubr.bf16.mxu0 0
        %1185 = vmatmul.mubr.bf16.gmra.mrb[0].mxu0 %v1065
        %v1186 = vpop.f32.mrb[0].mxu0
        %v1187 = vadd.f32 %v665, %v1186
        %v1188 = vpop.f32.mrb[0].mxu0
        %v1189 = vpop.f32.mrb[0].mxu0
        %v1190 = vadd.f32 %v665, %v1189
        %v1191 = vpop.f32.mrb[0].mxu0
        %1192 = vmatprep.mubr.bf16.mxu0 0
        %1193 = vmatmul.mubr.bf16.gmra.mrb[0].mxu0 %v1066
        %v1194 = vpop.f32.mrb[0].mxu0
        %v1195 = vadd.f32 %v665, %v1194
        %v1196 = vpop.f32.mrb[0].mxu0
        %v1197 = vpop.f32.mrb[0].mxu0
        %v1198 = vadd.f32 %v665, %v1197
        %v1199 = vpop.f32.mrb[0].mxu0
        %1200 = vdwg.mxu0
        %v1201 = vpack.c.bf16 %v1174, %v1171
        %v1202 = vpack.c.bf16 %v1182, %v1179
        %v1203 = vpack.c.bf16 %v1190, %v1187
        %v1204 = vpack.c.bf16 %v1198, %v1195
        %1205 = vmatprep.subr.bf16.mxu0 0
        %1206 = vmatpush1.bf16.msra.mxu0 %v698
        %1207 = vmatprep.subr.bf16.mxu0 0
        %1208 = vmatpush1.bf16.msra.mxu0 %v699
        %1209 = vmatprep.subr.bf16.mxu0 0
        %1210 = vmatpush1.bf16.msra.mxu0 %v700
        %1211 = vmatprep.subr.bf16.mxu0 0
        %1212 = vmatpush1.bf16.msra.mxu0 %v701
        %1213 = vmatprep.subr.bf16.mxu0 0
        %1214 = vmatpush1.bf16.msra.mxu0 %v702
        %1215 = vmatprep.subr.bf16.mxu0 0
        %1216 = vmatpush1.bf16.msra.mxu0 %v703
        %1217 = vmatprep.subr.bf16.mxu0 0
        %1218 = vmatpush1.bf16.msra.mxu0 %v704
        %1219 = vmatprep.subr.bf16.mxu0 0
        %1220 = vmatpush1.bf16.msra.mxu0 %v705
        %1221 = vmatprep.subr.bf16.mxu0 0
        %1222 = vmatpush1.bf16.msra.mxu0 0
        %1223 = vmatprep.subr.bf16.mxu0 0
        %1224 = vmatpush1.bf16.msra.mxu0 0
        %1225 = vmatprep.subr.bf16.mxu0 0
        %1226 = vmatpush1.bf16.msra.mxu0 0
        %1227 = vmatprep.subr.bf16.mxu0 0
        %1228 = vmatpush1.bf16.msra.mxu0 0
        %1229 = vmatprep.subr.bf16.mxu0 0
        %1230 = vmatpush1.bf16.msra.mxu0 0
        %1231 = vmatprep.subr.bf16.mxu0 0
        %1232 = vmatpush1.bf16.msra.mxu0 0
        %1233 = vmatprep.subr.bf16.mxu0 0
        %1234 = vmatpush1.bf16.msra.mxu0 0
        %1235 = vmatprep.subr.bf16.mxu0 0
        %1236 = vmatpush1.bf16.msra.mxu0 0
        %1237 = vmatprep.mubr.bf16.mxu0 0
        %1238 = vmatmul.mubr.bf16.gmra.mrb[0].mxu0 %v1132
        %v1239 = vpop.f32.mrb[0].mxu0
        %v1240 = vadd.f32 %v665, %v1239
        %v1241 = vpop.f32.mrb[0].mxu0
        %v1242 = vpop.f32.mrb[0].mxu0
        %v1243 = vadd.f32 %v665, %v1242
        %v1244 = vpop.f32.mrb[0].mxu0
        %1245 = vmatprep.mubr.bf16.mxu0 0
        %1246 = vmatmul.mubr.bf16.gmra.mrb[0].mxu0 %v1133
        %v1247 = vpop.f32.mrb[0].mxu0
        %v1248 = vadd.f32 %v665, %v1247
        %v1249 = vpop.f32.mrb[0].mxu0
        %v1250 = vpop.f32.mrb[0].mxu0
        %v1251 = vadd.f32 %v665, %v1250
        %v1252 = vpop.f32.mrb[0].mxu0
        %1253 = vmatprep.mubr.bf16.mxu0 0
        %1254 = vmatmul.mubr.bf16.gmra.mrb[0].mxu0 %v1134
        %v1255 = vpop.f32.mrb[0].mxu0
        %v1256 = vadd.f32 %v665, %v1255
        %v1257 = vpop.f32.mrb[0].mxu0
        %v1258 = vpop.f32.mrb[0].mxu0
        %v1259 = vadd.f32 %v665, %v1258
        %v1260 = vpop.f32.mrb[0].mxu0
        %1261 = vmatprep.mubr.bf16.mxu0 0
        %1262 = vmatmul.mubr.bf16.gmra.mrb[0].mxu0 %v1135
        %v1263 = vpop.f32.mrb[0].mxu0
        %v1264 = vadd.f32 %v665, %v1263
        %v1265 = vpop.f32.mrb[0].mxu0
        %v1266 = vpop.f32.mrb[0].mxu0
        %v1267 = vadd.f32 %v665, %v1266
        %v1268 = vpop.f32.mrb[0].mxu0
        %1269 = vdwg.mxu0
        %v1270 = vpack.c.bf16 %v1243, %v1240
        %v1271 = vpack.c.bf16 %v1251, %v1248
        %v1272 = vpack.c.bf16 %v1259, %v1256
        %v1273 = vpack.c.bf16 %v1267, %v1264
        %v1274 = vmax.bf16 %v1201, 0
        %v1275 = vmax.bf16 %v1202, 0
        %v1276 = vmax.bf16 %v1203, 0
        %v1277 = vmax.bf16 %v1204, 0
        %v1278 = vmax.bf16 %v1270, 0
        %v1279 = vmax.bf16 %v1271, 0
        %v1280 = vmax.bf16 %v1272, 0
        %v1281 = vmax.bf16 %v1273, 0
        %1282 = vmatprep.subr.bf16.mxu0 0
        %1283 = vmatpush1.bf16.msra.mxu0 %v318
        %1284 = vmatprep.subr.bf16.mxu0 0
        %1285 = vmatpush1.bf16.msra.mxu0 %v319
        %1286 = vmatprep.subr.bf16.mxu0 0
        %1287 = vmatpush1.bf16.msra.mxu0 %v320
        %1288 = vmatprep.subr.bf16.mxu0 0
        %1289 = vmatpush1.bf16.msra.mxu0 %v321
        %1290 = vmatprep.subr.bf16.mxu0 0
        %1291 = vmatpush1.bf16.msra.mxu0 %v322
        %1292 = vmatprep.subr.bf16.mxu0 0
        %1293 = vmatpush1.bf16.msra.mxu0 %v323
        %1294 = vmatprep.subr.bf16.mxu0 0
        %1295 = vmatpush1.bf16.msra.mxu0 %v324
        %1296 = vmatprep.subr.bf16.mxu0 0
        %1297 = vmatpush1.bf16.msra.mxu0 %v325
        %1298 = vmatprep.subr.bf16.mxu0 0
        %1299 = vmatpush1.bf16.msra.mxu0 0
        %1300 = vmatprep.subr.bf16.mxu0 0
        %1301 = vmatpush1.bf16.msra.mxu0 0
        %1302 = vmatprep.subr.bf16.mxu0 0
        %1303 = vmatpush1.bf16.msra.mxu0 0
        %1304 = vmatprep.subr.bf16.mxu0 0
        %1305 = vmatpush1.bf16.msra.mxu0 0
        %1306 = vmatprep.subr.bf16.mxu0 0
        %1307 = vmatpush1.bf16.msra.mxu0 0
        %1308 = vmatprep.subr.bf16.mxu0 0
        %1309 = vmatpush1.bf16.msra.mxu0 0
        %1310 = vmatprep.subr.bf16.mxu0 0
        %1311 = vmatpush1.bf16.msra.mxu0 0
        %1312 = vmatprep.subr.bf16.mxu0 0
        %1313 = vmatpush1.bf16.msra.mxu0 0
        %1314 = vmatprep.mubr.bf16.mxu0 0
        %1315 = vmatmul.mubr.bf16.gmra.mrb[0].mxu0 %v1274
        %v1316 = vpop.f32.mrb[0].mxu0
        %v1317 = vadd.f32 %v285, %v1316
        %v1318 = vpop.f32.mrb[0].mxu0
        %v1319 = vpop.f32.mrb[0].mxu0
        %v1320 = vadd.f32 %v285, %v1319
        %v1321 = vpop.f32.mrb[0].mxu0
        %1322 = vmatprep.mubr.bf16.mxu0 0
        %1323 = vmatmul.mubr.bf16.gmra.mrb[0].mxu0 %v1275
        %v1324 = vpop.f32.mrb[0].mxu0
        %v1325 = vadd.f32 %v285, %v1324
        %v1326 = vpop.f32.mrb[0].mxu0
        %v1327 = vpop.f32.mrb[0].mxu0
        %v1328 = vadd.f32 %v285, %v1327
        %v1329 = vpop.f32.mrb[0].mxu0
        %1330 = vmatprep.mubr.bf16.mxu0 0
        %1331 = vmatmul.mubr.bf16.gmra.mrb[0].mxu0 %v1276
        %v1332 = vpop.f32.mrb[0].mxu0
        %v1333 = vadd.f32 %v285, %v1332
        %v1334 = vpop.f32.mrb[0].mxu0
        %v1335 = vpop.f32.mrb[0].mxu0
        %v1336 = vadd.f32 %v285, %v1335
        %v1337 = vpop.f32.mrb[0].mxu0
        %1338 = vmatprep.mubr.bf16.mxu0 0
        %1339 = vmatmul.mubr.bf16.gmra.mrb[0].mxu0 %v1277
        %v1340 = vpop.f32.mrb[0].mxu0
        %v1341 = vadd.f32 %v285, %v1340
        %v1342 = vpop.f32.mrb[0].mxu0
        %v1343 = vpop.f32.mrb[0].mxu0
        %v1344 = vadd.f32 %v285, %v1343
        %v1345 = vpop.f32.mrb[0].mxu0
        %1346 = vdwg.mxu0
        %v1347 = vpack.c.bf16 %v1320, %v1317
        %v1348 = vpack.c.bf16 %v1328, %v1325
        %v1349 = vpack.c.bf16 %v1336, %v1333
        %v1350 = vpack.c.bf16 %v1344, %v1341
        %1351 = vmatprep.subr.bf16.mxu0 0
        %1352 = vmatpush1.bf16.msra.mxu0 %v318
        %1353 = vmatprep.subr.bf16.mxu0 0
        %1354 = vmatpush1.bf16.msra.mxu0 %v319
        %1355 = vmatprep.subr.bf16.mxu0 0
        %1356 = vmatpush1.bf16.msra.mxu0 %v320
        %1357 = vmatprep.subr.bf16.mxu0 0
        %1358 = vmatpush1.bf16.msra.mxu0 %v321
        %1359 = vmatprep.subr.bf16.mxu0 0
        %1360 = vmatpush1.bf16.msra.mxu0 %v322
        %1361 = vmatprep.subr.bf16.mxu0 0
        %1362 = vmatpush1.bf16.msra.mxu0 %v323
        %1363 = vmatprep.subr.bf16.mxu0 0
        %1364 = vmatpush1.bf16.msra.mxu0 %v324
        %1365 = vmatprep.subr.bf16.mxu0 0
        %1366 = vmatpush1.bf16.msra.mxu0 %v325
        %1367 = vmatprep.subr.bf16.mxu0 0
        %1368 = vmatpush1.bf16.msra.mxu0 0
        %1369 = vmatprep.subr.bf16.mxu0 0
        %1370 = vmatpush1.bf16.msra.mxu0 0
        %1371 = vmatprep.subr.bf16.mxu0 0
        %1372 = vmatpush1.bf16.msra.mxu0 0
        %1373 = vmatprep.subr.bf16.mxu0 0
        %1374 = vmatpush1.bf16.msra.mxu0 0
        %1375 = vmatprep.subr.bf16.mxu0 0
        %1376 = vmatpush1.bf16.msra.mxu0 0
        %1377 = vmatprep.subr.bf16.mxu0 0
        %1378 = vmatpush1.bf16.msra.mxu0 0
        %1379 = vmatprep.subr.bf16.mxu0 0
        %1380 = vmatpush1.bf16.msra.mxu0 0
        %1381 = vmatprep.subr.bf16.mxu0 0
        %1382 = vmatpush1.bf16.msra.mxu0 0
        %1383 = vmatprep.mubr.bf16.mxu0 0
        %1384 = vmatmul.mubr.bf16.gmra.mrb[0].mxu0 %v1278
        %v1385 = vpop.f32.mrb[0].mxu0
        %v1386 = vadd.f32 %v285, %v1385
        %v1387 = vpop.f32.mrb[0].mxu0
        %v1388 = vpop.f32.mrb[0].mxu0
        %v1389 = vadd.f32 %v285, %v1388
        %v1390 = vpop.f32.mrb[0].mxu0
        %1391 = vmatprep.mubr.bf16.mxu0 0
        %1392 = vmatmul.mubr.bf16.gmra.mrb[0].mxu0 %v1279
        %v1393 = vpop.f32.mrb[0].mxu0
        %v1394 = vadd.f32 %v285, %v1393
        %v1395 = vpop.f32.mrb[0].mxu0
        %v1396 = vpop.f32.mrb[0].mxu0
        %v1397 = vadd.f32 %v285, %v1396
        %v1398 = vpop.f32.mrb[0].mxu0
        %1399 = vmatprep.mubr.bf16.mxu0 0
        %1400 = vmatmul.mubr.bf16.gmra.mrb[0].mxu0 %v1280
        %v1401 = vpop.f32.mrb[0].mxu0
        %v1402 = vadd.f32 %v285, %v1401
        %v1403 = vpop.f32.mrb[0].mxu0
        %v1404 = vpop.f32.mrb[0].mxu0
        %v1405 = vadd.f32 %v285, %v1404
        %v1406 = vpop.f32.mrb[0].mxu0
        %1407 = vmatprep.mubr.bf16.mxu0 0
        %1408 = vmatmul.mubr.bf16.gmra.mrb[0].mxu0 %v1281
        %v1409 = vpop.f32.mrb[0].mxu0
        %v1410 = vadd.f32 %v285, %v1409
        %v1411 = vpop.f32.mrb[0].mxu0
        %v1412 = vpop.f32.mrb[0].mxu0
        %v1413 = vadd.f32 %v285, %v1412
        %v1414 = vpop.f32.mrb[0].mxu0
        %1415 = vdwg.mxu0
        %v1416 = vpack.c.bf16 %v1389, %v1386
        %v1417 = vpack.c.bf16 %v1397, %v1394
        %v1418 = vpack.c.bf16 %v1405, %v1402
        %v1419 = vpack.c.bf16 %v1413, %v1410
        %1420 = vmatprep.subr.bf16.mxu0 0
        %1421 = vmatpush1.bf16.msra.mxu0 %v508
        %1422 = vmatprep.subr.bf16.mxu0 0
        %1423 = vmatpush1.bf16.msra.mxu0 %v509
        %1424 = vmatprep.subr.bf16.mxu0 0
        %1425 = vmatpush1.bf16.msra.mxu0 %v510
        %1426 = vmatprep.subr.bf16.mxu0 0
        %1427 = vmatpush1.bf16.msra.mxu0 %v511
        %1428 = vmatprep.subr.bf16.mxu0 0
        %1429 = vmatpush1.bf16.msra.mxu0 %v512
        %1430 = vmatprep.subr.bf16.mxu0 0
        %1431 = vmatpush1.bf16.msra.mxu0 %v513
        %1432 = vmatprep.subr.bf16.mxu0 0
        %1433 = vmatpush1.bf16.msra.mxu0 %v514
        %1434 = vmatprep.subr.bf16.mxu0 0
        %1435 = vmatpush1.bf16.msra.mxu0 %v515
        %1436 = vmatprep.subr.bf16.mxu0 0
        %1437 = vmatpush1.bf16.msra.mxu0 0
        %1438 = vmatprep.subr.bf16.mxu0 0
        %1439 = vmatpush1.bf16.msra.mxu0 0
        %1440 = vmatprep.subr.bf16.mxu0 0
        %1441 = vmatpush1.bf16.msra.mxu0 0
        %1442 = vmatprep.subr.bf16.mxu0 0
        %1443 = vmatpush1.bf16.msra.mxu0 0
        %1444 = vmatprep.subr.bf16.mxu0 0
        %1445 = vmatpush1.bf16.msra.mxu0 0
        %1446 = vmatprep.subr.bf16.mxu0 0
        %1447 = vmatpush1.bf16.msra.mxu0 0
        %1448 = vmatprep.subr.bf16.mxu0 0
        %1449 = vmatpush1.bf16.msra.mxu0 0
        %1450 = vmatprep.subr.bf16.mxu0 0
        %1451 = vmatpush1.bf16.msra.mxu0 0
        %1452 = vmatprep.mubr.bf16.mxu0 0
        %1453 = vmatmul.mubr.bf16.gmra.mrb[0].mxu0 %v1347
        %v1454 = vpop.f32.mrb[0].mxu0
        %v1455 = vadd.f32 %v475, %v1454
        %v1456 = vpop.f32.mrb[0].mxu0
        %v1457 = vpop.f32.mrb[0].mxu0
        %v1458 = vadd.f32 %v475, %v1457
        %v1459 = vpop.f32.mrb[0].mxu0
        %1460 = vmatprep.mubr.bf16.mxu0 0
        %1461 = vmatmul.mubr.bf16.gmra.mrb[0].mxu0 %v1348
        %v1462 = vpop.f32.mrb[0].mxu0
        %v1463 = vadd.f32 %v475, %v1462
        %v1464 = vpop.f32.mrb[0].mxu0
        %v1465 = vpop.f32.mrb[0].mxu0
        %v1466 = vadd.f32 %v475, %v1465
        %v1467 = vpop.f32.mrb[0].mxu0
        %1468 = vmatprep.mubr.bf16.mxu0 0
        %1469 = vmatmul.mubr.bf16.gmra.mrb[0].mxu0 %v1349
        %v1470 = vpop.f32.mrb[0].mxu0
        %v1471 = vadd.f32 %v475, %v1470
        %v1472 = vpop.f32.mrb[0].mxu0
        %v1473 = vpop.f32.mrb[0].mxu0
        %v1474 = vadd.f32 %v475, %v1473
        %v1475 = vpop.f32.mrb[0].mxu0
        %1476 = vmatprep.mubr.bf16.mxu0 0
        %1477 = vmatmul.mubr.bf16.gmra.mrb[0].mxu0 %v1350
        %v1478 = vpop.f32.mrb[0].mxu0
        %v1479 = vadd.f32 %v475, %v1478
        %v1480 = vpop.f32.mrb[0].mxu0
        %v1481 = vpop.f32.mrb[0].mxu0
        %v1482 = vadd.f32 %v475, %v1481
        %v1483 = vpop.f32.mrb[0].mxu0
        %1484 = vdwg.mxu0
        %v1485 = vpack.c.bf16 %v1458, %v1455
        %v1486 = vpack.c.bf16 %v1466, %v1463
        %v1487 = vpack.c.bf16 %v1474, %v1471
        %v1488 = vpack.c.bf16 %v1482, %v1479
        %1489 = vmatprep.subr.bf16.mxu0 0
        %1490 = vmatpush1.bf16.msra.mxu0 %v508
        %1491 = vmatprep.subr.bf16.mxu0 0
        %1492 = vmatpush1.bf16.msra.mxu0 %v509
        %1493 = vmatprep.subr.bf16.mxu0 0
        %1494 = vmatpush1.bf16.msra.mxu0 %v510
        %1495 = vmatprep.subr.bf16.mxu0 0
        %1496 = vmatpush1.bf16.msra.mxu0 %v511
        %1497 = vmatprep.subr.bf16.mxu0 0
        %1498 = vmatpush1.bf16.msra.mxu0 %v512
        %1499 = vmatprep.subr.bf16.mxu0 0
        %1500 = vmatpush1.bf16.msra.mxu0 %v513
        %1501 = vmatprep.subr.bf16.mxu0 0
        %1502 = vmatpush1.bf16.msra.mxu0 %v514
        %1503 = vmatprep.subr.bf16.mxu0 0
        %1504 = vmatpush1.bf16.msra.mxu0 %v515
        %1505 = vmatprep.subr.bf16.mxu0 0
        %1506 = vmatpush1.bf16.msra.mxu0 0
        %1507 = vmatprep.subr.bf16.mxu0 0
        %1508 = vmatpush1.bf16.msra.mxu0 0
        %1509 = vmatprep.subr.bf16.mxu0 0
        %1510 = vmatpush1.bf16.msra.mxu0 0
        %1511 = vmatprep.subr.bf16.mxu0 0
        %1512 = vmatpush1.bf16.msra.mxu0 0
        %1513 = vmatprep.subr.bf16.mxu0 0
        %1514 = vmatpush1.bf16.msra.mxu0 0
        %1515 = vmatprep.subr.bf16.mxu0 0
        %1516 = vmatpush1.bf16.msra.mxu0 0
        %1517 = vmatprep.subr.bf16.mxu0 0
        %1518 = vmatpush1.bf16.msra.mxu0 0
        %1519 = vmatprep.subr.bf16.mxu0 0
        %1520 = vmatpush1.bf16.msra.mxu0 0
        %1521 = vmatprep.mubr.bf16.mxu0 0
        %1522 = vmatmul.mubr.bf16.gmra.mrb[0].mxu0 %v1416
        %v1523 = vpop.f32.mrb[0].mxu0
        %v1524 = vadd.f32 %v475, %v1523
        %v1525 = vpop.f32.mrb[0].mxu0
        %v1526 = vpop.f32.mrb[0].mxu0
        %v1527 = vadd.f32 %v475, %v1526
        %v1528 = vpop.f32.mrb[0].mxu0
        %1529 = vmatprep.mubr.bf16.mxu0 0
        %1530 = vmatmul.mubr.bf16.gmra.mrb[0].mxu0 %v1417
        %v1531 = vpop.f32.mrb[0].mxu0
        %v1532 = vadd.f32 %v475, %v1531
        %v1533 = vpop.f32.mrb[0].mxu0
        %v1534 = vpop.f32.mrb[0].mxu0
        %v1535 = vadd.f32 %v475, %v1534
        %v1536 = vpop.f32.mrb[0].mxu0
        %1537 = vmatprep.mubr.bf16.mxu0 0
        %1538 = vmatmul.mubr.bf16.gmra.mrb[0].mxu0 %v1418
        %v1539 = vpop.f32.mrb[0].mxu0
        %v1540 = vadd.f32 %v475, %v1539
        %v1541 = vpop.f32.mrb[0].mxu0
        %v1542 = vpop.f32.mrb[0].mxu0
        %v1543 = vadd.f32 %v475, %v1542
        %v1544 = vpop.f32.mrb[0].mxu0
        %1545 = vmatprep.mubr.bf16.mxu0 0
        %1546 = vmatmul.mubr.bf16.gmra.mrb[0].mxu0 %v1419
        %v1547 = vpop.f32.mrb[0].mxu0
        %v1548 = vadd.f32 %v475, %v1547
        %v1549 = vpop.f32.mrb[0].mxu0
        %v1550 = vpop.f32.mrb[0].mxu0
        %v1551 = vadd.f32 %v475, %v1550
        %v1552 = vpop.f32.mrb[0].mxu0
        %1553 = vdwg.mxu0
        %v1554 = vpack.c.bf16 %v1527, %v1524
        %v1555 = vpack.c.bf16 %v1535, %v1532
        %v1556 = vpack.c.bf16 %v1543, %v1540
        %v1557 = vpack.c.bf16 %v1551, %v1548
        %1558 = vmatprep.subr.bf16.mxu0 0
        %1559 = vmatpush1.bf16.msra.mxu0 %v698
        %1560 = vmatprep.subr.bf16.mxu0 0
        %1561 = vmatpush1.bf16.msra.mxu0 %v699
        %1562 = vmatprep.subr.bf16.mxu0 0
        %1563 = vmatpush1.bf16.msra.mxu0 %v700
        %1564 = vmatprep.subr.bf16.mxu0 0
        %1565 = vmatpush1.bf16.msra.mxu0 %v701
        %1566 = vmatprep.subr.bf16.mxu0 0
        %1567 = vmatpush1.bf16.msra.mxu0 %v702
        %1568 = vmatprep.subr.bf16.mxu0 0
        %1569 = vmatpush1.bf16.msra.mxu0 %v703
        %1570 = vmatprep.subr.bf16.mxu0 0
        %1571 = vmatpush1.bf16.msra.mxu0 %v704
        %1572 = vmatprep.subr.bf16.mxu0 0
        %1573 = vmatpush1.bf16.msra.mxu0 %v705
        %1574 = vmatprep.subr.bf16.mxu0 0
        %1575 = vmatpush1.bf16.msra.mxu0 0
        %1576 = vmatprep.subr.bf16.mxu0 0
        %1577 = vmatpush1.bf16.msra.mxu0 0
        %1578 = vmatprep.subr.bf16.mxu0 0
        %1579 = vmatpush1.bf16.msra.mxu0 0
        %1580 = vmatprep.subr.bf16.mxu0 0
        %1581 = vmatpush1.bf16.msra.mxu0 0
        %1582 = vmatprep.subr.bf16.mxu0 0
        %1583 = vmatpush1.bf16.msra.mxu0 0
        %1584 = vmatprep.subr.bf16.mxu0 0
        %1585 = vmatpush1.bf16.msra.mxu0 0
        %1586 = vmatprep.subr.bf16.mxu0 0
        %1587 = vmatpush1.bf16.msra.mxu0 0
        %1588 = vmatprep.subr.bf16.mxu0 0
        %1589 = vmatpush1.bf16.msra.mxu0 0
        %1590 = vmatprep.mubr.bf16.mxu0 0
        %1591 = vmatmul.mubr.bf16.gmra.mrb[0].mxu0 %v1485
        %v1592 = vpop.f32.mrb[0].mxu0
        %v1593 = vadd.f32 %v665, %v1592
        %v1594 = vpop.f32.mrb[0].mxu0
        %v1595 = vpop.f32.mrb[0].mxu0
        %v1596 = vadd.f32 %v665, %v1595
        %v1597 = vpop.f32.mrb[0].mxu0
        %1598 = vmatprep.mubr.bf16.mxu0 0
        %1599 = vmatmul.mubr.bf16.gmra.mrb[0].mxu0 %v1486
        %v1600 = vpop.f32.mrb[0].mxu0
        %v1601 = vadd.f32 %v665, %v1600
        %v1602 = vpop.f32.mrb[0].mxu0
        %v1603 = vpop.f32.mrb[0].mxu0
        %v1604 = vadd.f32 %v665, %v1603
        %v1605 = vpop.f32.mrb[0].mxu0
        %1606 = vmatprep.mubr.bf16.mxu0 0
        %1607 = vmatmul.mubr.bf16.gmra.mrb[0].mxu0 %v1487
        %v1608 = vpop.f32.mrb[0].mxu0
        %v1609 = vadd.f32 %v665, %v1608
        %v1610 = vpop.f32.mrb[0].mxu0
        %v1611 = vpop.f32.mrb[0].mxu0
        %v1612 = vadd.f32 %v665, %v1611
        %v1613 = vpop.f32.mrb[0].mxu0
        %1614 = vmatprep.mubr.bf16.mxu0 0
        %1615 = vmatmul.mubr.bf16.gmra.mrb[0].mxu0 %v1488
        %v1616 = vpop.f32.mrb[0].mxu0
        %v1617 = vadd.f32 %v665, %v1616
        %v1618 = vpop.f32.mrb[0].mxu0
        %v1619 = vpop.f32.mrb[0].mxu0
        %v1620 = vadd.f32 %v665, %v1619
        %v1621 = vpop.f32.mrb[0].mxu0
        %1622 = vdwg.mxu0
        %v1623 = vpack.c.bf16 %v1596, %v1593
        %v1624 = vpack.c.bf16 %v1604, %v1601
        %v1625 = vpack.c.bf16 %v1612, %v1609
        %v1626 = vpack.c.bf16 %v1620, %v1617
        %1627 = vmatprep.subr.bf16.mxu0 0
        %1628 = vmatpush1.bf16.msra.mxu0 %v698
        %1629 = vmatprep.subr.bf16.mxu0 0
        %1630 = vmatpush1.bf16.msra.mxu0 %v699
        %1631 = vmatprep.subr.bf16.mxu0 0
        %1632 = vmatpush1.bf16.msra.mxu0 %v700
        %1633 = vmatprep.subr.bf16.mxu0 0
        %1634 = vmatpush1.bf16.msra.mxu0 %v701
        %1635 = vmatprep.subr.bf16.mxu0 0
        %1636 = vmatpush1.bf16.msra.mxu0 %v702
        %1637 = vmatprep.subr.bf16.mxu0 0
        %1638 = vmatpush1.bf16.msra.mxu0 %v703
        %1639 = vmatprep.subr.bf16.mxu0 0
        %1640 = vmatpush1.bf16.msra.mxu0 %v704
        %1641 = vmatprep.subr.bf16.mxu0 0
        %1642 = vmatpush1.bf16.msra.mxu0 %v705
        %1643 = vmatprep.subr.bf16.mxu0 0
        %1644 = vmatpush1.bf16.msra.mxu0 0
        %1645 = vmatprep.subr.bf16.mxu0 0
        %1646 = vmatpush1.bf16.msra.mxu0 0
        %1647 = vmatprep.subr.bf16.mxu0 0
        %1648 = vmatpush1.bf16.msra.mxu0 0
        %1649 = vmatprep.subr.bf16.mxu0 0
        %1650 = vmatpush1.bf16.msra.mxu0 0
        %1651 = vmatprep.subr.bf16.mxu0 0
        %1652 = vmatpush1.bf16.msra.mxu0 0
        %1653 = vmatprep.subr.bf16.mxu0 0
        %1654 = vmatpush1.bf16.msra.mxu0 0
        %1655 = vmatprep.subr.bf16.mxu0 0
        %1656 = vmatpush1.bf16.msra.mxu0 0
        %1657 = vmatprep.subr.bf16.mxu0 0
        %1658 = vmatpush1.bf16.msra.mxu0 0
        %1659 = vmatprep.mubr.bf16.mxu0 0
        %1660 = vmatmul.mubr.bf16.gmra.mrb[0].mxu0 %v1554
        %v1661 = vpop.f32.mrb[0].mxu0
        %v1662 = vadd.f32 %v665, %v1661
        %v1663 = vpop.f32.mrb[0].mxu0
        %v1664 = vpop.f32.mrb[0].mxu0
        %v1665 = vadd.f32 %v665, %v1664
        %v1666 = vpop.f32.mrb[0].mxu0
        %1667 = vmatprep.mubr.bf16.mxu0 0
        %1668 = vmatmul.mubr.bf16.gmra.mrb[0].mxu0 %v1555
        %v1669 = vpop.f32.mrb[0].mxu0
        %v1670 = vadd.f32 %v665, %v1669
        %v1671 = vpop.f32.mrb[0].mxu0
        %v1672 = vpop.f32.mrb[0].mxu0
        %v1673 = vadd.f32 %v665, %v1672
        %v1674 = vpop.f32.mrb[0].mxu0
        %1675 = vmatprep.mubr.bf16.mxu0 0
        %1676 = vmatmul.mubr.bf16.gmra.mrb[0].mxu0 %v1556
        %v1677 = vpop.f32.mrb[0].mxu0
        %v1678 = vadd.f32 %v665, %v1677
        %v1679 = vpop.f32.mrb[0].mxu0
        %v1680 = vpop.f32.mrb[0].mxu0
        %v1681 = vadd.f32 %v665, %v1680
        %v1682 = vpop.f32.mrb[0].mxu0
        %1683 = vmatprep.mubr.bf16.mxu0 0
        %1684 = vmatmul.mubr.bf16.gmra.mrb[0].mxu0 %v1557
        %v1685 = vpop.f32.mrb[0].mxu0
        %v1686 = vadd.f32 %v665, %v1685
        %v1687 = vpop.f32.mrb[0].mxu0
        %v1688 = vpop.f32.mrb[0].mxu0
        %v1689 = vadd.f32 %v665, %v1688
        %v1690 = vpop.f32.mrb[0].mxu0
        %1691 = vdwg.mxu0
        %v1692 = vpack.c.bf16 %v1665, %v1662
        %v1693 = vpack.c.bf16 %v1673, %v1670
        %v1694 = vpack.c.bf16 %v1681, %v1678
        %v1695 = vpack.c.bf16 %v1689, %v1686
        %v1696 = vmax.bf16 %v1623, 0
        %v1697 = vmax.bf16 %v1624, 0
        %v1698 = vmax.bf16 %v1625, 0
        %v1699 = vmax.bf16 %v1626, 0
        %v1700 = vmax.bf16 %v1692, 0
        %v1701 = vmax.bf16 %v1693, 0
        %v1702 = vmax.bf16 %v1694, 0
        %v1703 = vmax.bf16 %v1695, 0
        %1704 = vmatprep.subr.bf16.mxu0 0
        %1705 = vmatpush1.bf16.msra.mxu0 %v318
        %1706 = vmatprep.subr.bf16.mxu0 0
        %1707 = vmatpush1.bf16.msra.mxu0 %v319
        %1708 = vmatprep.subr.bf16.mxu0 0
        %1709 = vmatpush1.bf16.msra.mxu0 %v320
        %1710 = vmatprep.subr.bf16.mxu0 0
        %1711 = vmatpush1.bf16.msra.mxu0 %v321
        %1712 = vmatprep.subr.bf16.mxu0 0
        %1713 = vmatpush1.bf16.msra.mxu0 %v322
        %1714 = vmatprep.subr.bf16.mxu0 0
        %1715 = vmatpush1.bf16.msra.mxu0 %v323
        %1716 = vmatprep.subr.bf16.mxu0 0
        %1717 = vmatpush1.bf16.msra.mxu0 %v324
        %1718 = vmatprep.subr.bf16.mxu0 0
        %1719 = vmatpush1.bf16.msra.mxu0 %v325
        %1720 = vmatprep.subr.bf16.mxu0 0
        %1721 = vmatpush1.bf16.msra.mxu0 0
        %1722 = vmatprep.subr.bf16.mxu0 0
        %1723 = vmatpush1.bf16.msra.mxu0 0
        %1724 = vmatprep.subr.bf16.mxu0 0
        %1725 = vmatpush1.bf16.msra.mxu0 0
        %1726 = vmatprep.subr.bf16.mxu0 0
        %1727 = vmatpush1.bf16.msra.mxu0 0
        %1728 = vmatprep.subr.bf16.mxu0 0
        %1729 = vmatpush1.bf16.msra.mxu0 0
        %1730 = vmatprep.subr.bf16.mxu0 0
        %1731 = vmatpush1.bf16.msra.mxu0 0
        %1732 = vmatprep.subr.bf16.mxu0 0
        %1733 = vmatpush1.bf16.msra.mxu0 0
        %1734 = vmatprep.subr.bf16.mxu0 0
        %1735 = vmatpush1.bf16.msra.mxu0 0
        %1736 = vmatprep.mubr.bf16.mxu0 0
        %1737 = vmatmul.mubr.bf16.gmra.mrb[0].mxu0 %v1696
        %v1738 = vpop.f32.mrb[0].mxu0
        %v1739 = vadd.f32 %v285, %v1738
        %v1740 = vpop.f32.mrb[0].mxu0
        %v1741 = vpop.f32.mrb[0].mxu0
        %v1742 = vadd.f32 %v285, %v1741
        %v1743 = vpop.f32.mrb[0].mxu0
        %1744 = vmatprep.mubr.bf16.mxu0 0
        %1745 = vmatmul.mubr.bf16.gmra.mrb[0].mxu0 %v1697
        %v1746 = vpop.f32.mrb[0].mxu0
        %v1747 = vadd.f32 %v285, %v1746
        %v1748 = vpop.f32.mrb[0].mxu0
        %v1749 = vpop.f32.mrb[0].mxu0
        %v1750 = vadd.f32 %v285, %v1749
        %v1751 = vpop.f32.mrb[0].mxu0
        %1752 = vmatprep.mubr.bf16.mxu0 0
        %1753 = vmatmul.mubr.bf16.gmra.mrb[0].mxu0 %v1698
        %v1754 = vpop.f32.mrb[0].mxu0
        %v1755 = vadd.f32 %v285, %v1754
        %v1756 = vpop.f32.mrb[0].mxu0
        %v1757 = vpop.f32.mrb[0].mxu0
        %v1758 = vadd.f32 %v285, %v1757
        %v1759 = vpop.f32.mrb[0].mxu0
        %1760 = vmatprep.mubr.bf16.mxu0 0
        %1761 = vmatmul.mubr.bf16.gmra.mrb[0].mxu0 %v1699
        %v1762 = vpop.f32.mrb[0].mxu0
        %v1763 = vadd.f32 %v285, %v1762
        %v1764 = vpop.f32.mrb[0].mxu0
        %v1765 = vpop.f32.mrb[0].mxu0
        %v1766 = vadd.f32 %v285, %v1765
        %v1767 = vpop.f32.mrb[0].mxu0
        %1768 = vdwg.mxu0
        %v1769 = vpack.c.bf16 %v1742, %v1739
        %v1770 = vpack.c.bf16 %v1750, %v1747
        %v1771 = vpack.c.bf16 %v1758, %v1755
        %v1772 = vpack.c.bf16 %v1766, %v1763
        %1773 = vmatprep.subr.bf16.mxu0 0
        %1774 = vmatpush1.bf16.msra.mxu0 %v318
        %1775 = vmatprep.subr.bf16.mxu0 0
        %1776 = vmatpush1.bf16.msra.mxu0 %v319
        %1777 = vmatprep.subr.bf16.mxu0 0
        %1778 = vmatpush1.bf16.msra.mxu0 %v320
        %1779 = vmatprep.subr.bf16.mxu0 0
        %1780 = vmatpush1.bf16.msra.mxu0 %v321
        %1781 = vmatprep.subr.bf16.mxu0 0
        %1782 = vmatpush1.bf16.msra.mxu0 %v322
        %1783 = vmatprep.subr.bf16.mxu0 0
        %1784 = vmatpush1.bf16.msra.mxu0 %v323
        %1785 = vmatprep.subr.bf16.mxu0 0
        %1786 = vmatpush1.bf16.msra.mxu0 %v324
        %1787 = vmatprep.subr.bf16.mxu0 0
        %1788 = vmatpush1.bf16.msra.mxu0 %v325
        %1789 = vmatprep.subr.bf16.mxu0 0
        %1790 = vmatpush1.bf16.msra.mxu0 0
        %1791 = vmatprep.subr.bf16.mxu0 0
        %1792 = vmatpush1.bf16.msra.mxu0 0
        %1793 = vmatprep.subr.bf16.mxu0 0
        %1794 = vmatpush1.bf16.msra.mxu0 0
        %1795 = vmatprep.subr.bf16.mxu0 0
        %1796 = vmatpush1.bf16.msra.mxu0 0
        %1797 = vmatprep.subr.bf16.mxu0 0
        %1798 = vmatpush1.bf16.msra.mxu0 0
        %1799 = vmatprep.subr.bf16.mxu0 0
        %1800 = vmatpush1.bf16.msra.mxu0 0
        %1801 = vmatprep.subr.bf16.mxu0 0
        %1802 = vmatpush1.bf16.msra.mxu0 0
        %1803 = vmatprep.subr.bf16.mxu0 0
        %1804 = vmatpush1.bf16.msra.mxu0 0
        %1805 = vmatprep.mubr.bf16.mxu0 0
        %1806 = vmatmul.mubr.bf16.gmra.mrb[0].mxu0 %v1700
        %v1807 = vpop.f32.mrb[0].mxu0
        %v1808 = vadd.f32 %v285, %v1807
        %v1809 = vpop.f32.mrb[0].mxu0
        %v1810 = vpop.f32.mrb[0].mxu0
        %v1811 = vadd.f32 %v285, %v1810
        %v1812 = vpop.f32.mrb[0].mxu0
        %1813 = vmatprep.mubr.bf16.mxu0 0
        %1814 = vmatmul.mubr.bf16.gmra.mrb[0].mxu0 %v1701
        %v1815 = vpop.f32.mrb[0].mxu0
        %v1816 = vadd.f32 %v285, %v1815
        %v1817 = vpop.f32.mrb[0].mxu0
        %v1818 = vpop.f32.mrb[0].mxu0
        %v1819 = vadd.f32 %v285, %v1818
        %v1820 = vpop.f32.mrb[0].mxu0
        %1821 = vmatprep.mubr.bf16.mxu0 0
        %1822 = vmatmul.mubr.bf16.gmra.mrb[0].mxu0 %v1702
        %v1823 = vpop.f32.mrb[0].mxu0
        %v1824 = vadd.f32 %v285, %v1823
        %v1825 = vpop.f32.mrb[0].mxu0
        %v1826 = vpop.f32.mrb[0].mxu0
        %v1827 = vadd.f32 %v285, %v1826
        %v1828 = vpop.f32.mrb[0].mxu0
        %1829 = vmatprep.mubr.bf16.mxu0 0
        %1830 = vmatmul.mubr.bf16.gmra.mrb[0].mxu0 %v1703
        %v1831 = vpop.f32.mrb[0].mxu0
        %v1832 = vadd.f32 %v285, %v1831
        %v1833 = vpop.f32.mrb[0].mxu0
        %v1834 = vpop.f32.mrb[0].mxu0
        %v1835 = vadd.f32 %v285, %v1834
        %v1836 = vpop.f32.mrb[0].mxu0
        %1837 = vdwg.mxu0
        %v1838 = vpack.c.bf16 %v1811, %v1808
        %v1839 = vpack.c.bf16 %v1819, %v1816
        %v1840 = vpack.c.bf16 %v1827, %v1824
        %v1841 = vpack.c.bf16 %v1835, %v1832
        %1842 = vmatprep.subr.bf16.mxu0 0
        %1843 = vmatpush1.bf16.msra.mxu0 %v508
        %1844 = vmatprep.subr.bf16.mxu0 0
        %1845 = vmatpush1.bf16.msra.mxu0 %v509
        %1846 = vmatprep.subr.bf16.mxu0 0
        %1847 = vmatpush1.bf16.msra.mxu0 %v510
        %1848 = vmatprep.subr.bf16.mxu0 0
        %1849 = vmatpush1.bf16.msra.mxu0 %v511
        %1850 = vmatprep.subr.bf16.mxu0 0
        %1851 = vmatpush1.bf16.msra.mxu0 %v512
        %1852 = vmatprep.subr.bf16.mxu0 0
        %1853 = vmatpush1.bf16.msra.mxu0 %v513
        %1854 = vmatprep.subr.bf16.mxu0 0
        %1855 = vmatpush1.bf16.msra.mxu0 %v514
        %1856 = vmatprep.subr.bf16.mxu0 0
        %1857 = vmatpush1.bf16.msra.mxu0 %v515
        %1858 = vmatprep.subr.bf16.mxu0 0
        %1859 = vmatpush1.bf16.msra.mxu0 0
        %1860 = vmatprep.subr.bf16.mxu0 0
        %1861 = vmatpush1.bf16.msra.mxu0 0
        %1862 = vmatprep.subr.bf16.mxu0 0
        %1863 = vmatpush1.bf16.msra.mxu0 0
        %1864 = vmatprep.subr.bf16.mxu0 0
        %1865 = vmatpush1.bf16.msra.mxu0 0
        %1866 = vmatprep.subr.bf16.mxu0 0
        %1867 = vmatpush1.bf16.msra.mxu0 0
        %1868 = vmatprep.subr.bf16.mxu0 0
        %1869 = vmatpush1.bf16.msra.mxu0 0
        %1870 = vmatprep.subr.bf16.mxu0 0
        %1871 = vmatpush1.bf16.msra.mxu0 0
        %1872 = vmatprep.subr.bf16.mxu0 0
        %1873 = vmatpush1.bf16.msra.mxu0 0
        %1874 = vmatprep.mubr.bf16.mxu0 0
        %1875 = vmatmul.mubr.bf16.gmra.mrb[0].mxu0 %v1769
        %v1876 = vpop.f32.mrb[0].mxu0
        %v1877 = vadd.f32 %v475, %v1876
        %v1878 = vpop.f32.mrb[0].mxu0
        %v1879 = vpop.f32.mrb[0].mxu0
        %v1880 = vadd.f32 %v475, %v1879
        %v1881 = vpop.f32.mrb[0].mxu0
        %1882 = vmatprep.mubr.bf16.mxu0 0
        %1883 = vmatmul.mubr.bf16.gmra.mrb[0].mxu0 %v1770
        %v1884 = vpop.f32.mrb[0].mxu0
        %v1885 = vadd.f32 %v475, %v1884
        %v1886 = vpop.f32.mrb[0].mxu0
        %v1887 = vpop.f32.mrb[0].mxu0
        %v1888 = vadd.f32 %v475, %v1887
        %v1889 = vpop.f32.mrb[0].mxu0
        %1890 = vmatprep.mubr.bf16.mxu0 0
        %1891 = vmatmul.mubr.bf16.gmra.mrb[0].mxu0 %v1771
        %v1892 = vpop.f32.mrb[0].mxu0
        %v1893 = vadd.f32 %v475, %v1892
        %v1894 = vpop.f32.mrb[0].mxu0
        %v1895 = vpop.f32.mrb[0].mxu0
        %v1896 = vadd.f32 %v475, %v1895
        %v1897 = vpop.f32.mrb[0].mxu0
        %1898 = vmatprep.mubr.bf16.mxu0 0
        %1899 = vmatmul.mubr.bf16.gmra.mrb[0].mxu0 %v1772
        %v1900 = vpop.f32.mrb[0].mxu0
        %v1901 = vadd.f32 %v475, %v1900
        %v1902 = vpop.f32.mrb[0].mxu0
        %v1903 = vpop.f32.mrb[0].mxu0
        %v1904 = vadd.f32 %v475, %v1903
        %v1905 = vpop.f32.mrb[0].mxu0
        %1906 = vdwg.mxu0
        %v1907 = vpack.c.bf16 %v1880, %v1877
        %v1908 = vpack.c.bf16 %v1888, %v1885
        %v1909 = vpack.c.bf16 %v1896, %v1893
        %v1910 = vpack.c.bf16 %v1904, %v1901
        %1911 = vmatprep.subr.bf16.mxu0 0
        %1912 = vmatpush1.bf16.msra.mxu0 %v508
        %1913 = vmatprep.subr.bf16.mxu0 0
        %1914 = vmatpush1.bf16.msra.mxu0 %v509
        %1915 = vmatprep.subr.bf16.mxu0 0
        %1916 = vmatpush1.bf16.msra.mxu0 %v510
        %1917 = vmatprep.subr.bf16.mxu0 0
        %1918 = vmatpush1.bf16.msra.mxu0 %v511
        %1919 = vmatprep.subr.bf16.mxu0 0
        %1920 = vmatpush1.bf16.msra.mxu0 %v512
        %1921 = vmatprep.subr.bf16.mxu0 0
        %1922 = vmatpush1.bf16.msra.mxu0 %v513
        %1923 = vmatprep.subr.bf16.mxu0 0
        %1924 = vmatpush1.bf16.msra.mxu0 %v514
        %1925 = vmatprep.subr.bf16.mxu0 0
        %1926 = vmatpush1.bf16.msra.mxu0 %v515
        %1927 = vmatprep.subr.bf16.mxu0 0
        %1928 = vmatpush1.bf16.msra.mxu0 0
        %1929 = vmatprep.subr.bf16.mxu0 0
        %1930 = vmatpush1.bf16.msra.mxu0 0
        %1931 = vmatprep.subr.bf16.mxu0 0
        %1932 = vmatpush1.bf16.msra.mxu0 0
        %1933 = vmatprep.subr.bf16.mxu0 0
        %1934 = vmatpush1.bf16.msra.mxu0 0
        %1935 = vmatprep.subr.bf16.mxu0 0
        %1936 = vmatpush1.bf16.msra.mxu0 0
        %1937 = vmatprep.subr.bf16.mxu0 0
        %1938 = vmatpush1.bf16.msra.mxu0 0
        %1939 = vmatprep.subr.bf16.mxu0 0
        %1940 = vmatpush1.bf16.msra.mxu0 0
        %1941 = vmatprep.subr.bf16.mxu0 0
        %1942 = vmatpush1.bf16.msra.mxu0 0
        %1943 = vmatprep.mubr.bf16.mxu0 0
        %1944 = vmatmul.mubr.bf16.gmra.mrb[0].mxu0 %v1838
        %v1945 = vpop.f32.mrb[0].mxu0
        %v1946 = vadd.f32 %v475, %v1945
        %v1947 = vpop.f32.mrb[0].mxu0
        %v1948 = vpop.f32.mrb[0].mxu0
        %v1949 = vadd.f32 %v475, %v1948
        %v1950 = vpop.f32.mrb[0].mxu0
        %1951 = vmatprep.mubr.bf16.mxu0 0
        %1952 = vmatmul.mubr.bf16.gmra.mrb[0].mxu0 %v1839
        %v1953 = vpop.f32.mrb[0].mxu0
        %v1954 = vadd.f32 %v475, %v1953
        %v1955 = vpop.f32.mrb[0].mxu0
        %v1956 = vpop.f32.mrb[0].mxu0
        %v1957 = vadd.f32 %v475, %v1956
        %v1958 = vpop.f32.mrb[0].mxu0
        %1959 = vmatprep.mubr.bf16.mxu0 0
        %1960 = vmatmul.mubr.bf16.gmra.mrb[0].mxu0 %v1840
        %v1961 = vpop.f32.mrb[0].mxu0
        %v1962 = vadd.f32 %v475, %v1961
        %v1963 = vpop.f32.mrb[0].mxu0
        %v1964 = vpop.f32.mrb[0].mxu0
        %v1965 = vadd.f32 %v475, %v1964
        %v1966 = vpop.f32.mrb[0].mxu0
        %1967 = vmatprep.mubr.bf16.mxu0 0
        %1968 = vmatmul.mubr.bf16.gmra.mrb[0].mxu0 %v1841
        %v1969 = vpop.f32.mrb[0].mxu0
        %v1970 = vadd.f32 %v475, %v1969
        %v1971 = vpop.f32.mrb[0].mxu0
        %v1972 = vpop.f32.mrb[0].mxu0
        %v1973 = vadd.f32 %v475, %v1972
        %v1974 = vpop.f32.mrb[0].mxu0
        %1975 = vdwg.mxu0
        %v1976 = vpack.c.bf16 %v1949, %v1946
        %v1977 = vpack.c.bf16 %v1957, %v1954
        %v1978 = vpack.c.bf16 %v1965, %v1962
        %v1979 = vpack.c.bf16 %v1973, %v1970
        %1980 = vmatprep.subr.bf16.mxu0 0
        %1981 = vmatpush1.bf16.msra.mxu0 %v698
        %1982 = vmatprep.subr.bf16.mxu0 0
        %1983 = vmatpush1.bf16.msra.mxu0 %v699
        %1984 = vmatprep.subr.bf16.mxu0 0
        %1985 = vmatpush1.bf16.msra.mxu0 %v700
        %1986 = vmatprep.subr.bf16.mxu0 0
        %1987 = vmatpush1.bf16.msra.mxu0 %v701
        %1988 = vmatprep.subr.bf16.mxu0 0
        %1989 = vmatpush1.bf16.msra.mxu0 %v702
        %1990 = vmatprep.subr.bf16.mxu0 0
        %1991 = vmatpush1.bf16.msra.mxu0 %v703
        %1992 = vmatprep.subr.bf16.mxu0 0
        %1993 = vmatpush1.bf16.msra.mxu0 %v704
        %1994 = vmatprep.subr.bf16.mxu0 0
        %1995 = vmatpush1.bf16.msra.mxu0 %v705
        %1996 = vmatprep.subr.bf16.mxu0 0
        %1997 = vmatpush1.bf16.msra.mxu0 0
        %1998 = vmatprep.subr.bf16.mxu0 0
        %1999 = vmatpush1.bf16.msra.mxu0 0
        %2000 = vmatprep.subr.bf16.mxu0 0
        %2001 = vmatpush1.bf16.msra.mxu0 0
        %2002 = vmatprep.subr.bf16.mxu0 0
        %2003 = vmatpush1.bf16.msra.mxu0 0
        %2004 = vmatprep.subr.bf16.mxu0 0
        %2005 = vmatpush1.bf16.msra.mxu0 0
        %2006 = vmatprep.subr.bf16.mxu0 0
        %2007 = vmatpush1.bf16.msra.mxu0 0
        %2008 = vmatprep.subr.bf16.mxu0 0
        %2009 = vmatpush1.bf16.msra.mxu0 0
        %2010 = vmatprep.subr.bf16.mxu0 0
        %2011 = vmatpush1.bf16.msra.mxu0 0
        %2012 = vmatprep.mubr.bf16.mxu0 0
        %2013 = vmatmul.mubr.bf16.gmra.mrb[0].mxu0 %v1907
        %v2014 = vpop.f32.mrb[0].mxu0
        %v2015 = vadd.f32 %v665, %v2014
        %v2016 = vpop.f32.mrb[0].mxu0
        %v2017 = vpop.f32.mrb[0].mxu0
        %v2018 = vadd.f32 %v665, %v2017
        %v2019 = vpop.f32.mrb[0].mxu0
        %2020 = vmatprep.mubr.bf16.mxu0 0
        %2021 = vmatmul.mubr.bf16.gmra.mrb[0].mxu0 %v1908
        %v2022 = vpop.f32.mrb[0].mxu0
        %v2023 = vadd.f32 %v665, %v2022
        %v2024 = vpop.f32.mrb[0].mxu0
        %v2025 = vpop.f32.mrb[0].mxu0
        %v2026 = vadd.f32 %v665, %v2025
        %v2027 = vpop.f32.mrb[0].mxu0
        %2028 = vmatprep.mubr.bf16.mxu0 0
        %2029 = vmatmul.mubr.bf16.gmra.mrb[0].mxu0 %v1909
        %v2030 = vpop.f32.mrb[0].mxu0
        %v2031 = vadd.f32 %v665, %v2030
        %v2032 = vpop.f32.mrb[0].mxu0
        %v2033 = vpop.f32.mrb[0].mxu0
        %v2034 = vadd.f32 %v665, %v2033
        %v2035 = vpop.f32.mrb[0].mxu0
        %2036 = vmatprep.mubr.bf16.mxu0 0
        %2037 = vmatmul.mubr.bf16.gmra.mrb[0].mxu0 %v1910
        %v2038 = vpop.f32.mrb[0].mxu0
        %v2039 = vadd.f32 %v665, %v2038
        %v2040 = vpop.f32.mrb[0].mxu0
        %v2041 = vpop.f32.mrb[0].mxu0
        %v2042 = vadd.f32 %v665, %v2041
        %v2043 = vpop.f32.mrb[0].mxu0
        %2044 = vdwg.mxu0
        %v2045 = vpack.c.bf16 %v2018, %v2015
        %v2046 = vpack.c.bf16 %v2026, %v2023
        %v2047 = vpack.c.bf16 %v2034, %v2031
        %v2048 = vpack.c.bf16 %v2042, %v2039
        %2049 = vmatprep.subr.bf16.mxu0 0
        %2050 = vmatpush1.bf16.msra.mxu0 %v698
        %2051 = vmatprep.subr.bf16.mxu0 0
        %2052 = vmatpush1.bf16.msra.mxu0 %v699
        %2053 = vmatprep.subr.bf16.mxu0 0
        %2054 = vmatpush1.bf16.msra.mxu0 %v700
        %2055 = vmatprep.subr.bf16.mxu0 0
        %2056 = vmatpush1.bf16.msra.mxu0 %v701
        %2057 = vmatprep.subr.bf16.mxu0 0
        %2058 = vmatpush1.bf16.msra.mxu0 %v702
        %2059 = vmatprep.subr.bf16.mxu0 0
        %2060 = vmatpush1.bf16.msra.mxu0 %v703
        %2061 = vmatprep.subr.bf16.mxu0 0
        %2062 = vmatpush1.bf16.msra.mxu0 %v704
        %2063 = vmatprep.subr.bf16.mxu0 0
        %2064 = vmatpush1.bf16.msra.mxu0 %v705
        %2065 = vmatprep.subr.bf16.mxu0 0
        %2066 = vmatpush1.bf16.msra.mxu0 0
        %2067 = vmatprep.subr.bf16.mxu0 0
        %2068 = vmatpush1.bf16.msra.mxu0 0
        %2069 = vmatprep.subr.bf16.mxu0 0
        %2070 = vmatpush1.bf16.msra.mxu0 0
        %2071 = vmatprep.subr.bf16.mxu0 0
        %2072 = vmatpush1.bf16.msra.mxu0 0
        %2073 = vmatprep.subr.bf16.mxu0 0
        %2074 = vmatpush1.bf16.msra.mxu0 0
        %2075 = vmatprep.subr.bf16.mxu0 0
        %2076 = vmatpush1.bf16.msra.mxu0 0
        %2077 = vmatprep.subr.bf16.mxu0 0
        %2078 = vmatpush1.bf16.msra.mxu0 0
        %2079 = vmatprep.subr.bf16.mxu0 0
        %2080 = vmatpush1.bf16.msra.mxu0 0
        %2081 = vmatprep.mubr.bf16.mxu0 0
        %2082 = vmatmul.mubr.bf16.gmra.mrb[0].mxu0 %v1976
        %v2083 = vpop.f32.mrb[0].mxu0
        %v2084 = vadd.f32 %v665, %v2083
        %v2085 = vpop.f32.mrb[0].mxu0
        %v2086 = vpop.f32.mrb[0].mxu0
        %v2087 = vadd.f32 %v665, %v2086
        %v2088 = vpop.f32.mrb[0].mxu0
        %2089 = vmatprep.mubr.bf16.mxu0 0
        %2090 = vmatmul.mubr.bf16.gmra.mrb[0].mxu0 %v1977
        %v2091 = vpop.f32.mrb[0].mxu0
        %v2092 = vadd.f32 %v665, %v2091
        %v2093 = vpop.f32.mrb[0].mxu0
        %v2094 = vpop.f32.mrb[0].mxu0
        %v2095 = vadd.f32 %v665, %v2094
        %v2096 = vpop.f32.mrb[0].mxu0
        %2097 = vmatprep.mubr.bf16.mxu0 0
        %2098 = vmatmul.mubr.bf16.gmra.mrb[0].mxu0 %v1978
        %v2099 = vpop.f32.mrb[0].mxu0
        %v2100 = vadd.f32 %v665, %v2099
        %v2101 = vpop.f32.mrb[0].mxu0
        %v2102 = vpop.f32.mrb[0].mxu0
        %v2103 = vadd.f32 %v665, %v2102
        %v2104 = vpop.f32.mrb[0].mxu0
        %2105 = vmatprep.mubr.bf16.mxu0 0
        %2106 = vmatmul.mubr.bf16.gmra.mrb[0].mxu0 %v1979
        %v2107 = vpop.f32.mrb[0].mxu0
        %v2108 = vadd.f32 %v665, %v2107
        %v2109 = vpop.f32.mrb[0].mxu0
        %v2110 = vpop.f32.mrb[0].mxu0
        %v2111 = vadd.f32 %v665, %v2110
        %v2112 = vpop.f32.mrb[0].mxu0
        %2113 = vdwg.mxu0
        %v2114 = vpack.c.bf16 %v2087, %v2084
        %v2115 = vpack.c.bf16 %v2095, %v2092
        %v2116 = vpack.c.bf16 %v2103, %v2100
        %v2117 = vpack.c.bf16 %v2111, %v2108
        %v2118 = vmax.bf16 %v2045, 0
        %v2119 = vmax.bf16 %v2046, 0
        %v2120 = vmax.bf16 %v2047, 0
        %v2121 = vmax.bf16 %v2048, 0
        %v2122 = vmax.bf16 %v2114, 0
        %v2123 = vmax.bf16 %v2115, 0
        %v2124 = vmax.bf16 %v2116, 0
        %v2125 = vmax.bf16 %v2117, 0
        %2126 = vmatprep.subr.bf16.mxu0 0
        %2127 = vmatpush1.bf16.msra.mxu0 %v318
        %2128 = vmatprep.subr.bf16.mxu0 0
        %2129 = vmatpush1.bf16.msra.mxu0 %v319
        %2130 = vmatprep.subr.bf16.mxu0 0
        %2131 = vmatpush1.bf16.msra.mxu0 %v320
        %2132 = vmatprep.subr.bf16.mxu0 0
        %2133 = vmatpush1.bf16.msra.mxu0 %v321
        %2134 = vmatprep.subr.bf16.mxu0 0
        %2135 = vmatpush1.bf16.msra.mxu0 %v322
        %2136 = vmatprep.subr.bf16.mxu0 0
        %2137 = vmatpush1.bf16.msra.mxu0 %v323
        %2138 = vmatprep.subr.bf16.mxu0 0
        %2139 = vmatpush1.bf16.msra.mxu0 %v324
        %2140 = vmatprep.subr.bf16.mxu0 0
        %2141 = vmatpush1.bf16.msra.mxu0 %v325
        %2142 = vmatprep.subr.bf16.mxu0 0
        %2143 = vmatpush1.bf16.msra.mxu0 0
        %2144 = vmatprep.subr.bf16.mxu0 0
        %2145 = vmatpush1.bf16.msra.mxu0 0
        %2146 = vmatprep.subr.bf16.mxu0 0
        %2147 = vmatpush1.bf16.msra.mxu0 0
        %2148 = vmatprep.subr.bf16.mxu0 0
        %2149 = vmatpush1.bf16.msra.mxu0 0
        %2150 = vmatprep.subr.bf16.mxu0 0
        %2151 = vmatpush1.bf16.msra.mxu0 0
        %2152 = vmatprep.subr.bf16.mxu0 0
        %2153 = vmatpush1.bf16.msra.mxu0 0
        %2154 = vmatprep.subr.bf16.mxu0 0
        %2155 = vmatpush1.bf16.msra.mxu0 0
        %2156 = vmatprep.subr.bf16.mxu0 0
        %2157 = vmatpush1.bf16.msra.mxu0 0
        %2158 = vmatprep.mubr.bf16.mxu0 0
        %2159 = vmatmul.mubr.bf16.gmra.mrb[0].mxu0 %v2118
        %v2160 = vpop.f32.mrb[0].mxu0
        %v2161 = vadd.f32 %v285, %v2160
        %v2162 = vpop.f32.mrb[0].mxu0
        %v2163 = vpop.f32.mrb[0].mxu0
        %v2164 = vadd.f32 %v285, %v2163
        %v2165 = vpop.f32.mrb[0].mxu0
        %2166 = vmatprep.mubr.bf16.mxu0 0
        %2167 = vmatmul.mubr.bf16.gmra.mrb[0].mxu0 %v2119
        %v2168 = vpop.f32.mrb[0].mxu0
        %v2169 = vadd.f32 %v285, %v2168
        %v2170 = vpop.f32.mrb[0].mxu0
        %v2171 = vpop.f32.mrb[0].mxu0
        %v2172 = vadd.f32 %v285, %v2171
        %v2173 = vpop.f32.mrb[0].mxu0
        %2174 = vmatprep.mubr.bf16.mxu0 0
        %2175 = vmatmul.mubr.bf16.gmra.mrb[0].mxu0 %v2120
        %v2176 = vpop.f32.mrb[0].mxu0
        %v2177 = vadd.f32 %v285, %v2176
        %v2178 = vpop.f32.mrb[0].mxu0
        %v2179 = vpop.f32.mrb[0].mxu0
        %v2180 = vadd.f32 %v285, %v2179
        %v2181 = vpop.f32.mrb[0].mxu0
        %2182 = vmatprep.mubr.bf16.mxu0 0
        %2183 = vmatmul.mubr.bf16.gmra.mrb[0].mxu0 %v2121
        %v2184 = vpop.f32.mrb[0].mxu0
        %v2185 = vadd.f32 %v285, %v2184
        %v2186 = vpop.f32.mrb[0].mxu0
        %v2187 = vpop.f32.mrb[0].mxu0
        %v2188 = vadd.f32 %v285, %v2187
        %v2189 = vpop.f32.mrb[0].mxu0
        %2190 = vdwg.mxu0
        %v2191 = vpack.c.bf16 %v2164, %v2161
        %v2192 = vpack.c.bf16 %v2172, %v2169
        %v2193 = vpack.c.bf16 %v2180, %v2177
        %v2194 = vpack.c.bf16 %v2188, %v2185
        %2195 = vmatprep.subr.bf16.mxu0 0
        %2196 = vmatpush1.bf16.msra.mxu0 %v318
        %2197 = vmatprep.subr.bf16.mxu0 0
        %2198 = vmatpush1.bf16.msra.mxu0 %v319
        %2199 = vmatprep.subr.bf16.mxu0 0
        %2200 = vmatpush1.bf16.msra.mxu0 %v320
        %2201 = vmatprep.subr.bf16.mxu0 0
        %2202 = vmatpush1.bf16.msra.mxu0 %v321
        %2203 = vmatprep.subr.bf16.mxu0 0
        %2204 = vmatpush1.bf16.msra.mxu0 %v322
        %2205 = vmatprep.subr.bf16.mxu0 0
        %2206 = vmatpush1.bf16.msra.mxu0 %v323
        %2207 = vmatprep.subr.bf16.mxu0 0
        %2208 = vmatpush1.bf16.msra.mxu0 %v324
        %2209 = vmatprep.subr.bf16.mxu0 0
        %2210 = vmatpush1.bf16.msra.mxu0 %v325
        %2211 = vmatprep.subr.bf16.mxu0 0
        %2212 = vmatpush1.bf16.msra.mxu0 0
        %2213 = vmatprep.subr.bf16.mxu0 0
        %2214 = vmatpush1.bf16.msra.mxu0 0
        %2215 = vmatprep.subr.bf16.mxu0 0
        %2216 = vmatpush1.bf16.msra.mxu0 0
        %2217 = vmatprep.subr.bf16.mxu0 0
        %2218 = vmatpush1.bf16.msra.mxu0 0
        %2219 = vmatprep.subr.bf16.mxu0 0
        %2220 = vmatpush1.bf16.msra.mxu0 0
        %2221 = vmatprep.subr.bf16.mxu0 0
        %2222 = vmatpush1.bf16.msra.mxu0 0
        %2223 = vmatprep.subr.bf16.mxu0 0
        %2224 = vmatpush1.bf16.msra.mxu0 0
        %2225 = vmatprep.subr.bf16.mxu0 0
        %2226 = vmatpush1.bf16.msra.mxu0 0
        %2227 = vmatprep.mubr.bf16.mxu0 0
        %2228 = vmatmul.mubr.bf16.gmra.mrb[0].mxu0 %v2122
        %v2229 = vpop.f32.mrb[0].mxu0
        %v2230 = vadd.f32 %v285, %v2229
        %v2231 = vpop.f32.mrb[0].mxu0
        %v2232 = vpop.f32.mrb[0].mxu0
        %v2233 = vadd.f32 %v285, %v2232
        %v2234 = vpop.f32.mrb[0].mxu0
        %2235 = vmatprep.mubr.bf16.mxu0 0
        %2236 = vmatmul.mubr.bf16.gmra.mrb[0].mxu0 %v2123
        %v2237 = vpop.f32.mrb[0].mxu0
        %v2238 = vadd.f32 %v285, %v2237
        %v2239 = vpop.f32.mrb[0].mxu0
        %v2240 = vpop.f32.mrb[0].mxu0
        %v2241 = vadd.f32 %v285, %v2240
        %v2242 = vpop.f32.mrb[0].mxu0
        %2243 = vmatprep.mubr.bf16.mxu0 0
        %2244 = vmatmul.mubr.bf16.gmra.mrb[0].mxu0 %v2124
        %v2245 = vpop.f32.mrb[0].mxu0
        %v2246 = vadd.f32 %v285, %v2245
        %v2247 = vpop.f32.mrb[0].mxu0
        %v2248 = vpop.f32.mrb[0].mxu0
        %v2249 = vadd.f32 %v285, %v2248
        %v2250 = vpop.f32.mrb[0].mxu0
        %2251 = vmatprep.mubr.bf16.mxu0 0
        %2252 = vmatmul.mubr.bf16.gmra.mrb[0].mxu0 %v2125
        %v2253 = vpop.f32.mrb[0].mxu0
        %v2254 = vadd.f32 %v285, %v2253
        %v2255 = vpop.f32.mrb[0].mxu0
        %v2256 = vpop.f32.mrb[0].mxu0
        %v2257 = vadd.f32 %v285, %v2256
        %v2258 = vpop.f32.mrb[0].mxu0
        %2259 = vdwg.mxu0
        %v2260 = vpack.c.bf16 %v2233, %v2230
        %v2261 = vpack.c.bf16 %v2241, %v2238
        %v2262 = vpack.c.bf16 %v2249, %v2246
        %v2263 = vpack.c.bf16 %v2257, %v2254
        %2264 = vmatprep.subr.bf16.mxu0 0
        %2265 = vmatpush1.bf16.msra.mxu0 %v508
        %2266 = vmatprep.subr.bf16.mxu0 0
        %2267 = vmatpush1.bf16.msra.mxu0 %v509
        %2268 = vmatprep.subr.bf16.mxu0 0
        %2269 = vmatpush1.bf16.msra.mxu0 %v510
        %2270 = vmatprep.subr.bf16.mxu0 0
        %2271 = vmatpush1.bf16.msra.mxu0 %v511
        %2272 = vmatprep.subr.bf16.mxu0 0
        %2273 = vmatpush1.bf16.msra.mxu0 %v512
        %2274 = vmatprep.subr.bf16.mxu0 0
        %2275 = vmatpush1.bf16.msra.mxu0 %v513
        %2276 = vmatprep.subr.bf16.mxu0 0
        %2277 = vmatpush1.bf16.msra.mxu0 %v514
        %2278 = vmatprep.subr.bf16.mxu0 0
        %2279 = vmatpush1.bf16.msra.mxu0 %v515
        %2280 = vmatprep.subr.bf16.mxu0 0
        %2281 = vmatpush1.bf16.msra.mxu0 0
        %2282 = vmatprep.subr.bf16.mxu0 0
        %2283 = vmatpush1.bf16.msra.mxu0 0
        %2284 = vmatprep.subr.bf16.mxu0 0
        %2285 = vmatpush1.bf16.msra.mxu0 0
        %2286 = vmatprep.subr.bf16.mxu0 0
        %2287 = vmatpush1.bf16.msra.mxu0 0
        %2288 = vmatprep.subr.bf16.mxu0 0
        %2289 = vmatpush1.bf16.msra.mxu0 0
        %2290 = vmatprep.subr.bf16.mxu0 0
        %2291 = vmatpush1.bf16.msra.mxu0 0
        %2292 = vmatprep.subr.bf16.mxu0 0
        %2293 = vmatpush1.bf16.msra.mxu0 0
        %2294 = vmatprep.subr.bf16.mxu0 0
        %2295 = vmatpush1.bf16.msra.mxu0 0
        %2296 = vmatprep.mubr.bf16.mxu0 0
        %2297 = vmatmul.mubr.bf16.gmra.mrb[0].mxu0 %v2191
        %v2298 = vpop.f32.mrb[0].mxu0
        %v2299 = vadd.f32 %v475, %v2298
        %v2300 = vpop.f32.mrb[0].mxu0
        %v2301 = vpop.f32.mrb[0].mxu0
        %v2302 = vadd.f32 %v475, %v2301
        %v2303 = vpop.f32.mrb[0].mxu0
        %2304 = vmatprep.mubr.bf16.mxu0 0
        %2305 = vmatmul.mubr.bf16.gmra.mrb[0].mxu0 %v2192
        %v2306 = vpop.f32.mrb[0].mxu0
        %v2307 = vadd.f32 %v475, %v2306
        %v2308 = vpop.f32.mrb[0].mxu0
        %v2309 = vpop.f32.mrb[0].mxu0
        %v2310 = vadd.f32 %v475, %v2309
        %v2311 = vpop.f32.mrb[0].mxu0
        %2312 = vmatprep.mubr.bf16.mxu0 0
        %2313 = vmatmul.mubr.bf16.gmra.mrb[0].mxu0 %v2193
        %v2314 = vpop.f32.mrb[0].mxu0
        %v2315 = vadd.f32 %v475, %v2314
        %v2316 = vpop.f32.mrb[0].mxu0
        %v2317 = vpop.f32.mrb[0].mxu0
        %v2318 = vadd.f32 %v475, %v2317
        %v2319 = vpop.f32.mrb[0].mxu0
        %2320 = vmatprep.mubr.bf16.mxu0 0
        %2321 = vmatmul.mubr.bf16.gmra.mrb[0].mxu0 %v2194
        %v2322 = vpop.f32.mrb[0].mxu0
        %v2323 = vadd.f32 %v475, %v2322
        %v2324 = vpop.f32.mrb[0].mxu0
        %v2325 = vpop.f32.mrb[0].mxu0
        %v2326 = vadd.f32 %v475, %v2325
        %v2327 = vpop.f32.mrb[0].mxu0
        %2328 = vdwg.mxu0
        %v2329 = vpack.c.bf16 %v2302, %v2299
        %v2330 = vpack.c.bf16 %v2310, %v2307
        %v2331 = vpack.c.bf16 %v2318, %v2315
        %v2332 = vpack.c.bf16 %v2326, %v2323
        %2333 = vmatprep.subr.bf16.mxu0 0
        %2334 = vmatpush1.bf16.msra.mxu0 %v508
        %2335 = vmatprep.subr.bf16.mxu0 0
        %2336 = vmatpush1.bf16.msra.mxu0 %v509
        %2337 = vmatprep.subr.bf16.mxu0 0
        %2338 = vmatpush1.bf16.msra.mxu0 %v510
        %2339 = vmatprep.subr.bf16.mxu0 0
        %2340 = vmatpush1.bf16.msra.mxu0 %v511
        %2341 = vmatprep.subr.bf16.mxu0 0
        %2342 = vmatpush1.bf16.msra.mxu0 %v512
        %2343 = vmatprep.subr.bf16.mxu0 0
        %2344 = vmatpush1.bf16.msra.mxu0 %v513
        %2345 = vmatprep.subr.bf16.mxu0 0
        %2346 = vmatpush1.bf16.msra.mxu0 %v514
        %2347 = vmatprep.subr.bf16.mxu0 0
        %2348 = vmatpush1.bf16.msra.mxu0 %v515
        %2349 = vmatprep.subr.bf16.mxu0 0
        %2350 = vmatpush1.bf16.msra.mxu0 0
        %2351 = vmatprep.subr.bf16.mxu0 0
        %2352 = vmatpush1.bf16.msra.mxu0 0
        %2353 = vmatprep.subr.bf16.mxu0 0
        %2354 = vmatpush1.bf16.msra.mxu0 0
        %2355 = vmatprep.subr.bf16.mxu0 0
        %2356 = vmatpush1.bf16.msra.mxu0 0
        %2357 = vmatprep.subr.bf16.mxu0 0
        %2358 = vmatpush1.bf16.msra.mxu0 0
        %2359 = vmatprep.subr.bf16.mxu0 0
        %2360 = vmatpush1.bf16.msra.mxu0 0
        %2361 = vmatprep.subr.bf16.mxu0 0
        %2362 = vmatpush1.bf16.msra.mxu0 0
        %2363 = vmatprep.subr.bf16.mxu0 0
        %2364 = vmatpush1.bf16.msra.mxu0 0
        %2365 = vmatprep.mubr.bf16.mxu0 0
        %2366 = vmatmul.mubr.bf16.gmra.mrb[0].mxu0 %v2260
        %v2367 = vpop.f32.mrb[0].mxu0
        %v2368 = vadd.f32 %v475, %v2367
        %v2369 = vpop.f32.mrb[0].mxu0
        %v2370 = vpop.f32.mrb[0].mxu0
        %v2371 = vadd.f32 %v475, %v2370
        %v2372 = vpop.f32.mrb[0].mxu0
        %2373 = vmatprep.mubr.bf16.mxu0 0
        %2374 = vmatmul.mubr.bf16.gmra.mrb[0].mxu0 %v2261
        %v2375 = vpop.f32.mrb[0].mxu0
        %v2376 = vadd.f32 %v475, %v2375
        %v2377 = vpop.f32.mrb[0].mxu0
        %v2378 = vpop.f32.mrb[0].mxu0
        %v2379 = vadd.f32 %v475, %v2378
        %v2380 = vpop.f32.mrb[0].mxu0
        %2381 = vmatprep.mubr.bf16.mxu0 0
        %2382 = vmatmul.mubr.bf16.gmra.mrb[0].mxu0 %v2262
        %v2383 = vpop.f32.mrb[0].mxu0
        %v2384 = vadd.f32 %v475, %v2383
        %v2385 = vpop.f32.mrb[0].mxu0
        %v2386 = vpop.f32.mrb[0].mxu0
        %v2387 = vadd.f32 %v475, %v2386
        %v2388 = vpop.f32.mrb[0].mxu0
        %2389 = vmatprep.mubr.bf16.mxu0 0
        %2390 = vmatmul.mubr.bf16.gmra.mrb[0].mxu0 %v2263
        %v2391 = vpop.f32.mrb[0].mxu0
        %v2392 = vadd.f32 %v475, %v2391
        %v2393 = vpop.f32.mrb[0].mxu0
        %v2394 = vpop.f32.mrb[0].mxu0
        %v2395 = vadd.f32 %v475, %v2394
        %v2396 = vpop.f32.mrb[0].mxu0
        %2397 = vdwg.mxu0
        %v2398 = vpack.c.bf16 %v2371, %v2368
        %v2399 = vpack.c.bf16 %v2379, %v2376
        %v2400 = vpack.c.bf16 %v2387, %v2384
        %v2401 = vpack.c.bf16 %v2395, %v2392
        %2402 = vmatprep.subr.bf16.mxu0 0
        %2403 = vmatpush1.bf16.msra.mxu0 %v698
        %2404 = vmatprep.subr.bf16.mxu0 0
        %2405 = vmatpush1.bf16.msra.mxu0 %v699
        %2406 = vmatprep.subr.bf16.mxu0 0
        %2407 = vmatpush1.bf16.msra.mxu0 %v700
        %2408 = vmatprep.subr.bf16.mxu0 0
        %2409 = vmatpush1.bf16.msra.mxu0 %v701
        %2410 = vmatprep.subr.bf16.mxu0 0
        %2411 = vmatpush1.bf16.msra.mxu0 %v702
        %2412 = vmatprep.subr.bf16.mxu0 0
        %2413 = vmatpush1.bf16.msra.mxu0 %v703
        %2414 = vmatprep.subr.bf16.mxu0 0
        %2415 = vmatpush1.bf16.msra.mxu0 %v704
        %2416 = vmatprep.subr.bf16.mxu0 0
        %2417 = vmatpush1.bf16.msra.mxu0 %v705
        %2418 = vmatprep.subr.bf16.mxu0 0
        %2419 = vmatpush1.bf16.msra.mxu0 0
        %2420 = vmatprep.subr.bf16.mxu0 0
        %2421 = vmatpush1.bf16.msra.mxu0 0
        %2422 = vmatprep.subr.bf16.mxu0 0
        %2423 = vmatpush1.bf16.msra.mxu0 0
        %2424 = vmatprep.subr.bf16.mxu0 0
        %2425 = vmatpush1.bf16.msra.mxu0 0
        %2426 = vmatprep.subr.bf16.mxu0 0
        %2427 = vmatpush1.bf16.msra.mxu0 0
        %2428 = vmatprep.subr.bf16.mxu0 0
        %2429 = vmatpush1.bf16.msra.mxu0 0
        %2430 = vmatprep.subr.bf16.mxu0 0
        %2431 = vmatpush1.bf16.msra.mxu0 0
        %2432 = vmatprep.subr.bf16.mxu0 0
        %2433 = vmatpush1.bf16.msra.mxu0 0
        %2434 = vmatprep.mubr.bf16.mxu0 0
        %2435 = vmatmul.mubr.bf16.gmra.mrb[0].mxu0 %v2329
        %v2436 = vpop.f32.mrb[0].mxu0
        %v2437 = vadd.f32 %v665, %v2436
        %v2438 = vpop.f32.mrb[0].mxu0
        %v2439 = vpop.f32.mrb[0].mxu0
        %v2440 = vadd.f32 %v665, %v2439
        %v2441 = vpop.f32.mrb[0].mxu0
        %2442 = vmatprep.mubr.bf16.mxu0 0
        %2443 = vmatmul.mubr.bf16.gmra.mrb[0].mxu0 %v2330
        %v2444 = vpop.f32.mrb[0].mxu0
        %v2445 = vadd.f32 %v665, %v2444
        %v2446 = vpop.f32.mrb[0].mxu0
        %v2447 = vpop.f32.mrb[0].mxu0
        %v2448 = vadd.f32 %v665, %v2447
        %v2449 = vpop.f32.mrb[0].mxu0
        %2450 = vmatprep.mubr.bf16.mxu0 0
        %2451 = vmatmul.mubr.bf16.gmra.mrb[0].mxu0 %v2331
        %v2452 = vpop.f32.mrb[0].mxu0
        %v2453 = vadd.f32 %v665, %v2452
        %v2454 = vpop.f32.mrb[0].mxu0
        %v2455 = vpop.f32.mrb[0].mxu0
        %v2456 = vadd.f32 %v665, %v2455
        %v2457 = vpop.f32.mrb[0].mxu0
        %2458 = vmatprep.mubr.bf16.mxu0 0
        %2459 = vmatmul.mubr.bf16.gmra.mrb[0].mxu0 %v2332
        %v2460 = vpop.f32.mrb[0].mxu0
        %v2461 = vadd.f32 %v665, %v2460
        %v2462 = vpop.f32.mrb[0].mxu0
        %v2463 = vpop.f32.mrb[0].mxu0
        %v2464 = vadd.f32 %v665, %v2463
        %v2465 = vpop.f32.mrb[0].mxu0
        %2466 = vdwg.mxu0
        %v2467 = vpack.c.bf16 %v2440, %v2437
        %v2468 = vpack.c.bf16 %v2448, %v2445
        %v2469 = vpack.c.bf16 %v2456, %v2453
        %v2470 = vpack.c.bf16 %v2464, %v2461
        %2471 = vmatprep.subr.bf16.mxu0 0
        %2472 = vmatpush1.bf16.msra.mxu0 %v698
        %2473 = vmatprep.subr.bf16.mxu0 0
        %2474 = vmatpush1.bf16.msra.mxu0 %v699
        %2475 = vmatprep.subr.bf16.mxu0 0
        %2476 = vmatpush1.bf16.msra.mxu0 %v700
        %2477 = vmatprep.subr.bf16.mxu0 0
        %2478 = vmatpush1.bf16.msra.mxu0 %v701
        %2479 = vmatprep.subr.bf16.mxu0 0
        %2480 = vmatpush1.bf16.msra.mxu0 %v702
        %2481 = vmatprep.subr.bf16.mxu0 0
        %2482 = vmatpush1.bf16.msra.mxu0 %v703
        %2483 = vmatprep.subr.bf16.mxu0 0
        %2484 = vmatpush1.bf16.msra.mxu0 %v704
        %2485 = vmatprep.subr.bf16.mxu0 0
        %2486 = vmatpush1.bf16.msra.mxu0 %v705
        %2487 = vmatprep.subr.bf16.mxu0 0
        %2488 = vmatpush1.bf16.msra.mxu0 0
        %2489 = vmatprep.subr.bf16.mxu0 0
        %2490 = vmatpush1.bf16.msra.mxu0 0
        %2491 = vmatprep.subr.bf16.mxu0 0
        %2492 = vmatpush1.bf16.msra.mxu0 0
        %2493 = vmatprep.subr.bf16.mxu0 0
        %2494 = vmatpush1.bf16.msra.mxu0 0
        %2495 = vmatprep.subr.bf16.mxu0 0
        %2496 = vmatpush1.bf16.msra.mxu0 0
        %2497 = vmatprep.subr.bf16.mxu0 0
        %2498 = vmatpush1.bf16.msra.mxu0 0
        %2499 = vmatprep.subr.bf16.mxu0 0
        %2500 = vmatpush1.bf16.msra.mxu0 0
        %2501 = vmatprep.subr.bf16.mxu0 0
        %2502 = vmatpush1.bf16.msra.mxu0 0
        %2503 = vmatprep.mubr.bf16.mxu0 0
        %2504 = vmatmul.mubr.bf16.gmra.mrb[0].mxu0 %v2398
        %v2505 = vpop.f32.mrb[0].mxu0
        %v2506 = vadd.f32 %v665, %v2505
        %v2507 = vpop.f32.mrb[0].mxu0
        %v2508 = vpop.f32.mrb[0].mxu0
        %v2509 = vadd.f32 %v665, %v2508
        %v2510 = vpop.f32.mrb[0].mxu0
        %2511 = vmatprep.mubr.bf16.mxu0 0
        %2512 = vmatmul.mubr.bf16.gmra.mrb[0].mxu0 %v2399
        %v2513 = vpop.f32.mrb[0].mxu0
        %v2514 = vadd.f32 %v665, %v2513
        %v2515 = vpop.f32.mrb[0].mxu0
        %v2516 = vpop.f32.mrb[0].mxu0
        %v2517 = vadd.f32 %v665, %v2516
        %v2518 = vpop.f32.mrb[0].mxu0
        %2519 = vmatprep.mubr.bf16.mxu0 0
        %2520 = vmatmul.mubr.bf16.gmra.mrb[0].mxu0 %v2400
        %v2521 = vpop.f32.mrb[0].mxu0
        %v2522 = vadd.f32 %v665, %v2521
        %v2523 = vpop.f32.mrb[0].mxu0
        %v2524 = vpop.f32.mrb[0].mxu0
        %v2525 = vadd.f32 %v665, %v2524
        %v2526 = vpop.f32.mrb[0].mxu0
        %2527 = vmatprep.mubr.bf16.mxu0 0
        %2528 = vmatmul.mubr.bf16.gmra.mrb[0].mxu0 %v2401
        %v2529 = vpop.f32.mrb[0].mxu0
        %v2530 = vadd.f32 %v665, %v2529
        %v2531 = vpop.f32.mrb[0].mxu0
        %v2532 = vpop.f32.mrb[0].mxu0
        %v2533 = vadd.f32 %v665, %v2532
        %v2534 = vpop.f32.mrb[0].mxu0
        %2535 = vdwg.mxu0
        %v2536 = vpack.c.bf16 %v2509, %v2506
        %v2537 = vpack.c.bf16 %v2517, %v2514
        %v2538 = vpack.c.bf16 %v2525, %v2522
        %v2539 = vpack.c.bf16 %v2533, %v2530
        %v2540 = vmax.bf16 %v2467, 0
        %v2541 = vmax.bf16 %v2468, 0
        %v2542 = vmax.bf16 %v2469, 0
        %v2543 = vmax.bf16 %v2470, 0
        %v2544 = vmax.bf16 %v2536, 0
        %v2545 = vmax.bf16 %v2537, 0
        %v2546 = vmax.bf16 %v2538, 0
        %v2547 = vmax.bf16 %v2539, 0
        %2548 = vmatprep.subr.bf16.mxu0 0
        %2549 = vmatpush1.bf16.msra.mxu0 %v318
        %2550 = vmatprep.subr.bf16.mxu0 0
        %2551 = vmatpush1.bf16.msra.mxu0 %v319
        %2552 = vmatprep.subr.bf16.mxu0 0
        %2553 = vmatpush1.bf16.msra.mxu0 %v320
        %2554 = vmatprep.subr.bf16.mxu0 0
        %2555 = vmatpush1.bf16.msra.mxu0 %v321
        %2556 = vmatprep.subr.bf16.mxu0 0
        %2557 = vmatpush1.bf16.msra.mxu0 %v322
        %2558 = vmatprep.subr.bf16.mxu0 0
        %2559 = vmatpush1.bf16.msra.mxu0 %v323
        %2560 = vmatprep.subr.bf16.mxu0 0
        %2561 = vmatpush1.bf16.msra.mxu0 %v324
        %2562 = vmatprep.subr.bf16.mxu0 0
        %2563 = vmatpush1.bf16.msra.mxu0 %v325
        %2564 = vmatprep.subr.bf16.mxu0 0
        %2565 = vmatpush1.bf16.msra.mxu0 0
        %2566 = vmatprep.subr.bf16.mxu0 0
        %2567 = vmatpush1.bf16.msra.mxu0 0
        %2568 = vmatprep.subr.bf16.mxu0 0
        %2569 = vmatpush1.bf16.msra.mxu0 0
        %2570 = vmatprep.subr.bf16.mxu0 0
        %2571 = vmatpush1.bf16.msra.mxu0 0
        %2572 = vmatprep.subr.bf16.mxu0 0
        %2573 = vmatpush1.bf16.msra.mxu0 0
        %2574 = vmatprep.subr.bf16.mxu0 0
        %2575 = vmatpush1.bf16.msra.mxu0 0
        %2576 = vmatprep.subr.bf16.mxu0 0
        %2577 = vmatpush1.bf16.msra.mxu0 0
        %2578 = vmatprep.subr.bf16.mxu0 0
        %2579 = vmatpush1.bf16.msra.mxu0 0
        %2580 = vmatprep.mubr.bf16.mxu0 0
        %2581 = vmatmul.mubr.bf16.gmra.mrb[0].mxu0 %v2540
        %v2582 = vpop.f32.mrb[0].mxu0
        %v2583 = vadd.f32 %v285, %v2582
        %v2584 = vpop.f32.mrb[0].mxu0
        %v2585 = vpop.f32.mrb[0].mxu0
        %v2586 = vadd.f32 %v285, %v2585
        %v2587 = vpop.f32.mrb[0].mxu0
        %2588 = vmatprep.mubr.bf16.mxu0 0
        %2589 = vmatmul.mubr.bf16.gmra.mrb[0].mxu0 %v2541
        %v2590 = vpop.f32.mrb[0].mxu0
        %v2591 = vadd.f32 %v285, %v2590
        %v2592 = vpop.f32.mrb[0].mxu0
        %v2593 = vpop.f32.mrb[0].mxu0
        %v2594 = vadd.f32 %v285, %v2593
        %v2595 = vpop.f32.mrb[0].mxu0
        %2596 = vmatprep.mubr.bf16.mxu0 0
        %2597 = vmatmul.mubr.bf16.gmra.mrb[0].mxu0 %v2542
        %v2598 = vpop.f32.mrb[0].mxu0
        %v2599 = vadd.f32 %v285, %v2598
        %v2600 = vpop.f32.mrb[0].mxu0
        %v2601 = vpop.f32.mrb[0].mxu0
        %v2602 = vadd.f32 %v285, %v2601
        %v2603 = vpop.f32.mrb[0].mxu0
        %2604 = vmatprep.mubr.bf16.mxu0 0
        %2605 = vmatmul.mubr.bf16.gmra.mrb[0].mxu0 %v2543
        %v2606 = vpop.f32.mrb[0].mxu0
        %v2607 = vadd.f32 %v285, %v2606
        %v2608 = vpop.f32.mrb[0].mxu0
        %v2609 = vpop.f32.mrb[0].mxu0
        %v2610 = vadd.f32 %v285, %v2609
        %v2611 = vpop.f32.mrb[0].mxu0
        %2612 = vdwg.mxu0
        %v2613 = vpack.c.bf16 %v2586, %v2583
        %v2614 = vpack.c.bf16 %v2594, %v2591
        %v2615 = vpack.c.bf16 %v2602, %v2599
        %v2616 = vpack.c.bf16 %v2610, %v2607
        %2617 = vmatprep.subr.bf16.mxu0 0
        %2618 = vmatpush1.bf16.msra.mxu0 %v318
        %2619 = vmatprep.subr.bf16.mxu0 0
        %2620 = vmatpush1.bf16.msra.mxu0 %v319
        %2621 = vmatprep.subr.bf16.mxu0 0
        %2622 = vmatpush1.bf16.msra.mxu0 %v320
        %2623 = vmatprep.subr.bf16.mxu0 0
        %2624 = vmatpush1.bf16.msra.mxu0 %v321
        %2625 = vmatprep.subr.bf16.mxu0 0
        %2626 = vmatpush1.bf16.msra.mxu0 %v322
        %2627 = vmatprep.subr.bf16.mxu0 0
        %2628 = vmatpush1.bf16.msra.mxu0 %v323
        %2629 = vmatprep.subr.bf16.mxu0 0
        %2630 = vmatpush1.bf16.msra.mxu0 %v324
        %2631 = vmatprep.subr.bf16.mxu0 0
        %2632 = vmatpush1.bf16.msra.mxu0 %v325
        %2633 = vmatprep.subr.bf16.mxu0 0
        %2634 = vmatpush1.bf16.msra.mxu0 0
        %2635 = vmatprep.subr.bf16.mxu0 0
        %2636 = vmatpush1.bf16.msra.mxu0 0
        %2637 = vmatprep.subr.bf16.mxu0 0
        %2638 = vmatpush1.bf16.msra.mxu0 0
        %2639 = vmatprep.subr.bf16.mxu0 0
        %2640 = vmatpush1.bf16.msra.mxu0 0
        %2641 = vmatprep.subr.bf16.mxu0 0
        %2642 = vmatpush1.bf16.msra.mxu0 0
        %2643 = vmatprep.subr.bf16.mxu0 0
        %2644 = vmatpush1.bf16.msra.mxu0 0
        %2645 = vmatprep.subr.bf16.mxu0 0
        %2646 = vmatpush1.bf16.msra.mxu0 0
        %2647 = vmatprep.subr.bf16.mxu0 0
        %2648 = vmatpush1.bf16.msra.mxu0 0
        %2649 = vmatprep.mubr.bf16.mxu0 0
        %2650 = vmatmul.mubr.bf16.gmra.mrb[0].mxu0 %v2544
        %v2651 = vpop.f32.mrb[0].mxu0
        %v2652 = vadd.f32 %v285, %v2651
        %v2653 = vpop.f32.mrb[0].mxu0
        %v2654 = vpop.f32.mrb[0].mxu0
        %v2655 = vadd.f32 %v285, %v2654
        %v2656 = vpop.f32.mrb[0].mxu0
        %2657 = vmatprep.mubr.bf16.mxu0 0
        %2658 = vmatmul.mubr.bf16.gmra.mrb[0].mxu0 %v2545
        %v2659 = vpop.f32.mrb[0].mxu0
        %v2660 = vadd.f32 %v285, %v2659
        %v2661 = vpop.f32.mrb[0].mxu0
        %v2662 = vpop.f32.mrb[0].mxu0
        %v2663 = vadd.f32 %v285, %v2662
        %v2664 = vpop.f32.mrb[0].mxu0
        %2665 = vmatprep.mubr.bf16.mxu0 0
        %2666 = vmatmul.mubr.bf16.gmra.mrb[0].mxu0 %v2546
        %v2667 = vpop.f32.mrb[0].mxu0
        %v2668 = vadd.f32 %v285, %v2667
        %v2669 = vpop.f32.mrb[0].mxu0
        %v2670 = vpop.f32.mrb[0].mxu0
        %v2671 = vadd.f32 %v285, %v2670
        %v2672 = vpop.f32.mrb[0].mxu0
        %2673 = vmatprep.mubr.bf16.mxu0 0
        %2674 = vmatmul.mubr.bf16.gmra.mrb[0].mxu0 %v2547
        %v2675 = vpop.f32.mrb[0].mxu0
        %v2676 = vadd.f32 %v285, %v2675
        %v2677 = vpop.f32.mrb[0].mxu0
        %v2678 = vpop.f32.mrb[0].mxu0
        %v2679 = vadd.f32 %v285, %v2678
        %v2680 = vpop.f32.mrb[0].mxu0
        %2681 = vdwg.mxu0
        %v2682 = vpack.c.bf16 %v2655, %v2652
        %v2683 = vpack.c.bf16 %v2663, %v2660
        %v2684 = vpack.c.bf16 %v2671, %v2668
        %v2685 = vpack.c.bf16 %v2679, %v2676
        %2686 = vmatprep.subr.bf16.mxu0 0
        %2687 = vmatpush1.bf16.msra.mxu0 %v508
        %2688 = vmatprep.subr.bf16.mxu0 0
        %2689 = vmatpush1.bf16.msra.mxu0 %v509
        %2690 = vmatprep.subr.bf16.mxu0 0
        %2691 = vmatpush1.bf16.msra.mxu0 %v510
        %2692 = vmatprep.subr.bf16.mxu0 0
        %2693 = vmatpush1.bf16.msra.mxu0 %v511
        %2694 = vmatprep.subr.bf16.mxu0 0
        %2695 = vmatpush1.bf16.msra.mxu0 %v512
        %2696 = vmatprep.subr.bf16.mxu0 0
        %2697 = vmatpush1.bf16.msra.mxu0 %v513
        %2698 = vmatprep.subr.bf16.mxu0 0
        %2699 = vmatpush1.bf16.msra.mxu0 %v514
        %2700 = vmatprep.subr.bf16.mxu0 0
        %2701 = vmatpush1.bf16.msra.mxu0 %v515
        %2702 = vmatprep.subr.bf16.mxu0 0
        %2703 = vmatpush1.bf16.msra.mxu0 0
        %2704 = vmatprep.subr.bf16.mxu0 0
        %2705 = vmatpush1.bf16.msra.mxu0 0
        %2706 = vmatprep.subr.bf16.mxu0 0
        %2707 = vmatpush1.bf16.msra.mxu0 0
        %2708 = vmatprep.subr.bf16.mxu0 0
        %2709 = vmatpush1.bf16.msra.mxu0 0
        %2710 = vmatprep.subr.bf16.mxu0 0
        %2711 = vmatpush1.bf16.msra.mxu0 0
        %2712 = vmatprep.subr.bf16.mxu0 0
        %2713 = vmatpush1.bf16.msra.mxu0 0
        %2714 = vmatprep.subr.bf16.mxu0 0
        %2715 = vmatpush1.bf16.msra.mxu0 0
        %2716 = vmatprep.subr.bf16.mxu0 0
        %2717 = vmatpush1.bf16.msra.mxu0 0
        %2718 = vmatprep.mubr.bf16.mxu0 0
        %2719 = vmatmul.mubr.bf16.gmra.mrb[0].mxu0 %v2613
        %v2720 = vpop.f32.mrb[0].mxu0
        %v2721 = vadd.f32 %v475, %v2720
        %v2722 = vpop.f32.mrb[0].mxu0
        %v2723 = vpop.f32.mrb[0].mxu0
        %v2724 = vadd.f32 %v475, %v2723
        %v2725 = vpop.f32.mrb[0].mxu0
        %2726 = vmatprep.mubr.bf16.mxu0 0
        %2727 = vmatmul.mubr.bf16.gmra.mrb[0].mxu0 %v2614
        %v2728 = vpop.f32.mrb[0].mxu0
        %v2729 = vadd.f32 %v475, %v2728
        %v2730 = vpop.f32.mrb[0].mxu0
        %v2731 = vpop.f32.mrb[0].mxu0
        %v2732 = vadd.f32 %v475, %v2731
        %v2733 = vpop.f32.mrb[0].mxu0
        %2734 = vmatprep.mubr.bf16.mxu0 0
        %2735 = vmatmul.mubr.bf16.gmra.mrb[0].mxu0 %v2615
        %v2736 = vpop.f32.mrb[0].mxu0
        %v2737 = vadd.f32 %v475, %v2736
        %v2738 = vpop.f32.mrb[0].mxu0
        %v2739 = vpop.f32.mrb[0].mxu0
        %v2740 = vadd.f32 %v475, %v2739
        %v2741 = vpop.f32.mrb[0].mxu0
        %2742 = vmatprep.mubr.bf16.mxu0 0
        %2743 = vmatmul.mubr.bf16.gmra.mrb[0].mxu0 %v2616
        %v2744 = vpop.f32.mrb[0].mxu0
        %v2745 = vadd.f32 %v475, %v2744
        %v2746 = vpop.f32.mrb[0].mxu0
        %v2747 = vpop.f32.mrb[0].mxu0
        %v2748 = vadd.f32 %v475, %v2747
        %v2749 = vpop.f32.mrb[0].mxu0
        %2750 = vdwg.mxu0
        %v2751 = vpack.c.bf16 %v2724, %v2721
        %v2752 = vpack.c.bf16 %v2732, %v2729
        %v2753 = vpack.c.bf16 %v2740, %v2737
        %v2754 = vpack.c.bf16 %v2748, %v2745
        %2755 = vmatprep.subr.bf16.mxu0 0
        %2756 = vmatpush1.bf16.msra.mxu0 %v508
        %2757 = vmatprep.subr.bf16.mxu0 0
        %2758 = vmatpush1.bf16.msra.mxu0 %v509
        %2759 = vmatprep.subr.bf16.mxu0 0
        %2760 = vmatpush1.bf16.msra.mxu0 %v510
        %2761 = vmatprep.subr.bf16.mxu0 0
        %2762 = vmatpush1.bf16.msra.mxu0 %v511
        %2763 = vmatprep.subr.bf16.mxu0 0
        %2764 = vmatpush1.bf16.msra.mxu0 %v512
        %2765 = vmatprep.subr.bf16.mxu0 0
        %2766 = vmatpush1.bf16.msra.mxu0 %v513
        %2767 = vmatprep.subr.bf16.mxu0 0
        %2768 = vmatpush1.bf16.msra.mxu0 %v514
        %2769 = vmatprep.subr.bf16.mxu0 0
        %2770 = vmatpush1.bf16.msra.mxu0 %v515
        %2771 = vmatprep.subr.bf16.mxu0 0
        %2772 = vmatpush1.bf16.msra.mxu0 0
        %2773 = vmatprep.subr.bf16.mxu0 0
        %2774 = vmatpush1.bf16.msra.mxu0 0
        %2775 = vmatprep.subr.bf16.mxu0 0
        %2776 = vmatpush1.bf16.msra.mxu0 0
        %2777 = vmatprep.subr.bf16.mxu0 0
        %2778 = vmatpush1.bf16.msra.mxu0 0
        %2779 = vmatprep.subr.bf16.mxu0 0
        %2780 = vmatpush1.bf16.msra.mxu0 0
        %2781 = vmatprep.subr.bf16.mxu0 0
        %2782 = vmatpush1.bf16.msra.mxu0 0
        %2783 = vmatprep.subr.bf16.mxu0 0
        %2784 = vmatpush1.bf16.msra.mxu0 0
        %2785 = vmatprep.subr.bf16.mxu0 0
        %2786 = vmatpush1.bf16.msra.mxu0 0
        %2787 = vmatprep.mubr.bf16.mxu0 0
        %2788 = vmatmul.mubr.bf16.gmra.mrb[0].mxu0 %v2682
        %v2789 = vpop.f32.mrb[0].mxu0
        %v2790 = vadd.f32 %v475, %v2789
        %v2791 = vpop.f32.mrb[0].mxu0
        %v2792 = vpop.f32.mrb[0].mxu0
        %v2793 = vadd.f32 %v475, %v2792
        %v2794 = vpop.f32.mrb[0].mxu0
        %2795 = vmatprep.mubr.bf16.mxu0 0
        %2796 = vmatmul.mubr.bf16.gmra.mrb[0].mxu0 %v2683
        %v2797 = vpop.f32.mrb[0].mxu0
        %v2798 = vadd.f32 %v475, %v2797
        %v2799 = vpop.f32.mrb[0].mxu0
        %v2800 = vpop.f32.mrb[0].mxu0
        %v2801 = vadd.f32 %v475, %v2800
        %v2802 = vpop.f32.mrb[0].mxu0
        %2803 = vmatprep.mubr.bf16.mxu0 0
        %2804 = vmatmul.mubr.bf16.gmra.mrb[0].mxu0 %v2684
        %v2805 = vpop.f32.mrb[0].mxu0
        %v2806 = vadd.f32 %v475, %v2805
        %v2807 = vpop.f32.mrb[0].mxu0
        %v2808 = vpop.f32.mrb[0].mxu0
        %v2809 = vadd.f32 %v475, %v2808
        %v2810 = vpop.f32.mrb[0].mxu0
        %2811 = vmatprep.mubr.bf16.mxu0 0
        %2812 = vmatmul.mubr.bf16.gmra.mrb[0].mxu0 %v2685
        %v2813 = vpop.f32.mrb[0].mxu0
        %v2814 = vadd.f32 %v475, %v2813
        %v2815 = vpop.f32.mrb[0].mxu0
        %v2816 = vpop.f32.mrb[0].mxu0
        %v2817 = vadd.f32 %v475, %v2816
        %v2818 = vpop.f32.mrb[0].mxu0
        %2819 = vdwg.mxu0
        %v2820 = vpack.c.bf16 %v2793, %v2790
        %v2821 = vpack.c.bf16 %v2801, %v2798
        %v2822 = vpack.c.bf16 %v2809, %v2806
        %v2823 = vpack.c.bf16 %v2817, %v2814
        %2824 = vmatprep.subr.bf16.mxu0 0
        %2825 = vmatpush1.bf16.msra.mxu0 %v698
        %2826 = vmatprep.subr.bf16.mxu0 0
        %2827 = vmatpush1.bf16.msra.mxu0 %v699
        %2828 = vmatprep.subr.bf16.mxu0 0
        %2829 = vmatpush1.bf16.msra.mxu0 %v700
        %2830 = vmatprep.subr.bf16.mxu0 0
        %2831 = vmatpush1.bf16.msra.mxu0 %v701
        %2832 = vmatprep.subr.bf16.mxu0 0
        %2833 = vmatpush1.bf16.msra.mxu0 %v702
        %2834 = vmatprep.subr.bf16.mxu0 0
        %2835 = vmatpush1.bf16.msra.mxu0 %v703
        %2836 = vmatprep.subr.bf16.mxu0 0
        %2837 = vmatpush1.bf16.msra.mxu0 %v704
        %2838 = vmatprep.subr.bf16.mxu0 0
        %2839 = vmatpush1.bf16.msra.mxu0 %v705
        %2840 = vmatprep.subr.bf16.mxu0 0
        %2841 = vmatpush1.bf16.msra.mxu0 0
        %2842 = vmatprep.subr.bf16.mxu0 0
        %2843 = vmatpush1.bf16.msra.mxu0 0
        %2844 = vmatprep.subr.bf16.mxu0 0
        %2845 = vmatpush1.bf16.msra.mxu0 0
        %2846 = vmatprep.subr.bf16.mxu0 0
        %2847 = vmatpush1.bf16.msra.mxu0 0
        %2848 = vmatprep.subr.bf16.mxu0 0
        %2849 = vmatpush1.bf16.msra.mxu0 0
        %2850 = vmatprep.subr.bf16.mxu0 0
        %2851 = vmatpush1.bf16.msra.mxu0 0
        %2852 = vmatprep.subr.bf16.mxu0 0
        %2853 = vmatpush1.bf16.msra.mxu0 0
        %2854 = vmatprep.subr.bf16.mxu0 0
        %2855 = vmatpush1.bf16.msra.mxu0 0
        %2856 = vmatprep.mubr.bf16.mxu0 0
        %2857 = vmatmul.mubr.bf16.gmra.mrb[0].mxu0 %v2751
        %v2858 = vpop.f32.mrb[0].mxu0
        %v2859 = vadd.f32 %v665, %v2858
        %v2860 = vpop.f32.mrb[0].mxu0
        %v2861 = vpop.f32.mrb[0].mxu0
        %v2862 = vadd.f32 %v665, %v2861
        %v2863 = vpop.f32.mrb[0].mxu0
        %2864 = vmatprep.mubr.bf16.mxu0 0
        %2865 = vmatmul.mubr.bf16.gmra.mrb[0].mxu0 %v2752
        %v2866 = vpop.f32.mrb[0].mxu0
        %v2867 = vadd.f32 %v665, %v2866
        %v2868 = vpop.f32.mrb[0].mxu0
        %v2869 = vpop.f32.mrb[0].mxu0
        %v2870 = vadd.f32 %v665, %v2869
        %v2871 = vpop.f32.mrb[0].mxu0
        %2872 = vmatprep.mubr.bf16.mxu0 0
        %2873 = vmatmul.mubr.bf16.gmra.mrb[0].mxu0 %v2753
        %v2874 = vpop.f32.mrb[0].mxu0
        %v2875 = vadd.f32 %v665, %v2874
        %v2876 = vpop.f32.mrb[0].mxu0
        %v2877 = vpop.f32.mrb[0].mxu0
        %v2878 = vadd.f32 %v665, %v2877
        %v2879 = vpop.f32.mrb[0].mxu0
        %2880 = vmatprep.mubr.bf16.mxu0 0
        %2881 = vmatmul.mubr.bf16.gmra.mrb[0].mxu0 %v2754
        %v2882 = vpop.f32.mrb[0].mxu0
        %v2883 = vadd.f32 %v665, %v2882
        %v2884 = vpop.f32.mrb[0].mxu0
        %v2885 = vpop.f32.mrb[0].mxu0
        %v2886 = vadd.f32 %v665, %v2885
        %v2887 = vpop.f32.mrb[0].mxu0
        %2888 = vdwg.mxu0
        %v2889 = vpack.c.bf16 %v2862, %v2859
        %v2890 = vpack.c.bf16 %v2870, %v2867
        %v2891 = vpack.c.bf16 %v2878, %v2875
        %v2892 = vpack.c.bf16 %v2886, %v2883
        %2893 = vmatprep.subr.bf16.mxu0 0
        %2894 = vmatpush1.bf16.msra.mxu0 %v698
        %2895 = vmatprep.subr.bf16.mxu0 0
        %2896 = vmatpush1.bf16.msra.mxu0 %v699
        %2897 = vmatprep.subr.bf16.mxu0 0
        %2898 = vmatpush1.bf16.msra.mxu0 %v700
        %2899 = vmatprep.subr.bf16.mxu0 0
        %2900 = vmatpush1.bf16.msra.mxu0 %v701
        %2901 = vmatprep.subr.bf16.mxu0 0
        %2902 = vmatpush1.bf16.msra.mxu0 %v702
        %2903 = vmatprep.subr.bf16.mxu0 0
        %2904 = vmatpush1.bf16.msra.mxu0 %v703
        %2905 = vmatprep.subr.bf16.mxu0 0
        %2906 = vmatpush1.bf16.msra.mxu0 %v704
        %2907 = vmatprep.subr.bf16.mxu0 0
        %2908 = vmatpush1.bf16.msra.mxu0 %v705
        %2909 = vmatprep.subr.bf16.mxu0 0
        %2910 = vmatpush1.bf16.msra.mxu0 0
        %2911 = vmatprep.subr.bf16.mxu0 0
        %2912 = vmatpush1.bf16.msra.mxu0 0
        %2913 = vmatprep.subr.bf16.mxu0 0
        %2914 = vmatpush1.bf16.msra.mxu0 0
        %2915 = vmatprep.subr.bf16.mxu0 0
        %2916 = vmatpush1.bf16.msra.mxu0 0
        %2917 = vmatprep.subr.bf16.mxu0 0
        %2918 = vmatpush1.bf16.msra.mxu0 0
        %2919 = vmatprep.subr.bf16.mxu0 0
        %2920 = vmatpush1.bf16.msra.mxu0 0
        %2921 = vmatprep.subr.bf16.mxu0 0
        %2922 = vmatpush1.bf16.msra.mxu0 0
        %2923 = vmatprep.subr.bf16.mxu0 0
        %2924 = vmatpush1.bf16.msra.mxu0 0
        %2925 = vmatprep.mubr.bf16.mxu0 0
        %2926 = vmatmul.mubr.bf16.gmra.mrb[0].mxu0 %v2820
        %v2927 = vpop.f32.mrb[0].mxu0
        %v2928 = vadd.f32 %v665, %v2927
        %v2929 = vpop.f32.mrb[0].mxu0
        %v2930 = vpop.f32.mrb[0].mxu0
        %v2931 = vadd.f32 %v665, %v2930
        %v2932 = vpop.f32.mrb[0].mxu0
        %2933 = vmatprep.mubr.bf16.mxu0 0
        %2934 = vmatmul.mubr.bf16.gmra.mrb[0].mxu0 %v2821
        %v2935 = vpop.f32.mrb[0].mxu0
        %v2936 = vadd.f32 %v665, %v2935
        %v2937 = vpop.f32.mrb[0].mxu0
        %v2938 = vpop.f32.mrb[0].mxu0
        %v2939 = vadd.f32 %v665, %v2938
        %v2940 = vpop.f32.mrb[0].mxu0
        %2941 = vmatprep.mubr.bf16.mxu0 0
        %2942 = vmatmul.mubr.bf16.gmra.mrb[0].mxu0 %v2822
        %v2943 = vpop.f32.mrb[0].mxu0
        %v2944 = vadd.f32 %v665, %v2943
        %v2945 = vpop.f32.mrb[0].mxu0
        %v2946 = vpop.f32.mrb[0].mxu0
        %v2947 = vadd.f32 %v665, %v2946
        %v2948 = vpop.f32.mrb[0].mxu0
        %2949 = vmatprep.mubr.bf16.mxu0 0
        %2950 = vmatmul.mubr.bf16.gmra.mrb[0].mxu0 %v2823
        %v2951 = vpop.f32.mrb[0].mxu0
        %v2952 = vadd.f32 %v665, %v2951
        %v2953 = vpop.f32.mrb[0].mxu0
        %v2954 = vpop.f32.mrb[0].mxu0
        %v2955 = vadd.f32 %v665, %v2954
        %v2956 = vpop.f32.mrb[0].mxu0
        %2957 = vdwg.mxu0
        %v2958 = vpack.c.bf16 %v2931, %v2928
        %v2959 = vpack.c.bf16 %v2939, %v2936
        %v2960 = vpack.c.bf16 %v2947, %v2944
        %v2961 = vpack.c.bf16 %v2955, %v2952
        %v2962 = vmax.bf16 %v2889, 0
        %v2963 = vmax.bf16 %v2890, 0
        %v2964 = vmax.bf16 %v2891, 0
        %v2965 = vmax.bf16 %v2892, 0
        %v2966 = vmax.bf16 %v2958, 0
        %v2967 = vmax.bf16 %v2959, 0
        %v2968 = vmax.bf16 %v2960, 0
        %v2969 = vmax.bf16 %v2961, 0
        %2970 = vmatprep.subr.bf16.mxu0 0
        %2971 = vmatpush1.bf16.msra.mxu0 %v318
        %2972 = vmatprep.subr.bf16.mxu0 0
        %2973 = vmatpush1.bf16.msra.mxu0 %v319
        %2974 = vmatprep.subr.bf16.mxu0 0
        %2975 = vmatpush1.bf16.msra.mxu0 %v320
        %2976 = vmatprep.subr.bf16.mxu0 0
        %2977 = vmatpush1.bf16.msra.mxu0 %v321
        %2978 = vmatprep.subr.bf16.mxu0 0
        %2979 = vmatpush1.bf16.msra.mxu0 %v322
        %2980 = vmatprep.subr.bf16.mxu0 0
        %2981 = vmatpush1.bf16.msra.mxu0 %v323
        %2982 = vmatprep.subr.bf16.mxu0 0
        %2983 = vmatpush1.bf16.msra.mxu0 %v324
        %2984 = vmatprep.subr.bf16.mxu0 0
        %2985 = vmatpush1.bf16.msra.mxu0 %v325
        %2986 = vmatprep.subr.bf16.mxu0 0
        %2987 = vmatpush1.bf16.msra.mxu0 0
        %2988 = vmatprep.subr.bf16.mxu0 0
        %2989 = vmatpush1.bf16.msra.mxu0 0
        %2990 = vmatprep.subr.bf16.mxu0 0
        %2991 = vmatpush1.bf16.msra.mxu0 0
        %2992 = vmatprep.subr.bf16.mxu0 0
        %2993 = vmatpush1.bf16.msra.mxu0 0
        %2994 = vmatprep.subr.bf16.mxu0 0
        %2995 = vmatpush1.bf16.msra.mxu0 0
        %2996 = vmatprep.subr.bf16.mxu0 0
        %2997 = vmatpush1.bf16.msra.mxu0 0
        %2998 = vmatprep.subr.bf16.mxu0 0
        %2999 = vmatpush1.bf16.msra.mxu0 0
        %3000 = vmatprep.subr.bf16.mxu0 0
        %3001 = vmatpush1.bf16.msra.mxu0 0
        %3002 = vmatprep.mubr.bf16.mxu0 0
        %3003 = vmatmul.mubr.bf16.gmra.mrb[0].mxu0 %v2962
        %v3004 = vpop.f32.mrb[0].mxu0
        %v3005 = vadd.f32 %v285, %v3004
        %v3006 = vpop.f32.mrb[0].mxu0
        %v3007 = vpop.f32.mrb[0].mxu0
        %v3008 = vadd.f32 %v285, %v3007
        %v3009 = vpop.f32.mrb[0].mxu0
        %3010 = vmatprep.mubr.bf16.mxu0 0
        %3011 = vmatmul.mubr.bf16.gmra.mrb[0].mxu0 %v2963
        %v3012 = vpop.f32.mrb[0].mxu0
        %v3013 = vadd.f32 %v285, %v3012
        %v3014 = vpop.f32.mrb[0].mxu0
        %v3015 = vpop.f32.mrb[0].mxu0
        %v3016 = vadd.f32 %v285, %v3015
        %v3017 = vpop.f32.mrb[0].mxu0
        %3018 = vmatprep.mubr.bf16.mxu0 0
        %3019 = vmatmul.mubr.bf16.gmra.mrb[0].mxu0 %v2964
        %v3020 = vpop.f32.mrb[0].mxu0
        %v3021 = vadd.f32 %v285, %v3020
        %v3022 = vpop.f32.mrb[0].mxu0
        %v3023 = vpop.f32.mrb[0].mxu0
        %v3024 = vadd.f32 %v285, %v3023
        %v3025 = vpop.f32.mrb[0].mxu0
        %3026 = vmatprep.mubr.bf16.mxu0 0
        %3027 = vmatmul.mubr.bf16.gmra.mrb[0].mxu0 %v2965
        %v3028 = vpop.f32.mrb[0].mxu0
        %v3029 = vadd.f32 %v285, %v3028
        %v3030 = vpop.f32.mrb[0].mxu0
        %v3031 = vpop.f32.mrb[0].mxu0
        %v3032 = vadd.f32 %v285, %v3031
        %v3033 = vpop.f32.mrb[0].mxu0
        %3034 = vdwg.mxu0
        %v3035 = vpack.c.bf16 %v3008, %v3005
        %v3036 = vpack.c.bf16 %v3016, %v3013
        %v3037 = vpack.c.bf16 %v3024, %v3021
        %v3038 = vpack.c.bf16 %v3032, %v3029
        %3039 = vmatprep.subr.bf16.mxu0 0
        %3040 = vmatpush1.bf16.msra.mxu0 %v318
        %3041 = vmatprep.subr.bf16.mxu0 0
        %3042 = vmatpush1.bf16.msra.mxu0 %v319
        %3043 = vmatprep.subr.bf16.mxu0 0
        %3044 = vmatpush1.bf16.msra.mxu0 %v320
        %3045 = vmatprep.subr.bf16.mxu0 0
        %3046 = vmatpush1.bf16.msra.mxu0 %v321
        %3047 = vmatprep.subr.bf16.mxu0 0
        %3048 = vmatpush1.bf16.msra.mxu0 %v322
        %3049 = vmatprep.subr.bf16.mxu0 0
        %3050 = vmatpush1.bf16.msra.mxu0 %v323
        %3051 = vmatprep.subr.bf16.mxu0 0
        %3052 = vmatpush1.bf16.msra.mxu0 %v324
        %3053 = vmatprep.subr.bf16.mxu0 0
        %3054 = vmatpush1.bf16.msra.mxu0 %v325
        %3055 = vmatprep.subr.bf16.mxu0 0
        %3056 = vmatpush1.bf16.msra.mxu0 0
        %3057 = vmatprep.subr.bf16.mxu0 0
        %3058 = vmatpush1.bf16.msra.mxu0 0
        %3059 = vmatprep.subr.bf16.mxu0 0
        %3060 = vmatpush1.bf16.msra.mxu0 0
        %3061 = vmatprep.subr.bf16.mxu0 0
        %3062 = vmatpush1.bf16.msra.mxu0 0
        %3063 = vmatprep.subr.bf16.mxu0 0
        %3064 = vmatpush1.bf16.msra.mxu0 0
        %3065 = vmatprep.subr.bf16.mxu0 0
        %3066 = vmatpush1.bf16.msra.mxu0 0
        %3067 = vmatprep.subr.bf16.mxu0 0
        %3068 = vmatpush1.bf16.msra.mxu0 0
        %3069 = vmatprep.subr.bf16.mxu0 0
        %3070 = vmatpush1.bf16.msra.mxu0 0
        %3071 = vmatprep.mubr.bf16.mxu0 0
        %3072 = vmatmul.mubr.bf16.gmra.mrb[0].mxu0 %v2966
        %v3073 = vpop.f32.mrb[0].mxu0
        %v3074 = vadd.f32 %v285, %v3073
        %v3075 = vpop.f32.mrb[0].mxu0
        %v3076 = vpop.f32.mrb[0].mxu0
        %v3077 = vadd.f32 %v285, %v3076
        %v3078 = vpop.f32.mrb[0].mxu0
        %3079 = vmatprep.mubr.bf16.mxu0 0
        %3080 = vmatmul.mubr.bf16.gmra.mrb[0].mxu0 %v2967
        %v3081 = vpop.f32.mrb[0].mxu0
        %v3082 = vadd.f32 %v285, %v3081
        %v3083 = vpop.f32.mrb[0].mxu0
        %v3084 = vpop.f32.mrb[0].mxu0
        %v3085 = vadd.f32 %v285, %v3084
        %v3086 = vpop.f32.mrb[0].mxu0
        %3087 = vmatprep.mubr.bf16.mxu0 0
        %3088 = vmatmul.mubr.bf16.gmra.mrb[0].mxu0 %v2968
        %v3089 = vpop.f32.mrb[0].mxu0
        %v3090 = vadd.f32 %v285, %v3089
        %v3091 = vpop.f32.mrb[0].mxu0
        %v3092 = vpop.f32.mrb[0].mxu0
        %v3093 = vadd.f32 %v285, %v3092
        %v3094 = vpop.f32.mrb[0].mxu0
        %3095 = vmatprep.mubr.bf16.mxu0 0
        %3096 = vmatmul.mubr.bf16.gmra.mrb[0].mxu0 %v2969
        %v3097 = vpop.f32.mrb[0].mxu0
        %v3098 = vadd.f32 %v285, %v3097
        %v3099 = vpop.f32.mrb[0].mxu0
        %v3100 = vpop.f32.mrb[0].mxu0
        %v3101 = vadd.f32 %v285, %v3100
        %v3102 = vpop.f32.mrb[0].mxu0
        %3103 = vdwg.mxu0
        %v3104 = vpack.c.bf16 %v3077, %v3074
        %v3105 = vpack.c.bf16 %v3085, %v3082
        %v3106 = vpack.c.bf16 %v3093, %v3090
        %v3107 = vpack.c.bf16 %v3101, %v3098
        %3108 = vmatprep.subr.bf16.mxu0 0
        %3109 = vmatpush1.bf16.msra.mxu0 %v508
        %3110 = vmatprep.subr.bf16.mxu0 0
        %3111 = vmatpush1.bf16.msra.mxu0 %v509
        %3112 = vmatprep.subr.bf16.mxu0 0
        %3113 = vmatpush1.bf16.msra.mxu0 %v510
        %3114 = vmatprep.subr.bf16.mxu0 0
        %3115 = vmatpush1.bf16.msra.mxu0 %v511
        %3116 = vmatprep.subr.bf16.mxu0 0
        %3117 = vmatpush1.bf16.msra.mxu0 %v512
        %3118 = vmatprep.subr.bf16.mxu0 0
        %3119 = vmatpush1.bf16.msra.mxu0 %v513
        %3120 = vmatprep.subr.bf16.mxu0 0
        %3121 = vmatpush1.bf16.msra.mxu0 %v514
        %3122 = vmatprep.subr.bf16.mxu0 0
        %3123 = vmatpush1.bf16.msra.mxu0 %v515
        %3124 = vmatprep.subr.bf16.mxu0 0
        %3125 = vmatpush1.bf16.msra.mxu0 0
        %3126 = vmatprep.subr.bf16.mxu0 0
        %3127 = vmatpush1.bf16.msra.mxu0 0
        %3128 = vmatprep.subr.bf16.mxu0 0
        %3129 = vmatpush1.bf16.msra.mxu0 0
        %3130 = vmatprep.subr.bf16.mxu0 0
        %3131 = vmatpush1.bf16.msra.mxu0 0
        %3132 = vmatprep.subr.bf16.mxu0 0
        %3133 = vmatpush1.bf16.msra.mxu0 0
        %3134 = vmatprep.subr.bf16.mxu0 0
        %3135 = vmatpush1.bf16.msra.mxu0 0
        %3136 = vmatprep.subr.bf16.mxu0 0
        %3137 = vmatpush1.bf16.msra.mxu0 0
        %3138 = vmatprep.subr.bf16.mxu0 0
        %3139 = vmatpush1.bf16.msra.mxu0 0
        %3140 = vmatprep.mubr.bf16.mxu0 0
        %3141 = vmatmul.mubr.bf16.gmra.mrb[0].mxu0 %v3035
        %v3142 = vpop.f32.mrb[0].mxu0
        %v3143 = vadd.f32 %v475, %v3142
        %v3144 = vpop.f32.mrb[0].mxu0
        %v3145 = vpop.f32.mrb[0].mxu0
        %v3146 = vadd.f32 %v475, %v3145
        %v3147 = vpop.f32.mrb[0].mxu0
        %3148 = vmatprep.mubr.bf16.mxu0 0
        %3149 = vmatmul.mubr.bf16.gmra.mrb[0].mxu0 %v3036
        %v3150 = vpop.f32.mrb[0].mxu0
        %v3151 = vadd.f32 %v475, %v3150
        %v3152 = vpop.f32.mrb[0].mxu0
        %v3153 = vpop.f32.mrb[0].mxu0
        %v3154 = vadd.f32 %v475, %v3153
        %v3155 = vpop.f32.mrb[0].mxu0
        %3156 = vmatprep.mubr.bf16.mxu0 0
        %3157 = vmatmul.mubr.bf16.gmra.mrb[0].mxu0 %v3037
        %v3158 = vpop.f32.mrb[0].mxu0
        %v3159 = vadd.f32 %v475, %v3158
        %v3160 = vpop.f32.mrb[0].mxu0
        %v3161 = vpop.f32.mrb[0].mxu0
        %v3162 = vadd.f32 %v475, %v3161
        %v3163 = vpop.f32.mrb[0].mxu0
        %3164 = vmatprep.mubr.bf16.mxu0 0
        %3165 = vmatmul.mubr.bf16.gmra.mrb[0].mxu0 %v3038
        %v3166 = vpop.f32.mrb[0].mxu0
        %v3167 = vadd.f32 %v475, %v3166
        %v3168 = vpop.f32.mrb[0].mxu0
        %v3169 = vpop.f32.mrb[0].mxu0
        %v3170 = vadd.f32 %v475, %v3169
        %v3171 = vpop.f32.mrb[0].mxu0
        %3172 = vdwg.mxu0
        %v3173 = vpack.c.bf16 %v3146, %v3143
        %v3174 = vpack.c.bf16 %v3154, %v3151
        %v3175 = vpack.c.bf16 %v3162, %v3159
        %v3176 = vpack.c.bf16 %v3170, %v3167
        %3177 = vmatprep.subr.bf16.mxu0 0
        %3178 = vmatpush1.bf16.msra.mxu0 %v508
        %3179 = vmatprep.subr.bf16.mxu0 0
        %3180 = vmatpush1.bf16.msra.mxu0 %v509
        %3181 = vmatprep.subr.bf16.mxu0 0
        %3182 = vmatpush1.bf16.msra.mxu0 %v510
        %3183 = vmatprep.subr.bf16.mxu0 0
        %3184 = vmatpush1.bf16.msra.mxu0 %v511
        %3185 = vmatprep.subr.bf16.mxu0 0
        %3186 = vmatpush1.bf16.msra.mxu0 %v512
        %3187 = vmatprep.subr.bf16.mxu0 0
        %3188 = vmatpush1.bf16.msra.mxu0 %v513
        %3189 = vmatprep.subr.bf16.mxu0 0
        %3190 = vmatpush1.bf16.msra.mxu0 %v514
        %3191 = vmatprep.subr.bf16.mxu0 0
        %3192 = vmatpush1.bf16.msra.mxu0 %v515
        %3193 = vmatprep.subr.bf16.mxu0 0
        %3194 = vmatpush1.bf16.msra.mxu0 0
        %3195 = vmatprep.subr.bf16.mxu0 0
        %3196 = vmatpush1.bf16.msra.mxu0 0
        %3197 = vmatprep.subr.bf16.mxu0 0
        %3198 = vmatpush1.bf16.msra.mxu0 0
        %3199 = vmatprep.subr.bf16.mxu0 0
        %3200 = vmatpush1.bf16.msra.mxu0 0
        %3201 = vmatprep.subr.bf16.mxu0 0
        %3202 = vmatpush1.bf16.msra.mxu0 0
        %3203 = vmatprep.subr.bf16.mxu0 0
        %3204 = vmatpush1.bf16.msra.mxu0 0
        %3205 = vmatprep.subr.bf16.mxu0 0
        %3206 = vmatpush1.bf16.msra.mxu0 0
        %3207 = vmatprep.subr.bf16.mxu0 0
        %3208 = vmatpush1.bf16.msra.mxu0 0
        %3209 = vmatprep.mubr.bf16.mxu0 0
        %3210 = vmatmul.mubr.bf16.gmra.mrb[0].mxu0 %v3104
        %v3211 = vpop.f32.mrb[0].mxu0
        %v3212 = vadd.f32 %v475, %v3211
        %v3213 = vpop.f32.mrb[0].mxu0
        %v3214 = vpop.f32.mrb[0].mxu0
        %v3215 = vadd.f32 %v475, %v3214
        %v3216 = vpop.f32.mrb[0].mxu0
        %3217 = vmatprep.mubr.bf16.mxu0 0
        %3218 = vmatmul.mubr.bf16.gmra.mrb[0].mxu0 %v3105
        %v3219 = vpop.f32.mrb[0].mxu0
        %v3220 = vadd.f32 %v475, %v3219
        %v3221 = vpop.f32.mrb[0].mxu0
        %v3222 = vpop.f32.mrb[0].mxu0
        %v3223 = vadd.f32 %v475, %v3222
        %v3224 = vpop.f32.mrb[0].mxu0
        %3225 = vmatprep.mubr.bf16.mxu0 0
        %3226 = vmatmul.mubr.bf16.gmra.mrb[0].mxu0 %v3106
        %v3227 = vpop.f32.mrb[0].mxu0
        %v3228 = vadd.f32 %v475, %v3227
        %v3229 = vpop.f32.mrb[0].mxu0
        %v3230 = vpop.f32.mrb[0].mxu0
        %v3231 = vadd.f32 %v475, %v3230
        %v3232 = vpop.f32.mrb[0].mxu0
        %3233 = vmatprep.mubr.bf16.mxu0 0
        %3234 = vmatmul.mubr.bf16.gmra.mrb[0].mxu0 %v3107
        %v3235 = vpop.f32.mrb[0].mxu0
        %v3236 = vadd.f32 %v475, %v3235
        %v3237 = vpop.f32.mrb[0].mxu0
        %v3238 = vpop.f32.mrb[0].mxu0
        %v3239 = vadd.f32 %v475, %v3238
        %v3240 = vpop.f32.mrb[0].mxu0
        %3241 = vdwg.mxu0
        %v3242 = vpack.c.bf16 %v3215, %v3212
        %v3243 = vpack.c.bf16 %v3223, %v3220
        %v3244 = vpack.c.bf16 %v3231, %v3228
        %v3245 = vpack.c.bf16 %v3239, %v3236
        %3246 = vmatprep.subr.bf16.mxu0 0
        %3247 = vmatpush1.bf16.msra.mxu0 %v698
        %3248 = vmatprep.subr.bf16.mxu0 0
        %3249 = vmatpush1.bf16.msra.mxu0 %v699
        %3250 = vmatprep.subr.bf16.mxu0 0
        %3251 = vmatpush1.bf16.msra.mxu0 %v700
        %3252 = vmatprep.subr.bf16.mxu0 0
        %3253 = vmatpush1.bf16.msra.mxu0 %v701
        %3254 = vmatprep.subr.bf16.mxu0 0
        %3255 = vmatpush1.bf16.msra.mxu0 %v702
        %3256 = vmatprep.subr.bf16.mxu0 0
        %3257 = vmatpush1.bf16.msra.mxu0 %v703
        %3258 = vmatprep.subr.bf16.mxu0 0
        %3259 = vmatpush1.bf16.msra.mxu0 %v704
        %3260 = vmatprep.subr.bf16.mxu0 0
        %3261 = vmatpush1.bf16.msra.mxu0 %v705
        %3262 = vmatprep.subr.bf16.mxu0 0
        %3263 = vmatpush1.bf16.msra.mxu0 0
        %3264 = vmatprep.subr.bf16.mxu0 0
        %3265 = vmatpush1.bf16.msra.mxu0 0
        %3266 = vmatprep.subr.bf16.mxu0 0
        %3267 = vmatpush1.bf16.msra.mxu0 0
        %3268 = vmatprep.subr.bf16.mxu0 0
        %3269 = vmatpush1.bf16.msra.mxu0 0
        %3270 = vmatprep.subr.bf16.mxu0 0
        %3271 = vmatpush1.bf16.msra.mxu0 0
        %3272 = vmatprep.subr.bf16.mxu0 0
        %3273 = vmatpush1.bf16.msra.mxu0 0
        %3274 = vmatprep.subr.bf16.mxu0 0
        %3275 = vmatpush1.bf16.msra.mxu0 0
        %3276 = vmatprep.subr.bf16.mxu0 0
        %3277 = vmatpush1.bf16.msra.mxu0 0
        %3278 = vmatprep.mubr.bf16.mxu0 0
        %3279 = vmatmul.mubr.bf16.gmra.mrb[0].mxu0 %v3173
        %v3280 = vpop.f32.mrb[0].mxu0
        %v3281 = vadd.f32 %v665, %v3280
        %v3282 = vpop.f32.mrb[0].mxu0
        %v3283 = vpop.f32.mrb[0].mxu0
        %v3284 = vadd.f32 %v665, %v3283
        %v3285 = vpop.f32.mrb[0].mxu0
        %3286 = vmatprep.mubr.bf16.mxu0 0
        %3287 = vmatmul.mubr.bf16.gmra.mrb[0].mxu0 %v3174
        %v3288 = vpop.f32.mrb[0].mxu0
        %v3289 = vadd.f32 %v665, %v3288
        %v3290 = vpop.f32.mrb[0].mxu0
        %v3291 = vpop.f32.mrb[0].mxu0
        %v3292 = vadd.f32 %v665, %v3291
        %v3293 = vpop.f32.mrb[0].mxu0
        %3294 = vmatprep.mubr.bf16.mxu0 0
        %3295 = vmatmul.mubr.bf16.gmra.mrb[0].mxu0 %v3175
        %v3296 = vpop.f32.mrb[0].mxu0
        %v3297 = vadd.f32 %v665, %v3296
        %v3298 = vpop.f32.mrb[0].mxu0
        %v3299 = vpop.f32.mrb[0].mxu0
        %v3300 = vadd.f32 %v665, %v3299
        %v3301 = vpop.f32.mrb[0].mxu0
        %3302 = vmatprep.mubr.bf16.mxu0 0
        %3303 = vmatmul.mubr.bf16.gmra.mrb[0].mxu0 %v3176
        %v3304 = vpop.f32.mrb[0].mxu0
        %v3305 = vadd.f32 %v665, %v3304
        %v3306 = vpop.f32.mrb[0].mxu0
        %v3307 = vpop.f32.mrb[0].mxu0
        %v3308 = vadd.f32 %v665, %v3307
        %v3309 = vpop.f32.mrb[0].mxu0
        %3310 = vdwg.mxu0
        %v3311 = vpack.c.bf16 %v3284, %v3281
        %v3312 = vpack.c.bf16 %v3292, %v3289
        %v3313 = vpack.c.bf16 %v3300, %v3297
        %v3314 = vpack.c.bf16 %v3308, %v3305
        %3315 = vmatprep.subr.bf16.mxu0 0
        %3316 = vmatpush1.bf16.msra.mxu0 %v698
        %3317 = vmatprep.subr.bf16.mxu0 0
        %3318 = vmatpush1.bf16.msra.mxu0 %v699
        %3319 = vmatprep.subr.bf16.mxu0 0
        %3320 = vmatpush1.bf16.msra.mxu0 %v700
        %3321 = vmatprep.subr.bf16.mxu0 0
        %3322 = vmatpush1.bf16.msra.mxu0 %v701
        %3323 = vmatprep.subr.bf16.mxu0 0
        %3324 = vmatpush1.bf16.msra.mxu0 %v702
        %3325 = vmatprep.subr.bf16.mxu0 0
        %3326 = vmatpush1.bf16.msra.mxu0 %v703
        %3327 = vmatprep.subr.bf16.mxu0 0
        %3328 = vmatpush1.bf16.msra.mxu0 %v704
        %3329 = vmatprep.subr.bf16.mxu0 0
        %3330 = vmatpush1.bf16.msra.mxu0 %v705
        %3331 = vmatprep.subr.bf16.mxu0 0
        %3332 = vmatpush1.bf16.msra.mxu0 0
        %3333 = vmatprep.subr.bf16.mxu0 0
        %3334 = vmatpush1.bf16.msra.mxu0 0
        %3335 = vmatprep.subr.bf16.mxu0 0
        %3336 = vmatpush1.bf16.msra.mxu0 0
        %3337 = vmatprep.subr.bf16.mxu0 0
        %3338 = vmatpush1.bf16.msra.mxu0 0
        %3339 = vmatprep.subr.bf16.mxu0 0
        %3340 = vmatpush1.bf16.msra.mxu0 0
        %3341 = vmatprep.subr.bf16.mxu0 0
        %3342 = vmatpush1.bf16.msra.mxu0 0
        %3343 = vmatprep.subr.bf16.mxu0 0
        %3344 = vmatpush1.bf16.msra.mxu0 0
        %3345 = vmatprep.subr.bf16.mxu0 0
        %3346 = vmatpush1.bf16.msra.mxu0 0
        %3347 = vmatprep.mubr.bf16.mxu0 0
        %3348 = vmatmul.mubr.bf16.gmra.mrb[0].mxu0 %v3242
        %v3349 = vpop.f32.mrb[0].mxu0
        %v3350 = vadd.f32 %v665, %v3349
        %v3351 = vpop.f32.mrb[0].mxu0
        %v3352 = vpop.f32.mrb[0].mxu0
        %v3353 = vadd.f32 %v665, %v3352
        %v3354 = vpop.f32.mrb[0].mxu0
        %3355 = vmatprep.mubr.bf16.mxu0 0
        %3356 = vmatmul.mubr.bf16.gmra.mrb[0].mxu0 %v3243
        %v3357 = vpop.f32.mrb[0].mxu0
        %v3358 = vadd.f32 %v665, %v3357
        %v3359 = vpop.f32.mrb[0].mxu0
        %v3360 = vpop.f32.mrb[0].mxu0
        %v3361 = vadd.f32 %v665, %v3360
        %v3362 = vpop.f32.mrb[0].mxu0
        %3363 = vmatprep.mubr.bf16.mxu0 0
        %3364 = vmatmul.mubr.bf16.gmra.mrb[0].mxu0 %v3244
        %v3365 = vpop.f32.mrb[0].mxu0
        %v3366 = vadd.f32 %v665, %v3365
        %v3367 = vpop.f32.mrb[0].mxu0
        %v3368 = vpop.f32.mrb[0].mxu0
        %v3369 = vadd.f32 %v665, %v3368
        %v3370 = vpop.f32.mrb[0].mxu0
        %3371 = vmatprep.mubr.bf16.mxu0 0
        %3372 = vmatmul.mubr.bf16.gmra.mrb[0].mxu0 %v3245
        %v3373 = vpop.f32.mrb[0].mxu0
        %v3374 = vadd.f32 %v665, %v3373
        %v3375 = vpop.f32.mrb[0].mxu0
        %v3376 = vpop.f32.mrb[0].mxu0
        %v3377 = vadd.f32 %v665, %v3376
        %v3378 = vpop.f32.mrb[0].mxu0
        %3379 = vdwg.mxu0
        %v3380 = vpack.c.bf16 %v3353, %v3350
        %v3381 = vpack.c.bf16 %v3361, %v3358
        %v3382 = vpack.c.bf16 %v3369, %v3366
        %v3383 = vpack.c.bf16 %v3377, %v3374
        %v3384 = vmax.bf16 %v3311, 0
        %v3385 = vmax.bf16 %v3312, 0
        %v3386 = vmax.bf16 %v3313, 0
        %v3387 = vmax.bf16 %v3314, 0
        %v3388 = vmax.bf16 %v3380, 0
        %v3389 = vmax.bf16 %v3381, 0
        %v3390 = vmax.bf16 %v3382, 0
        %v3391 = vmax.bf16 %v3383, 0
        %3392 = vmatprep.subr.bf16.mxu0 0
        %3393 = vmatpush1.bf16.msra.mxu0 %v318
        %3394 = vmatprep.subr.bf16.mxu0 0
        %3395 = vmatpush1.bf16.msra.mxu0 %v319
        %3396 = vmatprep.subr.bf16.mxu0 0
        %3397 = vmatpush1.bf16.msra.mxu0 %v320
        %3398 = vmatprep.subr.bf16.mxu0 0
        %3399 = vmatpush1.bf16.msra.mxu0 %v321
        %3400 = vmatprep.subr.bf16.mxu0 0
        %3401 = vmatpush1.bf16.msra.mxu0 %v322
        %3402 = vmatprep.subr.bf16.mxu0 0
        %3403 = vmatpush1.bf16.msra.mxu0 %v323
        %3404 = vmatprep.subr.bf16.mxu0 0
        %3405 = vmatpush1.bf16.msra.mxu0 %v324
        %3406 = vmatprep.subr.bf16.mxu0 0
        %3407 = vmatpush1.bf16.msra.mxu0 %v325
        %3408 = vmatprep.subr.bf16.mxu0 0
        %3409 = vmatpush1.bf16.msra.mxu0 0
        %3410 = vmatprep.subr.bf16.mxu0 0
        %3411 = vmatpush1.bf16.msra.mxu0 0
        %3412 = vmatprep.subr.bf16.mxu0 0
        %3413 = vmatpush1.bf16.msra.mxu0 0
        %3414 = vmatprep.subr.bf16.mxu0 0
        %3415 = vmatpush1.bf16.msra.mxu0 0
        %3416 = vmatprep.subr.bf16.mxu0 0
        %3417 = vmatpush1.bf16.msra.mxu0 0
        %3418 = vmatprep.subr.bf16.mxu0 0
        %3419 = vmatpush1.bf16.msra.mxu0 0
        %3420 = vmatprep.subr.bf16.mxu0 0
        %3421 = vmatpush1.bf16.msra.mxu0 0
        %3422 = vmatprep.subr.bf16.mxu0 0
        %3423 = vmatpush1.bf16.msra.mxu0 0
        %3424 = vmatprep.mubr.bf16.mxu0 0
        %3425 = vmatmul.mubr.bf16.gmra.mrb[0].mxu0 %v3384
        %v3426 = vpop.f32.mrb[0].mxu0
        %v3427 = vadd.f32 %v285, %v3426
        %v3428 = vpop.f32.mrb[0].mxu0
        %v3429 = vpop.f32.mrb[0].mxu0
        %v3430 = vadd.f32 %v285, %v3429
        %v3431 = vpop.f32.mrb[0].mxu0
        %3432 = vmatprep.mubr.bf16.mxu0 0
        %3433 = vmatmul.mubr.bf16.gmra.mrb[0].mxu0 %v3385
        %v3434 = vpop.f32.mrb[0].mxu0
        %v3435 = vadd.f32 %v285, %v3434
        %v3436 = vpop.f32.mrb[0].mxu0
        %v3437 = vpop.f32.mrb[0].mxu0
        %v3438 = vadd.f32 %v285, %v3437
        %v3439 = vpop.f32.mrb[0].mxu0
        %3440 = vmatprep.mubr.bf16.mxu0 0
        %3441 = vmatmul.mubr.bf16.gmra.mrb[0].mxu0 %v3386
        %v3442 = vpop.f32.mrb[0].mxu0
        %v3443 = vadd.f32 %v285, %v3442
        %v3444 = vpop.f32.mrb[0].mxu0
        %v3445 = vpop.f32.mrb[0].mxu0
        %v3446 = vadd.f32 %v285, %v3445
        %v3447 = vpop.f32.mrb[0].mxu0
        %3448 = vmatprep.mubr.bf16.mxu0 0
        %3449 = vmatmul.mubr.bf16.gmra.mrb[0].mxu0 %v3387
        %v3450 = vpop.f32.mrb[0].mxu0
        %v3451 = vadd.f32 %v285, %v3450
        %v3452 = vpop.f32.mrb[0].mxu0
        %v3453 = vpop.f32.mrb[0].mxu0
        %v3454 = vadd.f32 %v285, %v3453
        %v3455 = vpop.f32.mrb[0].mxu0
        %3456 = vdwg.mxu0
        %v3457 = vpack.c.bf16 %v3430, %v3427
        %v3458 = vpack.c.bf16 %v3438, %v3435
        %v3459 = vpack.c.bf16 %v3446, %v3443
        %v3460 = vpack.c.bf16 %v3454, %v3451
        %3461 = vmatprep.subr.bf16.mxu0 0
        %3462 = vmatpush1.bf16.msra.mxu0 %v318
        %3463 = vmatprep.subr.bf16.mxu0 0
        %3464 = vmatpush1.bf16.msra.mxu0 %v319
        %3465 = vmatprep.subr.bf16.mxu0 0
        %3466 = vmatpush1.bf16.msra.mxu0 %v320
        %3467 = vmatprep.subr.bf16.mxu0 0
        %3468 = vmatpush1.bf16.msra.mxu0 %v321
        %3469 = vmatprep.subr.bf16.mxu0 0
        %3470 = vmatpush1.bf16.msra.mxu0 %v322
        %3471 = vmatprep.subr.bf16.mxu0 0
        %3472 = vmatpush1.bf16.msra.mxu0 %v323
        %3473 = vmatprep.subr.bf16.mxu0 0
        %3474 = vmatpush1.bf16.msra.mxu0 %v324
        %3475 = vmatprep.subr.bf16.mxu0 0
        %3476 = vmatpush1.bf16.msra.mxu0 %v325
        %3477 = vmatprep.subr.bf16.mxu0 0
        %3478 = vmatpush1.bf16.msra.mxu0 0
        %3479 = vmatprep.subr.bf16.mxu0 0
        %3480 = vmatpush1.bf16.msra.mxu0 0
        %3481 = vmatprep.subr.bf16.mxu0 0
        %3482 = vmatpush1.bf16.msra.mxu0 0
        %3483 = vmatprep.subr.bf16.mxu0 0
        %3484 = vmatpush1.bf16.msra.mxu0 0
        %3485 = vmatprep.subr.bf16.mxu0 0
        %3486 = vmatpush1.bf16.msra.mxu0 0
        %3487 = vmatprep.subr.bf16.mxu0 0
        %3488 = vmatpush1.bf16.msra.mxu0 0
        %3489 = vmatprep.subr.bf16.mxu0 0
        %3490 = vmatpush1.bf16.msra.mxu0 0
        %3491 = vmatprep.subr.bf16.mxu0 0
        %3492 = vmatpush1.bf16.msra.mxu0 0
        %3493 = vmatprep.mubr.bf16.mxu0 0
        %3494 = vmatmul.mubr.bf16.gmra.mrb[0].mxu0 %v3388
        %v3495 = vpop.f32.mrb[0].mxu0
        %v3496 = vadd.f32 %v285, %v3495
        %v3497 = vpop.f32.mrb[0].mxu0
        %v3498 = vpop.f32.mrb[0].mxu0
        %v3499 = vadd.f32 %v285, %v3498
        %v3500 = vpop.f32.mrb[0].mxu0
        %3501 = vmatprep.mubr.bf16.mxu0 0
        %3502 = vmatmul.mubr.bf16.gmra.mrb[0].mxu0 %v3389
        %v3503 = vpop.f32.mrb[0].mxu0
        %v3504 = vadd.f32 %v285, %v3503
        %v3505 = vpop.f32.mrb[0].mxu0
        %v3506 = vpop.f32.mrb[0].mxu0
        %v3507 = vadd.f32 %v285, %v3506
        %v3508 = vpop.f32.mrb[0].mxu0
        %3509 = vmatprep.mubr.bf16.mxu0 0
        %3510 = vmatmul.mubr.bf16.gmra.mrb[0].mxu0 %v3390
        %v3511 = vpop.f32.mrb[0].mxu0
        %v3512 = vadd.f32 %v285, %v3511
        %v3513 = vpop.f32.mrb[0].mxu0
        %v3514 = vpop.f32.mrb[0].mxu0
        %v3515 = vadd.f32 %v285, %v3514
        %v3516 = vpop.f32.mrb[0].mxu0
        %3517 = vmatprep.mubr.bf16.mxu0 0
        %3518 = vmatmul.mubr.bf16.gmra.mrb[0].mxu0 %v3391
        %v3519 = vpop.f32.mrb[0].mxu0
        %v3520 = vadd.f32 %v285, %v3519
        %v3521 = vpop.f32.mrb[0].mxu0
        %v3522 = vpop.f32.mrb[0].mxu0
        %v3523 = vadd.f32 %v285, %v3522
        %v3524 = vpop.f32.mrb[0].mxu0
        %3525 = vdwg.mxu0
        %v3526 = vpack.c.bf16 %v3499, %v3496
        %v3527 = vpack.c.bf16 %v3507, %v3504
        %v3528 = vpack.c.bf16 %v3515, %v3512
        %v3529 = vpack.c.bf16 %v3523, %v3520
        %3530 = vmatprep.subr.bf16.mxu0 0
        %3531 = vmatpush1.bf16.msra.mxu0 %v508
        %3532 = vmatprep.subr.bf16.mxu0 0
        %3533 = vmatpush1.bf16.msra.mxu0 %v509
        %3534 = vmatprep.subr.bf16.mxu0 0
        %3535 = vmatpush1.bf16.msra.mxu0 %v510
        %3536 = vmatprep.subr.bf16.mxu0 0
        %3537 = vmatpush1.bf16.msra.mxu0 %v511
        %3538 = vmatprep.subr.bf16.mxu0 0
        %3539 = vmatpush1.bf16.msra.mxu0 %v512
        %3540 = vmatprep.subr.bf16.mxu0 0
        %3541 = vmatpush1.bf16.msra.mxu0 %v513
        %3542 = vmatprep.subr.bf16.mxu0 0
        %3543 = vmatpush1.bf16.msra.mxu0 %v514
        %3544 = vmatprep.subr.bf16.mxu0 0
        %3545 = vmatpush1.bf16.msra.mxu0 %v515
        %3546 = vmatprep.subr.bf16.mxu0 0
        %3547 = vmatpush1.bf16.msra.mxu0 0
        %3548 = vmatprep.subr.bf16.mxu0 0
        %3549 = vmatpush1.bf16.msra.mxu0 0
        %3550 = vmatprep.subr.bf16.mxu0 0
        %3551 = vmatpush1.bf16.msra.mxu0 0
        %3552 = vmatprep.subr.bf16.mxu0 0
        %3553 = vmatpush1.bf16.msra.mxu0 0
        %3554 = vmatprep.subr.bf16.mxu0 0
        %3555 = vmatpush1.bf16.msra.mxu0 0
        %3556 = vmatprep.subr.bf16.mxu0 0
        %3557 = vmatpush1.bf16.msra.mxu0 0
        %3558 = vmatprep.subr.bf16.mxu0 0
        %3559 = vmatpush1.bf16.msra.mxu0 0
        %3560 = vmatprep.subr.bf16.mxu0 0
        %3561 = vmatpush1.bf16.msra.mxu0 0
        %3562 = vmatprep.mubr.bf16.mxu0 0
        %3563 = vmatmul.mubr.bf16.gmra.mrb[0].mxu0 %v3457
        %v3564 = vpop.f32.mrb[0].mxu0
        %v3565 = vadd.f32 %v475, %v3564
        %v3566 = vpop.f32.mrb[0].mxu0
        %v3567 = vpop.f32.mrb[0].mxu0
        %v3568 = vadd.f32 %v475, %v3567
        %v3569 = vpop.f32.mrb[0].mxu0
        %3570 = vmatprep.mubr.bf16.mxu0 0
        %3571 = vmatmul.mubr.bf16.gmra.mrb[0].mxu0 %v3458
        %v3572 = vpop.f32.mrb[0].mxu0
        %v3573 = vadd.f32 %v475, %v3572
        %v3574 = vpop.f32.mrb[0].mxu0
        %v3575 = vpop.f32.mrb[0].mxu0
        %v3576 = vadd.f32 %v475, %v3575
        %v3577 = vpop.f32.mrb[0].mxu0
        %3578 = vmatprep.mubr.bf16.mxu0 0
        %3579 = vmatmul.mubr.bf16.gmra.mrb[0].mxu0 %v3459
        %v3580 = vpop.f32.mrb[0].mxu0
        %v3581 = vadd.f32 %v475, %v3580
        %v3582 = vpop.f32.mrb[0].mxu0
        %v3583 = vpop.f32.mrb[0].mxu0
        %v3584 = vadd.f32 %v475, %v3583
        %v3585 = vpop.f32.mrb[0].mxu0
        %3586 = vmatprep.mubr.bf16.mxu0 0
        %3587 = vmatmul.mubr.bf16.gmra.mrb[0].mxu0 %v3460
        %v3588 = vpop.f32.mrb[0].mxu0
        %v3589 = vadd.f32 %v475, %v3588
        %v3590 = vpop.f32.mrb[0].mxu0
        %v3591 = vpop.f32.mrb[0].mxu0
        %v3592 = vadd.f32 %v475, %v3591
        %v3593 = vpop.f32.mrb[0].mxu0
        %3594 = vdwg.mxu0
        %v3595 = vpack.c.bf16 %v3568, %v3565
        %v3596 = vpack.c.bf16 %v3576, %v3573
        %v3597 = vpack.c.bf16 %v3584, %v3581
        %v3598 = vpack.c.bf16 %v3592, %v3589
        %3599 = vmatprep.subr.bf16.mxu0 0
        %3600 = vmatpush1.bf16.msra.mxu0 %v508
        %3601 = vmatprep.subr.bf16.mxu0 0
        %3602 = vmatpush1.bf16.msra.mxu0 %v509
        %3603 = vmatprep.subr.bf16.mxu0 0
        %3604 = vmatpush1.bf16.msra.mxu0 %v510
        %3605 = vmatprep.subr.bf16.mxu0 0
        %3606 = vmatpush1.bf16.msra.mxu0 %v511
        %3607 = vmatprep.subr.bf16.mxu0 0
        %3608 = vmatpush1.bf16.msra.mxu0 %v512
        %3609 = vmatprep.subr.bf16.mxu0 0
        %3610 = vmatpush1.bf16.msra.mxu0 %v513
        %3611 = vmatprep.subr.bf16.mxu0 0
        %3612 = vmatpush1.bf16.msra.mxu0 %v514
        %3613 = vmatprep.subr.bf16.mxu0 0
        %3614 = vmatpush1.bf16.msra.mxu0 %v515
        %3615 = vmatprep.subr.bf16.mxu0 0
        %3616 = vmatpush1.bf16.msra.mxu0 0
        %3617 = vmatprep.subr.bf16.mxu0 0
        %3618 = vmatpush1.bf16.msra.mxu0 0
        %3619 = vmatprep.subr.bf16.mxu0 0
        %3620 = vmatpush1.bf16.msra.mxu0 0
        %3621 = vmatprep.subr.bf16.mxu0 0
        %3622 = vmatpush1.bf16.msra.mxu0 0
        %3623 = vmatprep.subr.bf16.mxu0 0
        %3624 = vmatpush1.bf16.msra.mxu0 0
        %3625 = vmatprep.subr.bf16.mxu0 0
        %3626 = vmatpush1.bf16.msra.mxu0 0
        %3627 = vmatprep.subr.bf16.mxu0 0
        %3628 = vmatpush1.bf16.msra.mxu0 0
        %3629 = vmatprep.subr.bf16.mxu0 0
        %3630 = vmatpush1.bf16.msra.mxu0 0
        %3631 = vmatprep.mubr.bf16.mxu0 0
        %3632 = vmatmul.mubr.bf16.gmra.mrb[0].mxu0 %v3526
        %v3633 = vpop.f32.mrb[0].mxu0
        %v3634 = vadd.f32 %v475, %v3633
        %v3635 = vpop.f32.mrb[0].mxu0
        %v3636 = vpop.f32.mrb[0].mxu0
        %v3637 = vadd.f32 %v475, %v3636
        %v3638 = vpop.f32.mrb[0].mxu0
        %3639 = vmatprep.mubr.bf16.mxu0 0
        %3640 = vmatmul.mubr.bf16.gmra.mrb[0].mxu0 %v3527
        %v3641 = vpop.f32.mrb[0].mxu0
        %v3642 = vadd.f32 %v475, %v3641
        %v3643 = vpop.f32.mrb[0].mxu0
        %v3644 = vpop.f32.mrb[0].mxu0
        %v3645 = vadd.f32 %v475, %v3644
        %v3646 = vpop.f32.mrb[0].mxu0
        %3647 = vmatprep.mubr.bf16.mxu0 0
        %3648 = vmatmul.mubr.bf16.gmra.mrb[0].mxu0 %v3528
        %v3649 = vpop.f32.mrb[0].mxu0
        %v3650 = vadd.f32 %v475, %v3649
        %v3651 = vpop.f32.mrb[0].mxu0
        %v3652 = vpop.f32.mrb[0].mxu0
        %v3653 = vadd.f32 %v475, %v3652
        %v3654 = vpop.f32.mrb[0].mxu0
        %3655 = vmatprep.mubr.bf16.mxu0 0
        %3656 = vmatmul.mubr.bf16.gmra.mrb[0].mxu0 %v3529
        %v3657 = vpop.f32.mrb[0].mxu0
        %v3658 = vadd.f32 %v475, %v3657
        %v3659 = vpop.f32.mrb[0].mxu0
        %v3660 = vpop.f32.mrb[0].mxu0
        %v3661 = vadd.f32 %v475, %v3660
        %v3662 = vpop.f32.mrb[0].mxu0
        %3663 = vdwg.mxu0
        %v3664 = vpack.c.bf16 %v3637, %v3634
        %v3665 = vpack.c.bf16 %v3645, %v3642
        %v3666 = vpack.c.bf16 %v3653, %v3650
        %v3667 = vpack.c.bf16 %v3661, %v3658
        %3668 = vmatprep.subr.bf16.mxu0 0
        %3669 = vmatpush1.bf16.msra.mxu0 %v698
        %3670 = vmatprep.subr.bf16.mxu0 0
        %3671 = vmatpush1.bf16.msra.mxu0 %v699
        %3672 = vmatprep.subr.bf16.mxu0 0
        %3673 = vmatpush1.bf16.msra.mxu0 %v700
        %3674 = vmatprep.subr.bf16.mxu0 0
        %3675 = vmatpush1.bf16.msra.mxu0 %v701
        %3676 = vmatprep.subr.bf16.mxu0 0
        %3677 = vmatpush1.bf16.msra.mxu0 %v702
        %3678 = vmatprep.subr.bf16.mxu0 0
        %3679 = vmatpush1.bf16.msra.mxu0 %v703
        %3680 = vmatprep.subr.bf16.mxu0 0
        %3681 = vmatpush1.bf16.msra.mxu0 %v704
        %3682 = vmatprep.subr.bf16.mxu0 0
        %3683 = vmatpush1.bf16.msra.mxu0 %v705
        %3684 = vmatprep.subr.bf16.mxu0 0
        %3685 = vmatpush1.bf16.msra.mxu0 0
        %3686 = vmatprep.subr.bf16.mxu0 0
        %3687 = vmatpush1.bf16.msra.mxu0 0
        %3688 = vmatprep.subr.bf16.mxu0 0
        %3689 = vmatpush1.bf16.msra.mxu0 0
        %3690 = vmatprep.subr.bf16.mxu0 0
        %3691 = vmatpush1.bf16.msra.mxu0 0
        %3692 = vmatprep.subr.bf16.mxu0 0
        %3693 = vmatpush1.bf16.msra.mxu0 0
        %3694 = vmatprep.subr.bf16.mxu0 0
        %3695 = vmatpush1.bf16.msra.mxu0 0
        %3696 = vmatprep.subr.bf16.mxu0 0
        %3697 = vmatpush1.bf16.msra.mxu0 0
        %3698 = vmatprep.subr.bf16.mxu0 0
        %3699 = vmatpush1.bf16.msra.mxu0 0
        %3700 = vmatprep.mubr.bf16.mxu0 0
        %3701 = vmatmul.mubr.bf16.gmra.mrb[0].mxu0 %v3595
        %v3702 = vpop.f32.mrb[0].mxu0
        %v3703 = vadd.f32 %v665, %v3702
        %v3704 = vpop.f32.mrb[0].mxu0
        %v3705 = vpop.f32.mrb[0].mxu0
        %v3706 = vadd.f32 %v665, %v3705
        %v3707 = vpop.f32.mrb[0].mxu0
        %3708 = vmatprep.mubr.bf16.mxu0 0
        %3709 = vmatmul.mubr.bf16.gmra.mrb[0].mxu0 %v3596
        %v3710 = vpop.f32.mrb[0].mxu0
        %v3711 = vadd.f32 %v665, %v3710
        %v3712 = vpop.f32.mrb[0].mxu0
        %v3713 = vpop.f32.mrb[0].mxu0
        %v3714 = vadd.f32 %v665, %v3713
        %v3715 = vpop.f32.mrb[0].mxu0
        %3716 = vmatprep.mubr.bf16.mxu0 0
        %3717 = vmatmul.mubr.bf16.gmra.mrb[0].mxu0 %v3597
        %v3718 = vpop.f32.mrb[0].mxu0
        %v3719 = vadd.f32 %v665, %v3718
        %v3720 = vpop.f32.mrb[0].mxu0
        %v3721 = vpop.f32.mrb[0].mxu0
        %v3722 = vadd.f32 %v665, %v3721
        %v3723 = vpop.f32.mrb[0].mxu0
        %3724 = vmatprep.mubr.bf16.mxu0 0
        %3725 = vmatmul.mubr.bf16.gmra.mrb[0].mxu0 %v3598
        %v3726 = vpop.f32.mrb[0].mxu0
        %v3727 = vadd.f32 %v665, %v3726
        %v3728 = vpop.f32.mrb[0].mxu0
        %v3729 = vpop.f32.mrb[0].mxu0
        %v3730 = vadd.f32 %v665, %v3729
        %v3731 = vpop.f32.mrb[0].mxu0
        %3732 = vdwg.mxu0
        %v3733 = vpack.c.bf16 %v3706, %v3703
        %v3734 = vpack.c.bf16 %v3714, %v3711
        %v3735 = vpack.c.bf16 %v3722, %v3719
        %v3736 = vpack.c.bf16 %v3730, %v3727
        %3737 = vmatprep.subr.bf16.mxu0 0
        %3738 = vmatpush1.bf16.msra.mxu0 %v698
        %3739 = vmatprep.subr.bf16.mxu0 0
        %3740 = vmatpush1.bf16.msra.mxu0 %v699
        %3741 = vmatprep.subr.bf16.mxu0 0
        %3742 = vmatpush1.bf16.msra.mxu0 %v700
        %3743 = vmatprep.subr.bf16.mxu0 0
        %3744 = vmatpush1.bf16.msra.mxu0 %v701
        %3745 = vmatprep.subr.bf16.mxu0 0
        %3746 = vmatpush1.bf16.msra.mxu0 %v702
        %3747 = vmatprep.subr.bf16.mxu0 0
        %3748 = vmatpush1.bf16.msra.mxu0 %v703
        %3749 = vmatprep.subr.bf16.mxu0 0
        %3750 = vmatpush1.bf16.msra.mxu0 %v704
        %3751 = vmatprep.subr.bf16.mxu0 0
        %3752 = vmatpush1.bf16.msra.mxu0 %v705
        %3753 = vmatprep.subr.bf16.mxu0 0
        %3754 = vmatpush1.bf16.msra.mxu0 0
        %3755 = vmatprep.subr.bf16.mxu0 0
        %3756 = vmatpush1.bf16.msra.mxu0 0
        %3757 = vmatprep.subr.bf16.mxu0 0
        %3758 = vmatpush1.bf16.msra.mxu0 0
        %3759 = vmatprep.subr.bf16.mxu0 0
        %3760 = vmatpush1.bf16.msra.mxu0 0
        %3761 = vmatprep.subr.bf16.mxu0 0
        %3762 = vmatpush1.bf16.msra.mxu0 0
        %3763 = vmatprep.subr.bf16.mxu0 0
        %3764 = vmatpush1.bf16.msra.mxu0 0
        %3765 = vmatprep.subr.bf16.mxu0 0
        %3766 = vmatpush1.bf16.msra.mxu0 0
        %3767 = vmatprep.subr.bf16.mxu0 0
        %3768 = vmatpush1.bf16.msra.mxu0 0
        %3769 = vmatprep.mubr.bf16.mxu0 0
        %3770 = vmatmul.mubr.bf16.gmra.mrb[0].mxu0 %v3664
        %v3771 = vpop.f32.mrb[0].mxu0
        %v3772 = vadd.f32 %v665, %v3771
        %v3773 = vpop.f32.mrb[0].mxu0
        %v3774 = vpop.f32.mrb[0].mxu0
        %v3775 = vadd.f32 %v665, %v3774
        %v3776 = vpop.f32.mrb[0].mxu0
        %3777 = vmatprep.mubr.bf16.mxu0 0
        %3778 = vmatmul.mubr.bf16.gmra.mrb[0].mxu0 %v3665
        %v3779 = vpop.f32.mrb[0].mxu0
        %v3780 = vadd.f32 %v665, %v3779
        %v3781 = vpop.f32.mrb[0].mxu0
        %v3782 = vpop.f32.mrb[0].mxu0
        %v3783 = vadd.f32 %v665, %v3782
        %v3784 = vpop.f32.mrb[0].mxu0
        %3785 = vmatprep.mubr.bf16.mxu0 0
        %3786 = vmatmul.mubr.bf16.gmra.mrb[0].mxu0 %v3666
        %v3787 = vpop.f32.mrb[0].mxu0
        %v3788 = vadd.f32 %v665, %v3787
        %v3789 = vpop.f32.mrb[0].mxu0
        %v3790 = vpop.f32.mrb[0].mxu0
        %v3791 = vadd.f32 %v665, %v3790
        %v3792 = vpop.f32.mrb[0].mxu0
        %3793 = vmatprep.mubr.bf16.mxu0 0
        %3794 = vmatmul.mubr.bf16.gmra.mrb[0].mxu0 %v3667
        %v3795 = vpop.f32.mrb[0].mxu0
        %v3796 = vadd.f32 %v665, %v3795
        %v3797 = vpop.f32.mrb[0].mxu0
        %v3798 = vpop.f32.mrb[0].mxu0
        %v3799 = vadd.f32 %v665, %v3798
        %v3800 = vpop.f32.mrb[0].mxu0
        %3801 = vdwg.mxu0
        %v3802 = vpack.c.bf16 %v3775, %v3772
        %v3803 = vpack.c.bf16 %v3783, %v3780
        %v3804 = vpack.c.bf16 %v3791, %v3788
        %v3805 = vpack.c.bf16 %v3799, %v3796
        %v3806 = vmax.bf16 %v3733, 0
        %v3807 = vmax.bf16 %v3734, 0
        %v3808 = vmax.bf16 %v3735, 0
        %v3809 = vmax.bf16 %v3736, 0
        %v3810 = vmax.bf16 %v3802, 0
        %v3811 = vmax.bf16 %v3803, 0
        %v3812 = vmax.bf16 %v3804, 0
        %v3813 = vmax.bf16 %v3805, 0
        %3814 = vmatprep.subr.bf16.mxu0 0
        %3815 = vmatpush1.bf16.msra.mxu0 %v318
        %3816 = vmatprep.subr.bf16.mxu0 0
        %3817 = vmatpush1.bf16.msra.mxu0 %v319
        %3818 = vmatprep.subr.bf16.mxu0 0
        %3819 = vmatpush1.bf16.msra.mxu0 %v320
        %3820 = vmatprep.subr.bf16.mxu0 0
        %3821 = vmatpush1.bf16.msra.mxu0 %v321
        %3822 = vmatprep.subr.bf16.mxu0 0
        %3823 = vmatpush1.bf16.msra.mxu0 %v322
        %3824 = vmatprep.subr.bf16.mxu0 0
        %3825 = vmatpush1.bf16.msra.mxu0 %v323
        %3826 = vmatprep.subr.bf16.mxu0 0
        %3827 = vmatpush1.bf16.msra.mxu0 %v324
        %3828 = vmatprep.subr.bf16.mxu0 0
        %3829 = vmatpush1.bf16.msra.mxu0 %v325
        %3830 = vmatprep.subr.bf16.mxu0 0
        %3831 = vmatpush1.bf16.msra.mxu0 0
        %3832 = vmatprep.subr.bf16.mxu0 0
        %3833 = vmatpush1.bf16.msra.mxu0 0
        %3834 = vmatprep.subr.bf16.mxu0 0
        %3835 = vmatpush1.bf16.msra.mxu0 0
        %3836 = vmatprep.subr.bf16.mxu0 0
        %3837 = vmatpush1.bf16.msra.mxu0 0
        %3838 = vmatprep.subr.bf16.mxu0 0
        %3839 = vmatpush1.bf16.msra.mxu0 0
        %3840 = vmatprep.subr.bf16.mxu0 0
        %3841 = vmatpush1.bf16.msra.mxu0 0
        %3842 = vmatprep.subr.bf16.mxu0 0
        %3843 = vmatpush1.bf16.msra.mxu0 0
        %3844 = vmatprep.subr.bf16.mxu0 0
        %3845 = vmatpush1.bf16.msra.mxu0 0
        %3846 = vmatprep.mubr.bf16.mxu0 0
        %3847 = vmatmul.mubr.bf16.gmra.mrb[0].mxu0 %v3806
        %v3848 = vpop.f32.mrb[0].mxu0
        %v3849 = vadd.f32 %v285, %v3848
        %v3850 = vpop.f32.mrb[0].mxu0
        %v3851 = vpop.f32.mrb[0].mxu0
        %v3852 = vadd.f32 %v285, %v3851
        %v3853 = vpop.f32.mrb[0].mxu0
        %3854 = vmatprep.mubr.bf16.mxu0 0
        %3855 = vmatmul.mubr.bf16.gmra.mrb[0].mxu0 %v3807
        %v3856 = vpop.f32.mrb[0].mxu0
        %v3857 = vadd.f32 %v285, %v3856
        %v3858 = vpop.f32.mrb[0].mxu0
        %v3859 = vpop.f32.mrb[0].mxu0
        %v3860 = vadd.f32 %v285, %v3859
        %v3861 = vpop.f32.mrb[0].mxu0
        %3862 = vmatprep.mubr.bf16.mxu0 0
        %3863 = vmatmul.mubr.bf16.gmra.mrb[0].mxu0 %v3808
        %v3864 = vpop.f32.mrb[0].mxu0
        %v3865 = vadd.f32 %v285, %v3864
        %v3866 = vpop.f32.mrb[0].mxu0
        %v3867 = vpop.f32.mrb[0].mxu0
        %v3868 = vadd.f32 %v285, %v3867
        %v3869 = vpop.f32.mrb[0].mxu0
        %3870 = vmatprep.mubr.bf16.mxu0 0
        %3871 = vmatmul.mubr.bf16.gmra.mrb[0].mxu0 %v3809
        %v3872 = vpop.f32.mrb[0].mxu0
        %v3873 = vadd.f32 %v285, %v3872
        %v3874 = vpop.f32.mrb[0].mxu0
        %v3875 = vpop.f32.mrb[0].mxu0
        %v3876 = vadd.f32 %v285, %v3875
        %v3877 = vpop.f32.mrb[0].mxu0
        %3878 = vdwg.mxu0
        %v3879 = vpack.c.bf16 %v3852, %v3849
        %v3880 = vpack.c.bf16 %v3860, %v3857
        %v3881 = vpack.c.bf16 %v3868, %v3865
        %v3882 = vpack.c.bf16 %v3876, %v3873
        %3883 = vmatprep.subr.bf16.mxu0 0
        %3884 = vmatpush1.bf16.msra.mxu0 %v318
        %3885 = vmatprep.subr.bf16.mxu0 0
        %3886 = vmatpush1.bf16.msra.mxu0 %v319
        %3887 = vmatprep.subr.bf16.mxu0 0
        %3888 = vmatpush1.bf16.msra.mxu0 %v320
        %3889 = vmatprep.subr.bf16.mxu0 0
        %3890 = vmatpush1.bf16.msra.mxu0 %v321
        %3891 = vmatprep.subr.bf16.mxu0 0
        %3892 = vmatpush1.bf16.msra.mxu0 %v322
        %3893 = vmatprep.subr.bf16.mxu0 0
        %3894 = vmatpush1.bf16.msra.mxu0 %v323
        %3895 = vmatprep.subr.bf16.mxu0 0
        %3896 = vmatpush1.bf16.msra.mxu0 %v324
        %3897 = vmatprep.subr.bf16.mxu0 0
        %3898 = vmatpush1.bf16.msra.mxu0 %v325
        %3899 = vmatprep.subr.bf16.mxu0 0
        %3900 = vmatpush1.bf16.msra.mxu0 0
        %3901 = vmatprep.subr.bf16.mxu0 0
        %3902 = vmatpush1.bf16.msra.mxu0 0
        %3903 = vmatprep.subr.bf16.mxu0 0
        %3904 = vmatpush1.bf16.msra.mxu0 0
        %3905 = vmatprep.subr.bf16.mxu0 0
        %3906 = vmatpush1.bf16.msra.mxu0 0
        %3907 = vmatprep.subr.bf16.mxu0 0
        %3908 = vmatpush1.bf16.msra.mxu0 0
        %3909 = vmatprep.subr.bf16.mxu0 0
        %3910 = vmatpush1.bf16.msra.mxu0 0
        %3911 = vmatprep.subr.bf16.mxu0 0
        %3912 = vmatpush1.bf16.msra.mxu0 0
        %3913 = vmatprep.subr.bf16.mxu0 0
        %3914 = vmatpush1.bf16.msra.mxu0 0
        %3915 = vmatprep.mubr.bf16.mxu0 0
        %3916 = vmatmul.mubr.bf16.gmra.mrb[0].mxu0 %v3810
        %v3917 = vpop.f32.mrb[0].mxu0
        %v3918 = vadd.f32 %v285, %v3917
        %v3919 = vpop.f32.mrb[0].mxu0
        %v3920 = vpop.f32.mrb[0].mxu0
        %v3921 = vadd.f32 %v285, %v3920
        %v3922 = vpop.f32.mrb[0].mxu0
        %3923 = vmatprep.mubr.bf16.mxu0 0
        %3924 = vmatmul.mubr.bf16.gmra.mrb[0].mxu0 %v3811
        %v3925 = vpop.f32.mrb[0].mxu0
        %v3926 = vadd.f32 %v285, %v3925
        %v3927 = vpop.f32.mrb[0].mxu0
        %v3928 = vpop.f32.mrb[0].mxu0
        %v3929 = vadd.f32 %v285, %v3928
        %v3930 = vpop.f32.mrb[0].mxu0
        %3931 = vmatprep.mubr.bf16.mxu0 0
        %3932 = vmatmul.mubr.bf16.gmra.mrb[0].mxu0 %v3812
        %v3933 = vpop.f32.mrb[0].mxu0
        %v3934 = vadd.f32 %v285, %v3933
        %v3935 = vpop.f32.mrb[0].mxu0
        %v3936 = vpop.f32.mrb[0].mxu0
        %v3937 = vadd.f32 %v285, %v3936
        %v3938 = vpop.f32.mrb[0].mxu0
        %3939 = vmatprep.mubr.bf16.mxu0 0
        %3940 = vmatmul.mubr.bf16.gmra.mrb[0].mxu0 %v3813
        %v3941 = vpop.f32.mrb[0].mxu0
        %v3942 = vadd.f32 %v285, %v3941
        %v3943 = vpop.f32.mrb[0].mxu0
        %v3944 = vpop.f32.mrb[0].mxu0
        %v3945 = vadd.f32 %v285, %v3944
        %v3946 = vpop.f32.mrb[0].mxu0
        %3947 = vdwg.mxu0
        %v3948 = vpack.c.bf16 %v3921, %v3918
        %v3949 = vpack.c.bf16 %v3929, %v3926
        %v3950 = vpack.c.bf16 %v3937, %v3934
        %v3951 = vpack.c.bf16 %v3945, %v3942
        %3952 = vmatprep.subr.bf16.mxu0 0
        %3953 = vmatpush1.bf16.msra.mxu0 %v508
        %3954 = vmatprep.subr.bf16.mxu0 0
        %3955 = vmatpush1.bf16.msra.mxu0 %v509
        %3956 = vmatprep.subr.bf16.mxu0 0
        %3957 = vmatpush1.bf16.msra.mxu0 %v510
        %3958 = vmatprep.subr.bf16.mxu0 0
        %3959 = vmatpush1.bf16.msra.mxu0 %v511
        %3960 = vmatprep.subr.bf16.mxu0 0
        %3961 = vmatpush1.bf16.msra.mxu0 %v512
        %3962 = vmatprep.subr.bf16.mxu0 0
        %3963 = vmatpush1.bf16.msra.mxu0 %v513
        %3964 = vmatprep.subr.bf16.mxu0 0
        %3965 = vmatpush1.bf16.msra.mxu0 %v514
        %3966 = vmatprep.subr.bf16.mxu0 0
        %3967 = vmatpush1.bf16.msra.mxu0 %v515
        %3968 = vmatprep.subr.bf16.mxu0 0
        %3969 = vmatpush1.bf16.msra.mxu0 0
        %3970 = vmatprep.subr.bf16.mxu0 0
        %3971 = vmatpush1.bf16.msra.mxu0 0
        %3972 = vmatprep.subr.bf16.mxu0 0
        %3973 = vmatpush1.bf16.msra.mxu0 0
        %3974 = vmatprep.subr.bf16.mxu0 0
        %3975 = vmatpush1.bf16.msra.mxu0 0
        %3976 = vmatprep.subr.bf16.mxu0 0
        %3977 = vmatpush1.bf16.msra.mxu0 0
        %3978 = vmatprep.subr.bf16.mxu0 0
        %3979 = vmatpush1.bf16.msra.mxu0 0
        %3980 = vmatprep.subr.bf16.mxu0 0
        %3981 = vmatpush1.bf16.msra.mxu0 0
        %3982 = vmatprep.subr.bf16.mxu0 0
        %3983 = vmatpush1.bf16.msra.mxu0 0
        %3984 = vmatprep.mubr.bf16.mxu0 0
        %3985 = vmatmul.mubr.bf16.gmra.mrb[0].mxu0 %v3879
        %v3986 = vpop.f32.mrb[0].mxu0
        %v3987 = vadd.f32 %v475, %v3986
        %v3988 = vpop.f32.mrb[0].mxu0
        %v3989 = vpop.f32.mrb[0].mxu0
        %v3990 = vadd.f32 %v475, %v3989
        %v3991 = vpop.f32.mrb[0].mxu0
        %3992 = vmatprep.mubr.bf16.mxu0 0
        %3993 = vmatmul.mubr.bf16.gmra.mrb[0].mxu0 %v3880
        %v3994 = vpop.f32.mrb[0].mxu0
        %v3995 = vadd.f32 %v475, %v3994
        %v3996 = vpop.f32.mrb[0].mxu0
        %v3997 = vpop.f32.mrb[0].mxu0
        %v3998 = vadd.f32 %v475, %v3997
        %v3999 = vpop.f32.mrb[0].mxu0
        %4000 = vmatprep.mubr.bf16.mxu0 0
        %4001 = vmatmul.mubr.bf16.gmra.mrb[0].mxu0 %v3881
        %v4002 = vpop.f32.mrb[0].mxu0
        %v4003 = vadd.f32 %v475, %v4002
        %v4004 = vpop.f32.mrb[0].mxu0
        %v4005 = vpop.f32.mrb[0].mxu0
        %v4006 = vadd.f32 %v475, %v4005
        %v4007 = vpop.f32.mrb[0].mxu0
        %4008 = vmatprep.mubr.bf16.mxu0 0
        %4009 = vmatmul.mubr.bf16.gmra.mrb[0].mxu0 %v3882
        %v4010 = vpop.f32.mrb[0].mxu0
        %v4011 = vadd.f32 %v475, %v4010
        %v4012 = vpop.f32.mrb[0].mxu0
        %v4013 = vpop.f32.mrb[0].mxu0
        %v4014 = vadd.f32 %v475, %v4013
        %v4015 = vpop.f32.mrb[0].mxu0
        %4016 = vdwg.mxu0
        %v4017 = vpack.c.bf16 %v3990, %v3987
        %v4018 = vpack.c.bf16 %v3998, %v3995
        %v4019 = vpack.c.bf16 %v4006, %v4003
        %v4020 = vpack.c.bf16 %v4014, %v4011
        %4021 = vmatprep.subr.bf16.mxu0 0
        %4022 = vmatpush1.bf16.msra.mxu0 %v508
        %4023 = vmatprep.subr.bf16.mxu0 0
        %4024 = vmatpush1.bf16.msra.mxu0 %v509
        %4025 = vmatprep.subr.bf16.mxu0 0
        %4026 = vmatpush1.bf16.msra.mxu0 %v510
        %4027 = vmatprep.subr.bf16.mxu0 0
        %4028 = vmatpush1.bf16.msra.mxu0 %v511
        %4029 = vmatprep.subr.bf16.mxu0 0
        %4030 = vmatpush1.bf16.msra.mxu0 %v512
        %4031 = vmatprep.subr.bf16.mxu0 0
        %4032 = vmatpush1.bf16.msra.mxu0 %v513
        %4033 = vmatprep.subr.bf16.mxu0 0
        %4034 = vmatpush1.bf16.msra.mxu0 %v514
        %4035 = vmatprep.subr.bf16.mxu0 0
        %4036 = vmatpush1.bf16.msra.mxu0 %v515
        %4037 = vmatprep.subr.bf16.mxu0 0
        %4038 = vmatpush1.bf16.msra.mxu0 0
        %4039 = vmatprep.subr.bf16.mxu0 0
        %4040 = vmatpush1.bf16.msra.mxu0 0
        %4041 = vmatprep.subr.bf16.mxu0 0
        %4042 = vmatpush1.bf16.msra.mxu0 0
        %4043 = vmatprep.subr.bf16.mxu0 0
        %4044 = vmatpush1.bf16.msra.mxu0 0
        %4045 = vmatprep.subr.bf16.mxu0 0
        %4046 = vmatpush1.bf16.msra.mxu0 0
        %4047 = vmatprep.subr.bf16.mxu0 0
        %4048 = vmatpush1.bf16.msra.mxu0 0
        %4049 = vmatprep.subr.bf16.mxu0 0
        %4050 = vmatpush1.bf16.msra.mxu0 0
        %4051 = vmatprep.subr.bf16.mxu0 0
        %4052 = vmatpush1.bf16.msra.mxu0 0
        %4053 = vmatprep.mubr.bf16.mxu0 0
        %4054 = vmatmul.mubr.bf16.gmra.mrb[0].mxu0 %v3948
        %v4055 = vpop.f32.mrb[0].mxu0
        %v4056 = vadd.f32 %v475, %v4055
        %v4057 = vpop.f32.mrb[0].mxu0
        %v4058 = vpop.f32.mrb[0].mxu0
        %v4059 = vadd.f32 %v475, %v4058
        %v4060 = vpop.f32.mrb[0].mxu0
        %4061 = vmatprep.mubr.bf16.mxu0 0
        %4062 = vmatmul.mubr.bf16.gmra.mrb[0].mxu0 %v3949
        %v4063 = vpop.f32.mrb[0].mxu0
        %v4064 = vadd.f32 %v475, %v4063
        %v4065 = vpop.f32.mrb[0].mxu0
        %v4066 = vpop.f32.mrb[0].mxu0
        %v4067 = vadd.f32 %v475, %v4066
        %v4068 = vpop.f32.mrb[0].mxu0
        %4069 = vmatprep.mubr.bf16.mxu0 0
        %4070 = vmatmul.mubr.bf16.gmra.mrb[0].mxu0 %v3950
        %v4071 = vpop.f32.mrb[0].mxu0
        %v4072 = vadd.f32 %v475, %v4071
        %v4073 = vpop.f32.mrb[0].mxu0
        %v4074 = vpop.f32.mrb[0].mxu0
        %v4075 = vadd.f32 %v475, %v4074
        %v4076 = vpop.f32.mrb[0].mxu0
        %4077 = vmatprep.mubr.bf16.mxu0 0
        %4078 = vmatmul.mubr.bf16.gmra.mrb[0].mxu0 %v3951
        %v4079 = vpop.f32.mrb[0].mxu0
        %v4080 = vadd.f32 %v475, %v4079
        %v4081 = vpop.f32.mrb[0].mxu0
        %v4082 = vpop.f32.mrb[0].mxu0
        %v4083 = vadd.f32 %v475, %v4082
        %v4084 = vpop.f32.mrb[0].mxu0
        %4085 = vdwg.mxu0
        %v4086 = vpack.c.bf16 %v4059, %v4056
        %v4087 = vpack.c.bf16 %v4067, %v4064
        %v4088 = vpack.c.bf16 %v4075, %v4072
        %v4089 = vpack.c.bf16 %v4083, %v4080
        %4090 = vmatprep.subr.bf16.mxu0 0
        %4091 = vmatpush1.bf16.msra.mxu0 %v698
        %4092 = vmatprep.subr.bf16.mxu0 0
        %4093 = vmatpush1.bf16.msra.mxu0 %v699
        %4094 = vmatprep.subr.bf16.mxu0 0
        %4095 = vmatpush1.bf16.msra.mxu0 %v700
        %4096 = vmatprep.subr.bf16.mxu0 0
        %4097 = vmatpush1.bf16.msra.mxu0 %v701
        %4098 = vmatprep.subr.bf16.mxu0 0
        %4099 = vmatpush1.bf16.msra.mxu0 %v702
        %4100 = vmatprep.subr.bf16.mxu0 0
        %4101 = vmatpush1.bf16.msra.mxu0 %v703
        %4102 = vmatprep.subr.bf16.mxu0 0
        %4103 = vmatpush1.bf16.msra.mxu0 %v704
        %4104 = vmatprep.subr.bf16.mxu0 0
        %4105 = vmatpush1.bf16.msra.mxu0 %v705
        %4106 = vmatprep.subr.bf16.mxu0 0
        %4107 = vmatpush1.bf16.msra.mxu0 0
        %4108 = vmatprep.subr.bf16.mxu0 0
        %4109 = vmatpush1.bf16.msra.mxu0 0
        %4110 = vmatprep.subr.bf16.mxu0 0
        %4111 = vmatpush1.bf16.msra.mxu0 0
        %4112 = vmatprep.subr.bf16.mxu0 0
        %4113 = vmatpush1.bf16.msra.mxu0 0
        %4114 = vmatprep.subr.bf16.mxu0 0
        %4115 = vmatpush1.bf16.msra.mxu0 0
        %4116 = vmatprep.subr.bf16.mxu0 0
        %4117 = vmatpush1.bf16.msra.mxu0 0
        %4118 = vmatprep.subr.bf16.mxu0 0
        %4119 = vmatpush1.bf16.msra.mxu0 0
        %4120 = vmatprep.subr.bf16.mxu0 0
        %4121 = vmatpush1.bf16.msra.mxu0 0
        %4122 = vmatprep.mubr.bf16.mxu0 0
        %4123 = vmatmul.mubr.bf16.gmra.mrb[0].mxu0 %v4017
        %v4124 = vpop.f32.mrb[0].mxu0
        %v4125 = vadd.f32 %v665, %v4124
        %v4126 = vpop.f32.mrb[0].mxu0
        %v4127 = vpop.f32.mrb[0].mxu0
        %v4128 = vadd.f32 %v665, %v4127
        %v4129 = vpop.f32.mrb[0].mxu0
        %4130 = vmatprep.mubr.bf16.mxu0 0
        %4131 = vmatmul.mubr.bf16.gmra.mrb[0].mxu0 %v4018
        %v4132 = vpop.f32.mrb[0].mxu0
        %v4133 = vadd.f32 %v665, %v4132
        %v4134 = vpop.f32.mrb[0].mxu0
        %v4135 = vpop.f32.mrb[0].mxu0
        %v4136 = vadd.f32 %v665, %v4135
        %v4137 = vpop.f32.mrb[0].mxu0
        %4138 = vmatprep.mubr.bf16.mxu0 0
        %4139 = vmatmul.mubr.bf16.gmra.mrb[0].mxu0 %v4019
        %v4140 = vpop.f32.mrb[0].mxu0
        %v4141 = vadd.f32 %v665, %v4140
        %v4142 = vpop.f32.mrb[0].mxu0
        %v4143 = vpop.f32.mrb[0].mxu0
        %v4144 = vadd.f32 %v665, %v4143
        %v4145 = vpop.f32.mrb[0].mxu0
        %4146 = vmatprep.mubr.bf16.mxu0 0
        %4147 = vmatmul.mubr.bf16.gmra.mrb[0].mxu0 %v4020
        %v4148 = vpop.f32.mrb[0].mxu0
        %v4149 = vadd.f32 %v665, %v4148
        %v4150 = vpop.f32.mrb[0].mxu0
        %v4151 = vpop.f32.mrb[0].mxu0
        %v4152 = vadd.f32 %v665, %v4151
        %v4153 = vpop.f32.mrb[0].mxu0
        %4154 = vdwg.mxu0
        %v4155 = vpack.c.bf16 %v4128, %v4125
        %v4156 = vpack.c.bf16 %v4136, %v4133
        %v4157 = vpack.c.bf16 %v4144, %v4141
        %v4158 = vpack.c.bf16 %v4152, %v4149
        %4159 = vmatprep.subr.bf16.mxu0 0
        %4160 = vmatpush1.bf16.msra.mxu0 %v698
        %4161 = vmatprep.subr.bf16.mxu0 0
        %4162 = vmatpush1.bf16.msra.mxu0 %v699
        %4163 = vmatprep.subr.bf16.mxu0 0
        %4164 = vmatpush1.bf16.msra.mxu0 %v700
        %4165 = vmatprep.subr.bf16.mxu0 0
        %4166 = vmatpush1.bf16.msra.mxu0 %v701
        %4167 = vmatprep.subr.bf16.mxu0 0
        %4168 = vmatpush1.bf16.msra.mxu0 %v702
        %4169 = vmatprep.subr.bf16.mxu0 0
        %4170 = vmatpush1.bf16.msra.mxu0 %v703
        %4171 = vmatprep.subr.bf16.mxu0 0
        %4172 = vmatpush1.bf16.msra.mxu0 %v704
        %4173 = vmatprep.subr.bf16.mxu0 0
        %4174 = vmatpush1.bf16.msra.mxu0 %v705
        %4175 = vmatprep.subr.bf16.mxu0 0
        %4176 = vmatpush1.bf16.msra.mxu0 0
        %4177 = vmatprep.subr.bf16.mxu0 0
        %4178 = vmatpush1.bf16.msra.mxu0 0
        %4179 = vmatprep.subr.bf16.mxu0 0
        %4180 = vmatpush1.bf16.msra.mxu0 0
        %4181 = vmatprep.subr.bf16.mxu0 0
        %4182 = vmatpush1.bf16.msra.mxu0 0
        %4183 = vmatprep.subr.bf16.mxu0 0
        %4184 = vmatpush1.bf16.msra.mxu0 0
        %4185 = vmatprep.subr.bf16.mxu0 0
        %4186 = vmatpush1.bf16.msra.mxu0 0
        %4187 = vmatprep.subr.bf16.mxu0 0
        %4188 = vmatpush1.bf16.msra.mxu0 0
        %4189 = vmatprep.subr.bf16.mxu0 0
        %4190 = vmatpush1.bf16.msra.mxu0 0
        %4191 = vmatprep.mubr.bf16.mxu0 0
        %4192 = vmatmul.mubr.bf16.gmra.mrb[0].mxu0 %v4086
        %v4193 = vpop.f32.mrb[0].mxu0
        %v4194 = vadd.f32 %v665, %v4193
        %v4195 = vpop.f32.mrb[0].mxu0
        %v4196 = vpop.f32.mrb[0].mxu0
        %v4197 = vadd.f32 %v665, %v4196
        %v4198 = vpop.f32.mrb[0].mxu0
        %4199 = vmatprep.mubr.bf16.mxu0 0
        %4200 = vmatmul.mubr.bf16.gmra.mrb[0].mxu0 %v4087
        %v4201 = vpop.f32.mrb[0].mxu0
        %v4202 = vadd.f32 %v665, %v4201
        %v4203 = vpop.f32.mrb[0].mxu0
        %v4204 = vpop.f32.mrb[0].mxu0
        %v4205 = vadd.f32 %v665, %v4204
        %v4206 = vpop.f32.mrb[0].mxu0
        %4207 = vmatprep.mubr.bf16.mxu0 0
        %4208 = vmatmul.mubr.bf16.gmra.mrb[0].mxu0 %v4088
        %v4209 = vpop.f32.mrb[0].mxu0
        %v4210 = vadd.f32 %v665, %v4209
        %v4211 = vpop.f32.mrb[0].mxu0
        %v4212 = vpop.f32.mrb[0].mxu0
        %v4213 = vadd.f32 %v665, %v4212
        %v4214 = vpop.f32.mrb[0].mxu0
        %4215 = vmatprep.mubr.bf16.mxu0 0
        %4216 = vmatmul.mubr.bf16.gmra.mrb[0].mxu0 %v4089
        %v4217 = vpop.f32.mrb[0].mxu0
        %v4218 = vadd.f32 %v665, %v4217
        %v4219 = vpop.f32.mrb[0].mxu0
        %v4220 = vpop.f32.mrb[0].mxu0
        %v4221 = vadd.f32 %v665, %v4220
        %v4222 = vpop.f32.mrb[0].mxu0
        %4223 = vdwg.mxu0
        %v4224 = vpack.c.bf16 %v4197, %v4194
        %v4225 = vpack.c.bf16 %v4205, %v4202
        %v4226 = vpack.c.bf16 %v4213, %v4210
        %v4227 = vpack.c.bf16 %v4221, %v4218
        %v4228 = vmax.bf16 %v4155, 0
        %v4229 = vmax.bf16 %v4156, 0
        %v4230 = vmax.bf16 %v4157, 0
        %v4231 = vmax.bf16 %v4158, 0
        %v4232 = vmax.bf16 %v4224, 0
        %v4233 = vmax.bf16 %v4225, 0
        %v4234 = vmax.bf16 %v4226, 0
        %v4235 = vmax.bf16 %v4227, 0
        %4236 = vmatprep.subr.bf16.mxu0 0
        %4237 = vmatpush1.bf16.msra.mxu0 %v318
        %4238 = vmatprep.subr.bf16.mxu0 0
        %4239 = vmatpush1.bf16.msra.mxu0 %v319
        %4240 = vmatprep.subr.bf16.mxu0 0
        %4241 = vmatpush1.bf16.msra.mxu0 %v320
        %4242 = vmatprep.subr.bf16.mxu0 0
        %4243 = vmatpush1.bf16.msra.mxu0 %v321
        %4244 = vmatprep.subr.bf16.mxu0 0
        %4245 = vmatpush1.bf16.msra.mxu0 %v322
        %4246 = vmatprep.subr.bf16.mxu0 0
        %4247 = vmatpush1.bf16.msra.mxu0 %v323
        %4248 = vmatprep.subr.bf16.mxu0 0
        %4249 = vmatpush1.bf16.msra.mxu0 %v324
        %4250 = vmatprep.subr.bf16.mxu0 0
        %4251 = vmatpush1.bf16.msra.mxu0 %v325
        %4252 = vmatprep.subr.bf16.mxu0 0
        %4253 = vmatpush1.bf16.msra.mxu0 0
        %4254 = vmatprep.subr.bf16.mxu0 0
        %4255 = vmatpush1.bf16.msra.mxu0 0
        %4256 = vmatprep.subr.bf16.mxu0 0
        %4257 = vmatpush1.bf16.msra.mxu0 0
        %4258 = vmatprep.subr.bf16.mxu0 0
        %4259 = vmatpush1.bf16.msra.mxu0 0
        %4260 = vmatprep.subr.bf16.mxu0 0
        %4261 = vmatpush1.bf16.msra.mxu0 0
        %4262 = vmatprep.subr.bf16.mxu0 0
        %4263 = vmatpush1.bf16.msra.mxu0 0
        %4264 = vmatprep.subr.bf16.mxu0 0
        %4265 = vmatpush1.bf16.msra.mxu0 0
        %4266 = vmatprep.subr.bf16.mxu0 0
        %4267 = vmatpush1.bf16.msra.mxu0 0
        %4268 = vmatprep.mubr.bf16.mxu0 0
        %4269 = vmatmul.mubr.bf16.gmra.mrb[0].mxu0 %v4228
        %v4270 = vpop.f32.mrb[0].mxu0
        %v4271 = vadd.f32 %v285, %v4270
        %v4272 = vpop.f32.mrb[0].mxu0
        %v4273 = vpop.f32.mrb[0].mxu0
        %v4274 = vadd.f32 %v285, %v4273
        %v4275 = vpop.f32.mrb[0].mxu0
        %4276 = vmatprep.mubr.bf16.mxu0 0
        %4277 = vmatmul.mubr.bf16.gmra.mrb[0].mxu0 %v4229
        %v4278 = vpop.f32.mrb[0].mxu0
        %v4279 = vadd.f32 %v285, %v4278
        %v4280 = vpop.f32.mrb[0].mxu0
        %v4281 = vpop.f32.mrb[0].mxu0
        %v4282 = vadd.f32 %v285, %v4281
        %v4283 = vpop.f32.mrb[0].mxu0
        %4284 = vmatprep.mubr.bf16.mxu0 0
        %4285 = vmatmul.mubr.bf16.gmra.mrb[0].mxu0 %v4230
        %v4286 = vpop.f32.mrb[0].mxu0
        %v4287 = vadd.f32 %v285, %v4286
        %v4288 = vpop.f32.mrb[0].mxu0
        %v4289 = vpop.f32.mrb[0].mxu0
        %v4290 = vadd.f32 %v285, %v4289
        %v4291 = vpop.f32.mrb[0].mxu0
        %4292 = vmatprep.mubr.bf16.mxu0 0
        %4293 = vmatmul.mubr.bf16.gmra.mrb[0].mxu0 %v4231
        %v4294 = vpop.f32.mrb[0].mxu0
        %v4295 = vadd.f32 %v285, %v4294
        %v4296 = vpop.f32.mrb[0].mxu0
        %v4297 = vpop.f32.mrb[0].mxu0
        %v4298 = vadd.f32 %v285, %v4297
        %v4299 = vpop.f32.mrb[0].mxu0
        %4300 = vdwg.mxu0
        %v4301 = vpack.c.bf16 %v4274, %v4271
        %v4302 = vpack.c.bf16 %v4282, %v4279
        %v4303 = vpack.c.bf16 %v4290, %v4287
        %v4304 = vpack.c.bf16 %v4298, %v4295
        %4305 = vmatprep.subr.bf16.mxu0 0
        %4306 = vmatpush1.bf16.msra.mxu0 %v318
        %4307 = vmatprep.subr.bf16.mxu0 0
        %4308 = vmatpush1.bf16.msra.mxu0 %v319
        %4309 = vmatprep.subr.bf16.mxu0 0
        %4310 = vmatpush1.bf16.msra.mxu0 %v320
        %4311 = vmatprep.subr.bf16.mxu0 0
        %4312 = vmatpush1.bf16.msra.mxu0 %v321
        %4313 = vmatprep.subr.bf16.mxu0 0
        %4314 = vmatpush1.bf16.msra.mxu0 %v322
        %4315 = vmatprep.subr.bf16.mxu0 0
        %4316 = vmatpush1.bf16.msra.mxu0 %v323
        %4317 = vmatprep.subr.bf16.mxu0 0
        %4318 = vmatpush1.bf16.msra.mxu0 %v324
        %4319 = vmatprep.subr.bf16.mxu0 0
        %4320 = vmatpush1.bf16.msra.mxu0 %v325
        %4321 = vmatprep.subr.bf16.mxu0 0
        %4322 = vmatpush1.bf16.msra.mxu0 0
        %4323 = vmatprep.subr.bf16.mxu0 0
        %4324 = vmatpush1.bf16.msra.mxu0 0
        %4325 = vmatprep.subr.bf16.mxu0 0
        %4326 = vmatpush1.bf16.msra.mxu0 0
        %4327 = vmatprep.subr.bf16.mxu0 0
        %4328 = vmatpush1.bf16.msra.mxu0 0
        %4329 = vmatprep.subr.bf16.mxu0 0
        %4330 = vmatpush1.bf16.msra.mxu0 0
        %4331 = vmatprep.subr.bf16.mxu0 0
        %4332 = vmatpush1.bf16.msra.mxu0 0
        %4333 = vmatprep.subr.bf16.mxu0 0
        %4334 = vmatpush1.bf16.msra.mxu0 0
        %4335 = vmatprep.subr.bf16.mxu0 0
        %4336 = vmatpush1.bf16.msra.mxu0 0
        %4337 = vmatprep.mubr.bf16.mxu0 0
        %4338 = vmatmul.mubr.bf16.gmra.mrb[0].mxu0 %v4232
        %v4339 = vpop.f32.mrb[0].mxu0
        %v4340 = vadd.f32 %v285, %v4339
        %v4341 = vpop.f32.mrb[0].mxu0
        %v4342 = vpop.f32.mrb[0].mxu0
        %v4343 = vadd.f32 %v285, %v4342
        %v4344 = vpop.f32.mrb[0].mxu0
        %4345 = vmatprep.mubr.bf16.mxu0 0
        %4346 = vmatmul.mubr.bf16.gmra.mrb[0].mxu0 %v4233
        %v4347 = vpop.f32.mrb[0].mxu0
        %v4348 = vadd.f32 %v285, %v4347
        %v4349 = vpop.f32.mrb[0].mxu0
        %v4350 = vpop.f32.mrb[0].mxu0
        %v4351 = vadd.f32 %v285, %v4350
        %v4352 = vpop.f32.mrb[0].mxu0
        %4353 = vmatprep.mubr.bf16.mxu0 0
        %4354 = vmatmul.mubr.bf16.gmra.mrb[0].mxu0 %v4234
        %v4355 = vpop.f32.mrb[0].mxu0
        %v4356 = vadd.f32 %v285, %v4355
        %v4357 = vpop.f32.mrb[0].mxu0
        %v4358 = vpop.f32.mrb[0].mxu0
        %v4359 = vadd.f32 %v285, %v4358
        %v4360 = vpop.f32.mrb[0].mxu0
        %4361 = vmatprep.mubr.bf16.mxu0 0
        %4362 = vmatmul.mubr.bf16.gmra.mrb[0].mxu0 %v4235
        %v4363 = vpop.f32.mrb[0].mxu0
        %v4364 = vadd.f32 %v285, %v4363
        %v4365 = vpop.f32.mrb[0].mxu0
        %v4366 = vpop.f32.mrb[0].mxu0
        %v4367 = vadd.f32 %v285, %v4366
        %v4368 = vpop.f32.mrb[0].mxu0
        %4369 = vdwg.mxu0
        %v4370 = vpack.c.bf16 %v4343, %v4340
        %v4371 = vpack.c.bf16 %v4351, %v4348
        %v4372 = vpack.c.bf16 %v4359, %v4356
        %v4373 = vpack.c.bf16 %v4367, %v4364
        %4374 = vmatprep.subr.bf16.mxu0 0
        %4375 = vmatpush1.bf16.msra.mxu0 %v508
        %4376 = vmatprep.subr.bf16.mxu0 0
        %4377 = vmatpush1.bf16.msra.mxu0 %v509
        %4378 = vmatprep.subr.bf16.mxu0 0
        %4379 = vmatpush1.bf16.msra.mxu0 %v510
        %4380 = vmatprep.subr.bf16.mxu0 0
        %4381 = vmatpush1.bf16.msra.mxu0 %v511
        %4382 = vmatprep.subr.bf16.mxu0 0
        %4383 = vmatpush1.bf16.msra.mxu0 %v512
        %4384 = vmatprep.subr.bf16.mxu0 0
        %4385 = vmatpush1.bf16.msra.mxu0 %v513
        %4386 = vmatprep.subr.bf16.mxu0 0
        %4387 = vmatpush1.bf16.msra.mxu0 %v514
        %4388 = vmatprep.subr.bf16.mxu0 0
        %4389 = vmatpush1.bf16.msra.mxu0 %v515
        %4390 = vmatprep.subr.bf16.mxu0 0
        %4391 = vmatpush1.bf16.msra.mxu0 0
        %4392 = vmatprep.subr.bf16.mxu0 0
        %4393 = vmatpush1.bf16.msra.mxu0 0
        %4394 = vmatprep.subr.bf16.mxu0 0
        %4395 = vmatpush1.bf16.msra.mxu0 0
        %4396 = vmatprep.subr.bf16.mxu0 0
        %4397 = vmatpush1.bf16.msra.mxu0 0
        %4398 = vmatprep.subr.bf16.mxu0 0
        %4399 = vmatpush1.bf16.msra.mxu0 0
        %4400 = vmatprep.subr.bf16.mxu0 0
        %4401 = vmatpush1.bf16.msra.mxu0 0
        %4402 = vmatprep.subr.bf16.mxu0 0
        %4403 = vmatpush1.bf16.msra.mxu0 0
        %4404 = vmatprep.subr.bf16.mxu0 0
        %4405 = vmatpush1.bf16.msra.mxu0 0
        %4406 = vmatprep.mubr.bf16.mxu0 0
        %4407 = vmatmul.mubr.bf16.gmra.mrb[0].mxu0 %v4301
        %v4408 = vpop.f32.mrb[0].mxu0
        %v4409 = vadd.f32 %v475, %v4408
        %v4410 = vpop.f32.mrb[0].mxu0
        %v4411 = vpop.f32.mrb[0].mxu0
        %v4412 = vadd.f32 %v475, %v4411
        %v4413 = vpop.f32.mrb[0].mxu0
        %4414 = vmatprep.mubr.bf16.mxu0 0
        %4415 = vmatmul.mubr.bf16.gmra.mrb[0].mxu0 %v4302
        %v4416 = vpop.f32.mrb[0].mxu0
        %v4417 = vadd.f32 %v475, %v4416
        %v4418 = vpop.f32.mrb[0].mxu0
        %v4419 = vpop.f32.mrb[0].mxu0
        %v4420 = vadd.f32 %v475, %v4419
        %v4421 = vpop.f32.mrb[0].mxu0
        %4422 = vmatprep.mubr.bf16.mxu0 0
        %4423 = vmatmul.mubr.bf16.gmra.mrb[0].mxu0 %v4303
        %v4424 = vpop.f32.mrb[0].mxu0
        %v4425 = vadd.f32 %v475, %v4424
        %v4426 = vpop.f32.mrb[0].mxu0
        %v4427 = vpop.f32.mrb[0].mxu0
        %v4428 = vadd.f32 %v475, %v4427
        %v4429 = vpop.f32.mrb[0].mxu0
        %4430 = vmatprep.mubr.bf16.mxu0 0
        %4431 = vmatmul.mubr.bf16.gmra.mrb[0].mxu0 %v4304
        %v4432 = vpop.f32.mrb[0].mxu0
        %v4433 = vadd.f32 %v475, %v4432
        %v4434 = vpop.f32.mrb[0].mxu0
        %v4435 = vpop.f32.mrb[0].mxu0
        %v4436 = vadd.f32 %v475, %v4435
        %v4437 = vpop.f32.mrb[0].mxu0
        %4438 = vdwg.mxu0
        %v4439 = vpack.c.bf16 %v4412, %v4409
        %v4440 = vpack.c.bf16 %v4420, %v4417
        %v4441 = vpack.c.bf16 %v4428, %v4425
        %v4442 = vpack.c.bf16 %v4436, %v4433
        %4443 = vmatprep.subr.bf16.mxu0 0
        %4444 = vmatpush1.bf16.msra.mxu0 %v508
        %4445 = vmatprep.subr.bf16.mxu0 0
        %4446 = vmatpush1.bf16.msra.mxu0 %v509
        %4447 = vmatprep.subr.bf16.mxu0 0
        %4448 = vmatpush1.bf16.msra.mxu0 %v510
        %4449 = vmatprep.subr.bf16.mxu0 0
        %4450 = vmatpush1.bf16.msra.mxu0 %v511
        %4451 = vmatprep.subr.bf16.mxu0 0
        %4452 = vmatpush1.bf16.msra.mxu0 %v512
        %4453 = vmatprep.subr.bf16.mxu0 0
        %4454 = vmatpush1.bf16.msra.mxu0 %v513
        %4455 = vmatprep.subr.bf16.mxu0 0
        %4456 = vmatpush1.bf16.msra.mxu0 %v514
        %4457 = vmatprep.subr.bf16.mxu0 0
        %4458 = vmatpush1.bf16.msra.mxu0 %v515
        %4459 = vmatprep.subr.bf16.mxu0 0
        %4460 = vmatpush1.bf16.msra.mxu0 0
        %4461 = vmatprep.subr.bf16.mxu0 0
        %4462 = vmatpush1.bf16.msra.mxu0 0
        %4463 = vmatprep.subr.bf16.mxu0 0
        %4464 = vmatpush1.bf16.msra.mxu0 0
        %4465 = vmatprep.subr.bf16.mxu0 0
        %4466 = vmatpush1.bf16.msra.mxu0 0
        %4467 = vmatprep.subr.bf16.mxu0 0
        %4468 = vmatpush1.bf16.msra.mxu0 0
        %4469 = vmatprep.subr.bf16.mxu0 0
        %4470 = vmatpush1.bf16.msra.mxu0 0
        %4471 = vmatprep.subr.bf16.mxu0 0
        %4472 = vmatpush1.bf16.msra.mxu0 0
        %4473 = vmatprep.subr.bf16.mxu0 0
        %4474 = vmatpush1.bf16.msra.mxu0 0
        %4475 = vmatprep.mubr.bf16.mxu0 0
        %4476 = vmatmul.mubr.bf16.gmra.mrb[0].mxu0 %v4370
        %v4477 = vpop.f32.mrb[0].mxu0
        %v4478 = vadd.f32 %v475, %v4477
        %v4479 = vpop.f32.mrb[0].mxu0
        %v4480 = vpop.f32.mrb[0].mxu0
        %v4481 = vadd.f32 %v475, %v4480
        %v4482 = vpop.f32.mrb[0].mxu0
        %4483 = vmatprep.mubr.bf16.mxu0 0
        %4484 = vmatmul.mubr.bf16.gmra.mrb[0].mxu0 %v4371
        %v4485 = vpop.f32.mrb[0].mxu0
        %v4486 = vadd.f32 %v475, %v4485
        %v4487 = vpop.f32.mrb[0].mxu0
        %v4488 = vpop.f32.mrb[0].mxu0
        %v4489 = vadd.f32 %v475, %v4488
        %v4490 = vpop.f32.mrb[0].mxu0
        %4491 = vmatprep.mubr.bf16.mxu0 0
        %4492 = vmatmul.mubr.bf16.gmra.mrb[0].mxu0 %v4372
        %v4493 = vpop.f32.mrb[0].mxu0
        %v4494 = vadd.f32 %v475, %v4493
        %v4495 = vpop.f32.mrb[0].mxu0
        %v4496 = vpop.f32.mrb[0].mxu0
        %v4497 = vadd.f32 %v475, %v4496
        %v4498 = vpop.f32.mrb[0].mxu0
        %4499 = vmatprep.mubr.bf16.mxu0 0
        %4500 = vmatmul.mubr.bf16.gmra.mrb[0].mxu0 %v4373
        %v4501 = vpop.f32.mrb[0].mxu0
        %v4502 = vadd.f32 %v475, %v4501
        %v4503 = vpop.f32.mrb[0].mxu0
        %v4504 = vpop.f32.mrb[0].mxu0
        %v4505 = vadd.f32 %v475, %v4504
        %v4506 = vpop.f32.mrb[0].mxu0
        %4507 = vdwg.mxu0
        %v4508 = vpack.c.bf16 %v4481, %v4478
        %v4509 = vpack.c.bf16 %v4489, %v4486
        %v4510 = vpack.c.bf16 %v4497, %v4494
        %v4511 = vpack.c.bf16 %v4505, %v4502
        %4512 = vmatprep.subr.bf16.mxu0 0
        %4513 = vmatpush1.bf16.msra.mxu0 %v698
        %4514 = vmatprep.subr.bf16.mxu0 0
        %4515 = vmatpush1.bf16.msra.mxu0 %v699
        %4516 = vmatprep.subr.bf16.mxu0 0
        %4517 = vmatpush1.bf16.msra.mxu0 %v700
        %4518 = vmatprep.subr.bf16.mxu0 0
        %4519 = vmatpush1.bf16.msra.mxu0 %v701
        %4520 = vmatprep.subr.bf16.mxu0 0
        %4521 = vmatpush1.bf16.msra.mxu0 %v702
        %4522 = vmatprep.subr.bf16.mxu0 0
        %4523 = vmatpush1.bf16.msra.mxu0 %v703
        %4524 = vmatprep.subr.bf16.mxu0 0
        %4525 = vmatpush1.bf16.msra.mxu0 %v704
        %4526 = vmatprep.subr.bf16.mxu0 0
        %4527 = vmatpush1.bf16.msra.mxu0 %v705
        %4528 = vmatprep.subr.bf16.mxu0 0
        %4529 = vmatpush1.bf16.msra.mxu0 0
        %4530 = vmatprep.subr.bf16.mxu0 0
        %4531 = vmatpush1.bf16.msra.mxu0 0
        %4532 = vmatprep.subr.bf16.mxu0 0
        %4533 = vmatpush1.bf16.msra.mxu0 0
        %4534 = vmatprep.subr.bf16.mxu0 0
        %4535 = vmatpush1.bf16.msra.mxu0 0
        %4536 = vmatprep.subr.bf16.mxu0 0
        %4537 = vmatpush1.bf16.msra.mxu0 0
        %4538 = vmatprep.subr.bf16.mxu0 0
        %4539 = vmatpush1.bf16.msra.mxu0 0
        %4540 = vmatprep.subr.bf16.mxu0 0
        %4541 = vmatpush1.bf16.msra.mxu0 0
        %4542 = vmatprep.subr.bf16.mxu0 0
        %4543 = vmatpush1.bf16.msra.mxu0 0
        %4544 = vmatprep.mubr.bf16.mxu0 0
        %4545 = vmatmul.mubr.bf16.gmra.mrb[0].mxu0 %v4439
        %v4546 = vpop.f32.mrb[0].mxu0
        %v4547 = vadd.f32 %v665, %v4546
        %v4548 = vpop.f32.mrb[0].mxu0
        %v4549 = vpop.f32.mrb[0].mxu0
        %v4550 = vadd.f32 %v665, %v4549
        %v4551 = vpop.f32.mrb[0].mxu0
        %4552 = vmatprep.mubr.bf16.mxu0 0
        %4553 = vmatmul.mubr.bf16.gmra.mrb[0].mxu0 %v4440
        %v4554 = vpop.f32.mrb[0].mxu0
        %v4555 = vadd.f32 %v665, %v4554
        %v4556 = vpop.f32.mrb[0].mxu0
        %v4557 = vpop.f32.mrb[0].mxu0
        %v4558 = vadd.f32 %v665, %v4557
        %v4559 = vpop.f32.mrb[0].mxu0
        %4560 = vmatprep.mubr.bf16.mxu0 0
        %4561 = vmatmul.mubr.bf16.gmra.mrb[0].mxu0 %v4441
        %v4562 = vpop.f32.mrb[0].mxu0
        %v4563 = vadd.f32 %v665, %v4562
        %v4564 = vpop.f32.mrb[0].mxu0
        %v4565 = vpop.f32.mrb[0].mxu0
        %v4566 = vadd.f32 %v665, %v4565
        %v4567 = vpop.f32.mrb[0].mxu0
        %4568 = vmatprep.mubr.bf16.mxu0 0
        %4569 = vmatmul.mubr.bf16.gmra.mrb[0].mxu0 %v4442
        %v4570 = vpop.f32.mrb[0].mxu0
        %v4571 = vadd.f32 %v665, %v4570
        %v4572 = vpop.f32.mrb[0].mxu0
        %v4573 = vpop.f32.mrb[0].mxu0
        %v4574 = vadd.f32 %v665, %v4573
        %v4575 = vpop.f32.mrb[0].mxu0
        %4576 = vdwg.mxu0
        %v4577 = vpack.c.bf16 %v4550, %v4547
        %v4578 = vpack.c.bf16 %v4558, %v4555
        %v4579 = vpack.c.bf16 %v4566, %v4563
        %v4580 = vpack.c.bf16 %v4574, %v4571
        %4581 = vmatprep.subr.bf16.mxu0 0
        %4582 = vmatpush1.bf16.msra.mxu0 %v698
        %4583 = vmatprep.subr.bf16.mxu0 0
        %4584 = vmatpush1.bf16.msra.mxu0 %v699
        %4585 = vmatprep.subr.bf16.mxu0 0
        %4586 = vmatpush1.bf16.msra.mxu0 %v700
        %4587 = vmatprep.subr.bf16.mxu0 0
        %4588 = vmatpush1.bf16.msra.mxu0 %v701
        %4589 = vmatprep.subr.bf16.mxu0 0
        %4590 = vmatpush1.bf16.msra.mxu0 %v702
        %4591 = vmatprep.subr.bf16.mxu0 0
        %4592 = vmatpush1.bf16.msra.mxu0 %v703
        %4593 = vmatprep.subr.bf16.mxu0 0
        %4594 = vmatpush1.bf16.msra.mxu0 %v704
        %4595 = vmatprep.subr.bf16.mxu0 0
        %4596 = vmatpush1.bf16.msra.mxu0 %v705
        %4597 = vmatprep.subr.bf16.mxu0 0
        %4598 = vmatpush1.bf16.msra.mxu0 0
        %4599 = vmatprep.subr.bf16.mxu0 0
        %4600 = vmatpush1.bf16.msra.mxu0 0
        %4601 = vmatprep.subr.bf16.mxu0 0
        %4602 = vmatpush1.bf16.msra.mxu0 0
        %4603 = vmatprep.subr.bf16.mxu0 0
        %4604 = vmatpush1.bf16.msra.mxu0 0
        %4605 = vmatprep.subr.bf16.mxu0 0
        %4606 = vmatpush1.bf16.msra.mxu0 0
        %4607 = vmatprep.subr.bf16.mxu0 0
        %4608 = vmatpush1.bf16.msra.mxu0 0
        %4609 = vmatprep.subr.bf16.mxu0 0
        %4610 = vmatpush1.bf16.msra.mxu0 0
        %4611 = vmatprep.subr.bf16.mxu0 0
        %4612 = vmatpush1.bf16.msra.mxu0 0
        %4613 = vmatprep.mubr.bf16.mxu0 0
        %4614 = vmatmul.mubr.bf16.gmra.mrb[0].mxu0 %v4508
        %v4615 = vpop.f32.mrb[0].mxu0
        %v4616 = vadd.f32 %v665, %v4615
        %v4617 = vpop.f32.mrb[0].mxu0
        %v4618 = vpop.f32.mrb[0].mxu0
        %v4619 = vadd.f32 %v665, %v4618
        %v4620 = vpop.f32.mrb[0].mxu0
        %4621 = vmatprep.mubr.bf16.mxu0 0
        %4622 = vmatmul.mubr.bf16.gmra.mrb[0].mxu0 %v4509
        %v4623 = vpop.f32.mrb[0].mxu0
        %v4624 = vadd.f32 %v665, %v4623
        %v4625 = vpop.f32.mrb[0].mxu0
        %v4626 = vpop.f32.mrb[0].mxu0
        %v4627 = vadd.f32 %v665, %v4626
        %v4628 = vpop.f32.mrb[0].mxu0
        %4629 = vmatprep.mubr.bf16.mxu0 0
        %4630 = vmatmul.mubr.bf16.gmra.mrb[0].mxu0 %v4510
        %v4631 = vpop.f32.mrb[0].mxu0
        %v4632 = vadd.f32 %v665, %v4631
        %v4633 = vpop.f32.mrb[0].mxu0
        %v4634 = vpop.f32.mrb[0].mxu0
        %v4635 = vadd.f32 %v665, %v4634
        %v4636 = vpop.f32.mrb[0].mxu0
        %4637 = vmatprep.mubr.bf16.mxu0 0
        %4638 = vmatmul.mubr.bf16.gmra.mrb[0].mxu0 %v4511
        %v4639 = vpop.f32.mrb[0].mxu0
        %v4640 = vadd.f32 %v665, %v4639
        %v4641 = vpop.f32.mrb[0].mxu0
        %v4642 = vpop.f32.mrb[0].mxu0
        %v4643 = vadd.f32 %v665, %v4642
        %v4644 = vpop.f32.mrb[0].mxu0
        %4645 = vdwg.mxu0
        %v4646 = vpack.c.bf16 %v4619, %v4616
        %v4647 = vpack.c.bf16 %v4627, %v4624
        %v4648 = vpack.c.bf16 %v4635, %v4632
        %v4649 = vpack.c.bf16 %v4643, %v4640
        %v4650 = vmax.bf16 %v4577, 0
        %v4651 = vmax.bf16 %v4578, 0
        %v4652 = vmax.bf16 %v4579, 0
        %v4653 = vmax.bf16 %v4580, 0
        %v4654 = vmax.bf16 %v4646, 0
        %v4655 = vmax.bf16 %v4647, 0
        %v4656 = vmax.bf16 %v4648, 0
        %v4657 = vmax.bf16 %v4649, 0
        %v4658 = vunpack.c.l.bf16 %v4650
        %v4659 = vunpack.c.h.bf16 %v4650
        %v4660 = vunpack.c.l.bf16 %v4651
        %v4661 = vunpack.c.h.bf16 %v4651
        %v4662 = vunpack.c.l.bf16 %v4652
        %v4663 = vunpack.c.h.bf16 %v4652
        %v4664 = vunpack.c.l.bf16 %v4653
        %v4665 = vunpack.c.h.bf16 %v4653
        %v4666 = vunpack.c.l.bf16 %v4654
        %v4667 = vunpack.c.h.bf16 %v4654
        %v4668 = vunpack.c.l.bf16 %v4655
        %v4669 = vunpack.c.h.bf16 %v4655
        %v4670 = vunpack.c.l.bf16 %v4656
        %v4671 = vunpack.c.h.bf16 %v4656
        %v4672 = vunpack.c.l.bf16 %v4657
        %v4673 = vunpack.c.h.bf16 %v4657
        %4674 = vst [vmem:[%s203] sm:$0xff] %v4658
        %4675 = vst [vmem:[%s203 + $0x8] sm:$0xff] %v4659
        %4676 = vst [vmem:[%s203 + $0x10] sm:$0xff] %v4660
        %4677 = vst [vmem:[%s203 + $0x18] sm:$0xff] %v4661
        %4678 = vst [vmem:[%s203 + $0x20] sm:$0xff] %v4662
        %4679 = vst [vmem:[%s203 + $0x28] sm:$0xff] %v4663
        %4680 = vst [vmem:[%s203 + $0x30] sm:$0xff] %v4664
        %4681 = vst [vmem:[%s203 + $0x38] sm:$0xff] %v4665
        %4682 = vst [vmem:[%s203 + $0x40] sm:$0xff] %v4666
        %4683 = vst [vmem:[%s203 + $0x48] sm:$0xff] %v4667
        %4684 = vst [vmem:[%s203 + $0x50] sm:$0xff] %v4668
        %4685 = vst [vmem:[%s203 + $0x58] sm:$0xff] %v4669
        %4686 = vst [vmem:[%s203 + $0x60] sm:$0xff] %v4670
        %4687 = vst [vmem:[%s203 + $0x68] sm:$0xff] %v4671
        %4688 = vst [vmem:[%s203 + $0x70] sm:$0xff] %v4672
        %4689 = vst [vmem:[%s203 + $0x78] sm:$0xff] %v4673
        %s4690 = sand.u32 %s97, 1
        %s4691 = scalar_lea.sflag [#allocation4], %s4690
        %s4692 = sand.u32 %s97, 1
        %s4693 = smul.addr %s4692, 128
        %s4694 = scalar_lea.vmem [#allocation7], %s4693
        // Predicated region
        $region41: #{tpu_custom_call.1} parent=31 // pred_check
          %p4695 = pneg %p107
        $region42: #{tpu_custom_call.1} parent=31 // pred_check_branch
          %4697 = sbr.rel (%p4695) target = $region44
        $region43: #{tpu_custom_call.1} parent=31 // pred_region
          %s4698 = smul.u32 16, %s21
          %s4700 = ssub.s32 2048, 2048
          %4701 = vsyncadd %s4691, %s4700
          %s4702 = smul.addr %s4698, 128
          %s4703 = scalar_lea.hbm %s3, %s4702
          %s4704 = sshll.u32 %s4694, 4
          %s4705 = int_to_ptr.vmem [resolvable:$true] %s4704
          %4710 = dma.vmem_to_hbm [thread:$0]  %s4705, 2048, %s4703, %s4691, 128, 128, 8
        $region44: #{tpu_custom_call.1} parent=31 // pred_fallthru
          _
      $region32: #{tpu_custom_call.1} parent=5 // pred_fallthru
        _
      %p4711 = scmp.le.s32.totalorder 2, %s16
      // Predicated region
      $region45: #{tpu_custom_call.1} parent=5 // pred_check
        %p4712 = pneg %p4711
      $region46: #{tpu_custom_call.1} parent=5 // pred_check_branch
        %4714 = sbr.rel (%p4712) target = $region48
      $region47: #{tpu_custom_call.1} parent=5 // pred_region
        %s4715 = ssub.s32 %s16, 2
        // Predicated region
        $region49: #{tpu_custom_call.1} parent=47 // pred_check
          %p4716 = pneg %p113
        $region50: #{tpu_custom_call.1} parent=47 // pred_check_branch
          %4718 = sbr.rel (%p4716) target = $region52
        $region51: #{tpu_custom_call.1} parent=47 // pred_region
          %s4719 = sand.u32 %s98, 1
          %s4720 = scalar_lea.sflag [#allocation4], %s4719
          %s4721 = sand.u32 %s98, 1
          %s4722 = smul.addr %s4721, 128
          %s4723 = scalar_lea.vmem [#allocation7], %s4722
          %4724 = dma.done %s4720, 2048
        $region52: #{tpu_custom_call.1} parent=47 // pred_fallthru
          _
      $region48: #{tpu_custom_call.1} parent=5 // pred_fallthru
        _
    $region6: #{tpu_custom_call.1} parent=1 // loop_footer
      %s20 = sadd.s32 1, %s16
    $region7: #{tpu_custom_call.1} parent=1 // loop_footer_branch
      %15 = sbr.rel target = $region3
    $region8: #{tpu_custom_call.1} parent=1 // loop_exit
      _
    %4725 = vsyncpa [#allocation3], 1
    %s4726 = scalar_lea.sflag [#allocation3], 1
    %4727 = vsyncpa %s4726, 1
    %4728 = vsyncpa [#allocation6], 1
    %4729 = vsyncpa [#allocation4], 1
    %s4730 = scalar_lea.sflag [#allocation4], 1
    %4731 = vsyncpa %s4730, 1

</llo_original>
